<compile_context>
chip_gen: v7x
topology: tpu7x:2x2x1
jax: 0.10.0
libtpu: 0.0.40
codegen_flags: <defaults>
</compile_context>

<pallas_src>
import functools
import math

import jax
import jax.numpy as jnp
from jax.experimental import pallas as pl
from jax.experimental.pallas import tpu as pltpu

# Make the pure-JAX reference use true f32 matmuls so it matches the kernel's
# f32 MXU accumulation.
jax.config.update("jax_default_matmul_precision", "highest")


def _round_up(x, m):
    return (x + m - 1) // m * m


# ---------------------------------------------------------------------------
# Dense projection kernel:  y = x @ W + b   (f32 accumulation on the MXU)
# ---------------------------------------------------------------------------
def _linear_kernel(x_ref, w_ref, b_ref, o_ref):
    y = jnp.dot(x_ref[...], w_ref[...], preferred_element_type=jnp.float32)
    y = y + b_ref[...].astype(jnp.float32)
    o_ref[...] = y.astype(o_ref.dtype)


def _linear(x2d, w, b, *, tm=256, tn=512):
    """Row/column tiled dense layer with lane-dense (multiple-of-128) padding."""
    M, K = x2d.shape
    Kw, N = w.shape
    assert K == Kw
    out_dtype = x2d.dtype

    # Lane-dense padding of contraction and output feature dims.
    Kp = _round_up(K, 128)
    # Row tile: as large as possible (MXU friendly) but no larger than needed.
    tm = min(tm, _round_up(M, 8))
    Mp = _round_up(M, tm)
    Np = _round_up(N, 128)
    tn = min(tn, Np)
    Np = _round_up(Np, tn)

    x_p = jnp.pad(x2d, ((0, Mp - M), (0, Kp - K)))
    w_p = jnp.pad(w, ((0, Kp - K), (0, Np - N)))
    b_p = jnp.pad(b.reshape(1, N), ((0, 0), (0, Np - N)))

    grid = (Mp // tm, Np // tn)
    flops = 2 * Mp * Kp * Np
    bytes_accessed = (x_p.size + w_p.size + b_p.size + Mp * Np) * x_p.dtype.itemsize

    out = pl.pallas_call(
        _linear_kernel,
        out_shape=jax.ShapeDtypeStruct((Mp, Np), out_dtype),
        grid_spec=pltpu.PrefetchScalarGridSpec(
            num_scalar_prefetch=0,
            grid=grid,
            in_specs=[
                pl.BlockSpec((tm, Kp), lambda i, j: (i, 0)),   # activation tile
                pl.BlockSpec((Kp, tn), lambda i, j: (0, j)),   # weight slab
                pl.BlockSpec((1, tn), lambda i, j: (0, j)),    # bias slab
            ],
            out_specs=pl.BlockSpec((tm, tn), lambda i, j: (i, j)),
        ),
        compiler_params=pltpu.CompilerParams(
            dimension_semantics=("parallel", "parallel"),
            vmem_limit_bytes=64 * 1024 * 1024,
        ),
        cost_estimate=pl.CostEstimate(
            flops=int(flops),
            transcendentals=0,
            bytes_accessed=int(bytes_accessed),
        ),
    )(x_p, w_p, b_p)
    return out[:M, :N]


# ---------------------------------------------------------------------------
# Scaled dot-product attention kernel (all heads of one batch per grid step)
# ---------------------------------------------------------------------------
def _attn_body(q_ref, k_ref, v_ref, bias_ref, o_ref, sm_scale):
    # q_ref: (h, Sq, d_k)  k_ref/v_ref: (h, Sk, d_k)  bias_ref: (Sq, Sk) or None
    q = q_ref[...].astype(jnp.float32)
    k = k_ref[...].astype(jnp.float32)
    s = jnp.einsum("hqd,hkd->hqk", q, k,
                   preferred_element_type=jnp.float32) * sm_scale
    if bias_ref is not None:
        s = s + bias_ref[...][None, :, :]
    m = jnp.max(s, axis=-1, keepdims=True)
    e = jnp.exp(s - m)
    l = jnp.sum(e, axis=-1, keepdims=True)
    p = e / l
    o = jnp.einsum("hqk,hkd->hqd", p.astype(v_ref.dtype), v_ref[...],
                   preferred_element_type=jnp.float32)
    o_ref[...] = o.astype(o_ref.dtype)


def _attn_kernel(q_ref, k_ref, v_ref, o_ref, *, sm_scale):
    _attn_body(q_ref, k_ref, v_ref, None, o_ref, sm_scale)


def _attn_kernel_masked(q_ref, k_ref, v_ref, bias_ref, o_ref, *, sm_scale):
    _attn_body(q_ref, k_ref, v_ref, bias_ref, o_ref, sm_scale)


def _attention(qh, kh, vh, mask_bias):
    B, h, Sq, d_k = qh.shape
    Sk = kh.shape[2]
    sm_scale = 1.0 / math.sqrt(d_k)

    if mask_bias is None:
        kernel = functools.partial(_attn_kernel, sm_scale=sm_scale)
    else:
        kernel = functools.partial(_attn_kernel_masked, sm_scale=sm_scale)

    in_specs = [
        pl.BlockSpec((None, h, Sq, d_k), lambda b: (b, 0, 0, 0)),
        pl.BlockSpec((None, h, Sk, d_k), lambda b: (b, 0, 0, 0)),
        pl.BlockSpec((None, h, Sk, d_k), lambda b: (b, 0, 0, 0)),
    ]
    args = [qh, kh, vh]
    if mask_bias is not None:
        in_specs.append(pl.BlockSpec((None, Sq, Sk), lambda b: (b, 0, 0)))
        args.append(mask_bias)

    flops = 4 * B * h * Sq * Sk * d_k          # two matmuls
    transcendentals = B * h * Sq * Sk          # exp
    bytes_accessed = (qh.size + kh.size + vh.size
                      + B * h * Sq * d_k) * qh.dtype.itemsize

    return pl.pallas_call(
        kernel,
        out_shape=jax.ShapeDtypeStruct((B, h, Sq, d_k), qh.dtype),
        grid_spec=pltpu.PrefetchScalarGridSpec(
            num_scalar_prefetch=0,
            grid=(B,),
            in_specs=in_specs,
            out_specs=pl.BlockSpec((None, h, Sq, d_k), lambda b: (b, 0, 0, 0)),
        ),
        compiler_params=pltpu.CompilerParams(
            dimension_semantics=("parallel",),
            vmem_limit_bytes=64 * 1024 * 1024,
        ),
        cost_estimate=pl.CostEstimate(
            flops=int(flops),
            transcendentals=int(transcendentals),
            bytes_accessed=int(bytes_accessed),
        ),
    )(*args)


# ---------------------------------------------------------------------------
# Full MultiHeadAttention forward
# ---------------------------------------------------------------------------
@functools.partial(jax.jit, static_argnames=("h", "compute_dtype"))
def multi_head_attention(query, key, value,
                         wq, bq, wk, bk, wv, bv, wo, bo,
                         *, h, mask=None, compute_dtype=None):
    B, Sq, d_model = query.shape
    Sk = key.shape[1]
    assert d_model % h == 0
    d_k = d_model // h
    out_dtype = query.dtype

    if compute_dtype is not None:
        # Optional bf16 compute path (2x MXU throughput on v6e/v7x); matmuls
        # still accumulate in f32 inside the kernels.
        query, key, value = (t.astype(compute_dtype) for t in (query, key, value))
        wq, wk, wv, wo = (t.astype(compute_dtype) for t in (wq, wk, wv, wo))

    q2 = _linear(query.reshape(B * Sq, d_model), wq, bq)
    k2 = _linear(key.reshape(B * Sk, d_model), wk, bk)
    v2 = _linear(value.reshape(B * Sk, d_model), wv, bv)

    qh = q2.reshape(B, Sq, h, d_k).transpose(0, 2, 1, 3)
    kh = k2.reshape(B, Sk, h, d_k).transpose(0, 2, 1, 3)
    vh = v2.reshape(B, Sk, h, d_k).transpose(0, 2, 1, 3)

    if mask is not None:
        mask_bias = jnp.where(
            jnp.broadcast_to(mask, (B, Sq, Sk)) == 0,
            jnp.float32(-1e9), jnp.float32(0.0))
    else:
        mask_bias = None

    x = _attention(qh, kh, vh, mask_bias)                 # (B, h, Sq, d_k)
    x = x.transpose(0, 2, 1, 3).reshape(B * Sq, d_model)  # concat heads
    out = _linear(x, wo, bo)
    return out.reshape(B, Sq, d_model).astype(out_dtype)


# ---------------------------------------------------------------------------
# Reference + test harness
# ---------------------------------------------------------------------------
def _mha_reference(query, key, value, wq, bq, wk, bk, wv, bv, wo, bo, h,
                   mask=None):
    B, Sq, d_model = query.shape
    Sk = key.shape[1]
    d_k = d_model // h
    proj = lambda x, w, b: x @ w + b
    qh = proj(query, wq, bq).reshape(B, Sq, h, d_k).transpose(0, 2, 1, 3)
    kh = proj(key, wk, bk).reshape(B, Sk, h, d_k).transpose(0, 2, 1, 3)
    vh = proj(value, wv, bv).reshape(B, Sk, h, d_k).transpose(0, 2, 1, 3)
    s = jnp.einsum("bhqd,bhkd->bhqk", qh, kh) / math.sqrt(d_k)
    if mask is not None:
        s = jnp.where(jnp.broadcast_to(mask, (B, Sq, Sk))[:, None] == 0, -1e9, s)
    p = jax.nn.softmax(s, axis=-1)
    o = jnp.einsum("bhqk,bhkd->bhqd", p, vh)
    o = o.transpose(0, 2, 1, 3).reshape(B, Sq, d_model)
    return o @ wo + bo


def _init_linear(key, in_features, out_features, dtype=jnp.float32):
    # Mimics nn.Linear default init (uniform +/- 1/sqrt(fan_in)).
    kw, kb = jax.random.split(key)
    bound = 1.0 / math.sqrt(in_features)
    # Stored as (in_features, out_features) == PyTorch weight.T
    w = jax.random.uniform(kw, (in_features, out_features), dtype,
                           minval=-bound, maxval=bound)
    b = jax.random.uniform(kb, (out_features,), dtype,
                           minval=-bound, maxval=bound)
    return w, b


if __name__ == "__main__":
    key = jax.random.PRNGKey(0)
    keys = jax.random.split(key, 7)

    B, S, h, d_model = 2, 8, 4, 32   # d_k = 8

    q = jax.random.normal(keys[0], (B, S, d_model), jnp.float32)
    k = jax.random.normal(keys[1], (B, S, d_model), jnp.float32)
    v = jax.random.normal(keys[2], (B, S, d_model), jnp.float32)

    wq, bq = _init_linear(keys[3], d_model, d_model)
    wk, bk = _init_linear(keys[4], d_model, d_model)
    wv, bv = _init_linear(keys[5], d_model, d_model)
    wo, bo = _init_linear(keys[6], d_model, d_model)

    y = multi_head_attention(q, k, v, wq, bq, wk, bk, wv, bv, wo, bo, h=h)
    y = jax.block_until_ready(y)

    y_ref = _mha_reference(q, k, v, wq, bq, wk, bk, wv, bv, wo, bo, h)
    assert y.shape == (B, S, d_model)
    assert jnp.allclose(y, y_ref, atol=2e-4, rtol=2e-4)

    print("KERNEL_OK")
</pallas_src>

<mosaic_0001>
module attributes {stable_mosaic.version = 11 : i64} {
  func.func @_linear_kernel(%arg0: i32, %arg1: i32, %arg2: memref<16x128xf32, #tpu.memory_space<vmem>>, %arg3: memref<128x128xf32, #tpu.memory_space<vmem>>, %arg4: memref<1x128xf32, #tpu.memory_space<vmem>>, %arg5: memref<16x128xf32, #tpu.memory_space<vmem>>) attributes {dimension_semantics = [#tpu.dimension_semantics<parallel>, #tpu.dimension_semantics<parallel>], iteration_bounds = array<i64: 1, 1>, scalar_prefetch = 0 : i64, scratch_operands = 0 : i64, tpu.core_type = #tpu.core_type<tc>, window_params = [{transform_indices = @transform_0, window_bounds = array<i64: 16, 128>}, {transform_indices = @transform_1, window_bounds = array<i64: 128, 128>}, {transform_indices = @transform_2, window_bounds = array<i64: 1, 128>}, {transform_indices = @transform_3, window_bounds = array<i64: 16, 128>}]} {
    %c0 = arith.constant 0 : index
    %c0_0 = arith.constant 0 : index
    %0 = vector.load %arg2[%c0, %c0_0] : memref<16x128xf32, #tpu.memory_space<vmem>>, vector<16x128xf32>
    %c0_1 = arith.constant 0 : index
    %c0_2 = arith.constant 0 : index
    %1 = vector.load %arg3[%c0_1, %c0_2] : memref<128x128xf32, #tpu.memory_space<vmem>>, vector<128x128xf32>
    %cst = arith.constant dense<0.000000e+00> : vector<16x128xf32>
    %2 = tpu.matmul %0, %1, %cst {dimension_numbers = #tpu.dot_dimension_numbers<[1], [0], [0], [1], [0, 0, 1, 1], [], []>, precision = #tpu.contract_precision<fp32>} : vector<16x128xf32>, vector<128x128xf32>, vector<16x128xf32> -> vector<16x128xf32>
    %c0_3 = arith.constant 0 : index
    %c0_4 = arith.constant 0 : index
    %3 = vector.load %arg4[%c0_3, %c0_4] : memref<1x128xf32, #tpu.memory_space<vmem>>, vector<1x128xf32>
    %4 = vector.broadcast %3 : vector<1x128xf32> to vector<16x128xf32>
    %5 = arith.addf %2, %4 : vector<16x128xf32>
    %c0_5 = arith.constant 0 : index
    %c0_6 = arith.constant 0 : index
    %6 = vector.load %arg5[%c0_5, %c0_6] : memref<16x128xf32, #tpu.memory_space<vmem>>, vector<16x128xf32>
    tpu.vector_store %arg5[%c0_5, %c0_6], %5 {strides = array<i32>} : memref<16x128xf32, #tpu.memory_space<vmem>>, vector<16x128xf32>,
    return
  }
  func.func @transform_0(%arg0: i32, %arg1: i32) -> (i32, i32) {
    %c0_i32 = arith.constant 0 : i32
    %c0_i32_0 = arith.constant 0 : i32
    return %arg0, %c0_i32 : i32, i32
  }
  func.func @transform_1(%arg0: i32, %arg1: i32) -> (i32, i32) {
    %c0_i32 = arith.constant 0 : i32
    %c0_i32_0 = arith.constant 0 : i32
    return %c0_i32, %arg1 : i32, i32
  }
  func.func @transform_2(%arg0: i32, %arg1: i32) -> (i32, i32) {
    %c0_i32 = arith.constant 0 : i32
    %c0_i32_0 = arith.constant 0 : i32
    return %c0_i32, %arg1 : i32, i32
  }
  func.func @transform_3(%arg0: i32, %arg1: i32) -> (i32, i32) {
    %c0_i32 = arith.constant 0 : i32
    return %arg0, %arg1 : i32, i32
  }
}

module attributes {stable_mosaic.version = 11 : i64} {
  func.func @_attn_kernel(%arg0: i32, %arg1: memref<1x4x8x8xf32, #tpu.memory_space<vmem>>, %arg2: memref<1x4x8x8xf32, #tpu.memory_space<vmem>>, %arg3: memref<1x4x8x8xf32, #tpu.memory_space<vmem>>, %arg4: memref<1x4x8x8xf32, #tpu.memory_space<vmem>>) attributes {dimension_semantics = [#tpu.dimension_semantics<parallel>], iteration_bounds = array<i64: 2>, scalar_prefetch = 0 : i64, scratch_operands = 0 : i64, tpu.core_type = #tpu.core_type<tc>, window_params = [{transform_indices = @transform_0, window_bounds = array<i64: 1, 4, 8, 8>}, {transform_indices = @transform_1, window_bounds = array<i64: 1, 4, 8, 8>}, {transform_indices = @transform_2, window_bounds = array<i64: 1, 4, 8, 8>}, {transform_indices = @transform_3, window_bounds = array<i64: 1, 4, 8, 8>}]} {
    %c0 = arith.constant 0 : index
    %c0_0 = arith.constant 0 : index
    %c0_1 = arith.constant 0 : index
    %c0_2 = arith.constant 0 : index
    %0 = vector.load %arg1[%c0, %c0_0, %c0_1, %c0_2] : memref<1x4x8x8xf32, #tpu.memory_space<vmem>>, vector<1x4x8x8xf32>
    %1 = vector.shape_cast %0 : vector<1x4x8x8xf32> to vector<4x8x8xf32>
    %c0_3 = arith.constant 0 : index
    %c0_4 = arith.constant 0 : index
    %c0_5 = arith.constant 0 : index
    %c0_6 = arith.constant 0 : index
    %2 = vector.load %arg2[%c0_3, %c0_4, %c0_5, %c0_6] : memref<1x4x8x8xf32, #tpu.memory_space<vmem>>, vector<1x4x8x8xf32>
    %3 = vector.shape_cast %2 : vector<1x4x8x8xf32> to vector<4x8x8xf32>
    "tpu.trace_start"() <{level = 10 : i32, message = "hqd,hkd->hqk"}> : () -> ()
    %cst = arith.constant dense<0.000000e+00> : vector<4x8x8xf32>
    %4 = tpu.matmul %1, %3, %cst {dimension_numbers = #tpu.dot_dimension_numbers<[2], [2], [1], [1], [0, 0, 0, 1, 1, 1], [0], [0]>, precision = #tpu.contract_precision<fp32>} : vector<4x8x8xf32>, vector<4x8x8xf32>, vector<4x8x8xf32> -> vector<4x8x8xf32>
    "tpu.trace_stop"() : () -> ()
    %cst_7 = arith.constant 0.353553385 : f32
    %5 = vector.broadcast %cst_7 : f32 to vector<4x8x8xf32>
    %6 = arith.mulf %4, %5 : vector<4x8x8xf32>
    %cst_8 = arith.constant dense<0xFF800000> : vector<4x8xf32>
    %7 = vector.multi_reduction <maximumf>, %6, %cst_8 [2] : vector<4x8x8xf32> to vector<4x8xf32>
    %8 = vector.shape_cast %7 : vector<4x8xf32> to vector<4x8x1xf32>
    %9 = vector.broadcast %8 : vector<4x8x1xf32> to vector<4x8x8xf32>
    %10 = arith.subf %6, %9 : vector<4x8x8xf32>
    %11 = math.exp %10 : vector<4x8x8xf32>
    %cst_9 = arith.constant dense<0.000000e+00> : vector<4x8xf32>
    %12 = vector.multi_reduction <add>, %11, %cst_9 [2] : vector<4x8x8xf32> to vector<4x8xf32>
    %13 = vector.shape_cast %12 : vector<4x8xf32> to vector<4x8x1xf32>
    %14 = vector.broadcast %13 : vector<4x8x1xf32> to vector<4x8x8xf32>
    %15 = arith.divf %11, %14 : vector<4x8x8xf32>
    %c0_10 = arith.constant 0 : index
    %c0_11 = arith.constant 0 : index
    %c0_12 = arith.constant 0 : index
    %c0_13 = arith.constant 0 : index
    %16 = vector.load %arg3[%c0_10, %c0_11, %c0_12, %c0_13] : memref<1x4x8x8xf32, #tpu.memory_space<vmem>>, vector<1x4x8x8xf32>
    %17 = vector.shape_cast %16 : vector<1x4x8x8xf32> to vector<4x8x8xf32>
    "tpu.trace_start"() <{level = 10 : i32, message = "hqk,hkd->hqd"}> : () -> ()
    %cst_14 = arith.constant dense<0.000000e+00> : vector<4x8x8xf32>
    %18 = tpu.matmul %15, %17, %cst_14 {dimension_numbers = #tpu.dot_dimension_numbers<[2], [1], [1], [2], [0, 0, 0, 1, 1, 2], [0], [0]>, precision = #tpu.contract_precision<fp32>} : vector<4x8x8xf32>, vector<4x8x8xf32>, vector<4x8x8xf32> -> vector<4x8x8xf32>
    "tpu.trace_stop"() : () -> ()
    %c0_15 = arith.constant 0 : index
    %c0_16 = arith.constant 0 : index
    %c0_17 = arith.constant 0 : index
    %c0_18 = arith.constant 0 : index
    %19 = vector.load %arg4[%c0_15, %c0_16, %c0_17, %c0_18] : memref<1x4x8x8xf32, #tpu.memory_space<vmem>>, vector<1x4x8x8xf32>
    %20 = vector.shape_cast %19 : vector<1x4x8x8xf32> to vector<4x8x8xf32>
    %21 = vector.shape_cast %18 : vector<4x8x8xf32> to vector<1x4x8x8xf32>
    tpu.vector_store %arg4[%c0_15, %c0_16, %c0_17, %c0_18], %21 {strides = array<i32>} : memref<1x4x8x8xf32, #tpu.memory_space<vmem>>, vector<1x4x8x8xf32>,
    return
  }
  func.func @transform_0(%arg0: i32) -> (i32, i32, i32, i32) {
    %c0_i32 = arith.constant 0 : i32
    %c0_i32_0 = arith.constant 0 : i32
    %c0_i32_1 = arith.constant 0 : i32
    %c0_i32_2 = arith.constant 0 : i32
    return %arg0, %c0_i32, %c0_i32_0, %c0_i32_1 : i32, i32, i32, i32
  }
  func.func @transform_1(%arg0: i32) -> (i32, i32, i32, i32) {
    %c0_i32 = arith.constant 0 : i32
    %c0_i32_0 = arith.constant 0 : i32
    %c0_i32_1 = arith.constant 0 : i32
    %c0_i32_2 = arith.constant 0 : i32
    return %arg0, %c0_i32, %c0_i32_0, %c0_i32_1 : i32, i32, i32, i32
  }
  func.func @transform_2(%arg0: i32) -> (i32, i32, i32, i32) {
    %c0_i32 = arith.constant 0 : i32
    %c0_i32_0 = arith.constant 0 : i32
    %c0_i32_1 = arith.constant 0 : i32
    %c0_i32_2 = arith.constant 0 : i32
    return %arg0, %c0_i32, %c0_i32_0, %c0_i32_1 : i32, i32, i32, i32
  }
  func.func @transform_3(%arg0: i32) -> (i32, i32, i32, i32) {
    %c0_i32 = arith.constant 0 : i32
    %c0_i32_0 = arith.constant 0 : i32
    %c0_i32_1 = arith.constant 0 : i32
    %c0_i32_2 = arith.constant 0 : i32
    return %arg0, %c0_i32, %c0_i32_0, %c0_i32_1 : i32, i32, i32, i32
  }
}

</mosaic_0001>

<llo_original>
// kernel: multi_head_attention.6
$region0: #{multi_head_attention.6}
  #allocation0 [shape = 'u32[]', space=smem, size = 0x4, offset = 0x4, fixed_abs, tag = 'smem constant byte address 0x4 - core index']
  #allocation1 [shape = 'u32[144,128]{1,0:T(1,128)}', space=vmem, size = 0x12000, scoped, tag = 'internal scratch']
  %s0 = inlined_call_operand.hbm [shape: f32[16,128], index: 0, kind: input, shape index: {}]
  %s1 = inlined_call_operand.hbm [shape: f32[128,128], index: 1, kind: input, shape index: {}]
  %s2 = inlined_call_operand.hbm [shape: f32[1,128], index: 2, kind: input, shape index: {}]
  %s3 = inlined_call_operand.hbm [shape: f32[16,128], index: 3, kind: output, shape index: {}]
  %s4 = sld [smem:[#allocation0]]
  $region34: #{multi_head_attention.6} parent=0
    _
  %s6 = ssub.s32 1, %s4
  %s7 = scalar_select 0, %s6, %s4
  $region1: #{multi_head_attention.6} parent=0
    #allocation2 [shape = 'u8[8192]{0}', space=vmem, size = 0x2000, scoped, tag = 'input window, operand 0, single buffered']
    #allocation3 [shape = 's32[1]{0}', space=sflag, size = 0x4, scoped, tag = 'scoped memory for multi_head_attention.6']
    #allocation4 [shape = 's32[1]{0}', space=sflag, size = 0x4, scoped, tag = 'scoped memory for multi_head_attention.6']
    #allocation5 [shape = 'u8[65536]{0}', space=vmem, size = 0x10000, scoped, tag = 'input window, operand 1, single buffered']
    #allocation6 [shape = 's32[1]{0}', space=sflag, size = 0x4, scoped, tag = 'scoped memory for multi_head_attention.6']
    #allocation7 [shape = 'u8[512]{0}', space=vmem, size = 0x400, scoped, tag = 'input window, operand 2, single buffered']
    #allocation8 [shape = 'u8[8192]{0}', space=vmem, size = 0x2000, scoped, tag = 'output window, operand 0, single buffered']
    %8 = vsyncpa [#allocation3], 0
    %9 = vsyncpa [#allocation6], 0
    %10 = vsyncpa [#allocation4], 0
    // Predicated region
    $region2: #{multi_head_attention.6} parent=1 // pred_check
      _
    $region3: #{multi_head_attention.6} parent=1 // pred_check_branch
      %12 = sbr.rel (0) target = $region5
    $region4: #{multi_head_attention.6} parent=1 // pred_region
      %s14 = ssub.s32 256, 256
      %15 = vsyncadd [#allocation3], %s14
      %s16 = sshll.u32 [#allocation2], 4
      %s17 = int_to_ptr.vmem [resolvable:$true] %s16
      %22 = dma.hbm_to_vmem [thread:$0]  %s0, 256, %s17, [#allocation3], 128, 128, 8
    $region5: #{multi_head_attention.6} parent=1 // pred_fallthru
      _
    // Predicated region
    $region6: #{multi_head_attention.6} parent=1 // pred_check
      _
    $region7: #{multi_head_attention.6} parent=1 // pred_check_branch
      %24 = sbr.rel (0) target = $region9
    $region8: #{multi_head_attention.6} parent=1 // pred_region
      %s26 = ssub.s32 2048, 2048
      %27 = vsyncadd [#allocation6], %s26
      %s28 = sshll.u32 [#allocation5], 4
      %s29 = int_to_ptr.vmem [resolvable:$true] %s28
      %34 = dma.hbm_to_vmem [thread:$0]  %s1, 2048, %s29, [#allocation6], 128, 128, 8
    $region9: #{multi_head_attention.6} parent=1 // pred_fallthru
      _
    // Predicated region
    $region10: #{multi_head_attention.6} parent=1 // pred_check
      _
    $region11: #{multi_head_attention.6} parent=1 // pred_check_branch
      %36 = sbr.rel (0) target = $region13
    $region12: #{multi_head_attention.6} parent=1 // pred_region
      %s38 = ssub.s32 16, 16
      %39 = vsyncadd [#allocation6], %s38
      %s41 = sshll.u32 [#allocation7], 4
      %s42 = int_to_ptr.vmem [resolvable:$true] %s41
      %44 = dma.hbm_to_vmem [thread:$0]  %s2, 16, %s42, [#allocation6]
    $region13: #{multi_head_attention.6} parent=1 // pred_fallthru
      _
    // Predicated region
    $region14: #{multi_head_attention.6} parent=1 // pred_check
      _
    $region15: #{multi_head_attention.6} parent=1 // pred_check_branch
      %46 = sbr.rel (0) target = $region17
    $region16: #{multi_head_attention.6} parent=1 // pred_region
      %47 = dma.done [#allocation3], 256
    $region17: #{multi_head_attention.6} parent=1 // pred_fallthru
      _
    // Predicated region
    $region18: #{multi_head_attention.6} parent=1 // pred_check
      _
    $region19: #{multi_head_attention.6} parent=1 // pred_check_branch
      %49 = sbr.rel (0) target = $region21
    $region20: #{multi_head_attention.6} parent=1 // pred_region
      %50 = dma.done [#allocation6], 2048
    $region21: #{multi_head_attention.6} parent=1 // pred_fallthru
      _
    // Predicated region
    $region22: #{multi_head_attention.6} parent=1 // pred_check
      _
    $region23: #{multi_head_attention.6} parent=1 // pred_check_branch
      %52 = sbr.rel (0) target = $region25
    $region24: #{multi_head_attention.6} parent=1 // pred_region
      %53 = dma.done [#allocation6], 16
    $region25: #{multi_head_attention.6} parent=1 // pred_fallthru
      _
    %v54 = vld [vmem:[#allocation2] sm:$0xff]
    %v55 = vld [vmem:[#allocation2 + $0x8] sm:$0xff]
    %v56 = vld [vmem:[#allocation5] sm:$0xff]
    %v57 = vld [vmem:[#allocation5 + $0x8] sm:$0xff]
    %v58 = vld [vmem:[#allocation5 + $0x10] sm:$0xff]
    %v59 = vld [vmem:[#allocation5 + $0x18] sm:$0xff]
    %v60 = vld [vmem:[#allocation5 + $0x20] sm:$0xff]
    %v61 = vld [vmem:[#allocation5 + $0x28] sm:$0xff]
    %v62 = vld [vmem:[#allocation5 + $0x30] sm:$0xff]
    %v63 = vld [vmem:[#allocation5 + $0x38] sm:$0xff]
    %v64 = vld [vmem:[#allocation5 + $0x40] sm:$0xff]
    %v65 = vld [vmem:[#allocation5 + $0x48] sm:$0xff]
    %v66 = vld [vmem:[#allocation5 + $0x50] sm:$0xff]
    %v67 = vld [vmem:[#allocation5 + $0x58] sm:$0xff]
    %v68 = vld [vmem:[#allocation5 + $0x60] sm:$0xff]
    %v69 = vld [vmem:[#allocation5 + $0x68] sm:$0xff]
    %v70 = vld [vmem:[#allocation5 + $0x70] sm:$0xff]
    %v71 = vld [vmem:[#allocation5 + $0x78] sm:$0xff]
    %v72 = vld [vmem:[#allocation7] sm:$0x1]
    %v74 = vlaneseq
    %v75 = vshrl.u32 %v74, 7
    %v76 = vsub.s32 0, %v75
    %v77 = vrot.slane %v72, %v76
    %79 = vmatprep.subr.mxu0 0.0
    %v80 = vand.u32 %v56, 4294901760
    %81 = vmatpush1.msra.mxu0 %v80
    %82 = vmatprep.subr.mxu0 0.0
    %v83 = vand.u32 %v57, 4294901760
    %84 = vmatpush1.msra.mxu0 %v83
    %85 = vmatprep.subr.mxu0 0.0
    %v86 = vand.u32 %v58, 4294901760
    %87 = vmatpush1.msra.mxu0 %v86
    %88 = vmatprep.subr.mxu0 0.0
    %v89 = vand.u32 %v59, 4294901760
    %90 = vmatpush1.msra.mxu0 %v89
    %91 = vmatprep.subr.mxu0 0.0
    %v92 = vand.u32 %v60, 4294901760
    %93 = vmatpush1.msra.mxu0 %v92
    %94 = vmatprep.subr.mxu0 0.0
    %v95 = vand.u32 %v61, 4294901760
    %96 = vmatpush1.msra.mxu0 %v95
    %97 = vmatprep.subr.mxu0 0.0
    %v98 = vand.u32 %v62, 4294901760
    %99 = vmatpush1.msra.mxu0 %v98
    %100 = vmatprep.subr.mxu0 0.0
    %v101 = vand.u32 %v63, 4294901760
    %102 = vmatpush1.msra.mxu0 %v101
    %103 = vmatprep.subr.mxu0 0.0
    %v104 = vand.u32 %v64, 4294901760
    %105 = vmatpush1.msra.mxu0 %v104
    %106 = vmatprep.subr.mxu0 0.0
    %v107 = vand.u32 %v65, 4294901760
    %108 = vmatpush1.msra.mxu0 %v107
    %109 = vmatprep.subr.mxu0 0.0
    %v110 = vand.u32 %v66, 4294901760
    %111 = vmatpush1.msra.mxu0 %v110
    %112 = vmatprep.subr.mxu0 0.0
    %v113 = vand.u32 %v67, 4294901760
    %114 = vmatpush1.msra.mxu0 %v113
    %115 = vmatprep.subr.mxu0 0.0
    %v116 = vand.u32 %v68, 4294901760
    %117 = vmatpush1.msra.mxu0 %v116
    %118 = vmatprep.subr.mxu0 0.0
    %v119 = vand.u32 %v69, 4294901760
    %120 = vmatpush1.msra.mxu0 %v119
    %121 = vmatprep.subr.mxu0 0.0
    %v122 = vand.u32 %v70, 4294901760
    %123 = vmatpush1.msra.mxu0 %v122
    %124 = vmatprep.subr.mxu0 0.0
    %v125 = vand.u32 %v71, 4294901760
    %126 = vmatpush1.msra.mxu0 %v125
    %127 = vmatprep.subr.mxu0 0.0
    %128 = vmatpush1.msra.mxu0 0.0
    %129 = vmatprep.subr.mxu0 0.0
    %130 = vmatpush1.msra.mxu0 0.0
    %131 = vmatprep.subr.mxu0 0.0
    %132 = vmatpush1.msra.mxu0 0.0
    %133 = vmatprep.subr.mxu0 0.0
    %134 = vmatpush1.msra.mxu0 0.0
    %135 = vmatprep.subr.mxu0 0.0
    %136 = vmatpush1.msra.mxu0 0.0
    %137 = vmatprep.subr.mxu0 0.0
    %138 = vmatpush1.msra.mxu0 0.0
    %139 = vmatprep.subr.mxu0 0.0
    %140 = vmatpush1.msra.mxu0 0.0
    %141 = vmatprep.subr.mxu0 0.0
    %142 = vmatpush1.msra.mxu0 0.0
    %143 = vmatprep.subr.mxu0 0.0
    %144 = vmatpush1.msra.mxu0 0.0
    %145 = vmatprep.subr.mxu0 0.0
    %146 = vmatpush1.msra.mxu0 0.0
    %147 = vmatprep.subr.mxu0 0.0
    %148 = vmatpush1.msra.mxu0 0.0
    %149 = vmatprep.subr.mxu0 0.0
    %150 = vmatpush1.msra.mxu0 0.0
    %151 = vmatprep.subr.mxu0 0.0
    %152 = vmatpush1.msra.mxu0 0.0
    %153 = vmatprep.subr.mxu0 0.0
    %154 = vmatpush1.msra.mxu0 0.0
    %155 = vmatprep.subr.mxu0 0.0
    %156 = vmatpush1.msra.mxu0 0.0
    %157 = vmatprep.subr.mxu0 0.0
    %158 = vmatpush1.msra.mxu0 0.0
    %159 = vmatprep.mubr.f32.mxu0 0.0
    %v160 = vand.u32 %v54, 4294901760
    %v161 = vsub.f32 %v54, %v160
    %v162 = vand.u32 %v161, 4294901760
    %v163 = vsub.f32 %v161, %v162
    %v164 = vand.u32 %v163, 4294901760
    %165 = vmatmul.mubr.f32.gmra.mrb[0].mxu0 %v164
    %v166 = vpop.f32.mrb[0].mxu0
    %v167 = vadd.f32 %v77, %v166
    %v168 = vpop.f32.mrb[0].mxu0
    %169 = vmatprep.mubr.f32.mxu0 0.0
    %v170 = vand.u32 %v55, 4294901760
    %v171 = vsub.f32 %v55, %v170
    %v172 = vand.u32 %v171, 4294901760
    %v173 = vsub.f32 %v171, %v172
    %v174 = vand.u32 %v173, 4294901760
    %175 = vmatmul.mubr.f32.gmra.mrb[0].mxu0 %v174
    %v176 = vpop.f32.mrb[0].mxu0
    %v177 = vadd.f32 %v77, %v176
    %v178 = vpop.f32.mrb[0].mxu0
    %179 = vdwg.mxu0
    %180 = vmatprep.subr.mxu0 0.0
    %v181 = vand.u32 %v56, 4294901760
    %v182 = vsub.f32 %v56, %v181
    %v183 = vand.u32 %v182, 4294901760
    %v184 = vsub.f32 %v182, %v183
    %v185 = vand.u32 %v184, 4294901760
    %186 = vmatpush1.msra.mxu0 %v185
    %187 = vmatprep.subr.mxu0 0.0
    %v188 = vand.u32 %v57, 4294901760
    %v189 = vsub.f32 %v57, %v188
    %v190 = vand.u32 %v189, 4294901760
    %v191 = vsub.f32 %v189, %v190
    %v192 = vand.u32 %v191, 4294901760
    %193 = vmatpush1.msra.mxu0 %v192
    %194 = vmatprep.subr.mxu0 0.0
    %v195 = vand.u32 %v58, 4294901760
    %v196 = vsub.f32 %v58, %v195
    %v197 = vand.u32 %v196, 4294901760
    %v198 = vsub.f32 %v196, %v197
    %v199 = vand.u32 %v198, 4294901760
    %200 = vmatpush1.msra.mxu0 %v199
    %201 = vmatprep.subr.mxu0 0.0
    %v202 = vand.u32 %v59, 4294901760
    %v203 = vsub.f32 %v59, %v202
    %v204 = vand.u32 %v203, 4294901760
    %v205 = vsub.f32 %v203, %v204
    %v206 = vand.u32 %v205, 4294901760
    %207 = vmatpush1.msra.mxu0 %v206
    %208 = vmatprep.subr.mxu0 0.0
    %v209 = vand.u32 %v60, 4294901760
    %v210 = vsub.f32 %v60, %v209
    %v211 = vand.u32 %v210, 4294901760
    %v212 = vsub.f32 %v210, %v211
    %v213 = vand.u32 %v212, 4294901760
    %214 = vmatpush1.msra.mxu0 %v213
    %215 = vmatprep.subr.mxu0 0.0
    %v216 = vand.u32 %v61, 4294901760
    %v217 = vsub.f32 %v61, %v216
    %v218 = vand.u32 %v217, 4294901760
    %v219 = vsub.f32 %v217, %v218
    %v220 = vand.u32 %v219, 4294901760
    %221 = vmatpush1.msra.mxu0 %v220
    %222 = vmatprep.subr.mxu0 0.0
    %v223 = vand.u32 %v62, 4294901760
    %v224 = vsub.f32 %v62, %v223
    %v225 = vand.u32 %v224, 4294901760
    %v226 = vsub.f32 %v224, %v225
    %v227 = vand.u32 %v226, 4294901760
    %228 = vmatpush1.msra.mxu0 %v227
    %229 = vmatprep.subr.mxu0 0.0
    %v230 = vand.u32 %v63, 4294901760
    %v231 = vsub.f32 %v63, %v230
    %v232 = vand.u32 %v231, 4294901760
    %v233 = vsub.f32 %v231, %v232
    %v234 = vand.u32 %v233, 4294901760
    %235 = vmatpush1.msra.mxu0 %v234
    %236 = vmatprep.subr.mxu0 0.0
    %v237 = vand.u32 %v64, 4294901760
    %v238 = vsub.f32 %v64, %v237
    %v239 = vand.u32 %v238, 4294901760
    %v240 = vsub.f32 %v238, %v239
    %v241 = vand.u32 %v240, 4294901760
    %242 = vmatpush1.msra.mxu0 %v241
    %243 = vmatprep.subr.mxu0 0.0
    %v244 = vand.u32 %v65, 4294901760
    %v245 = vsub.f32 %v65, %v244
    %v246 = vand.u32 %v245, 4294901760
    %v247 = vsub.f32 %v245, %v246
    %v248 = vand.u32 %v247, 4294901760
    %249 = vmatpush1.msra.mxu0 %v248
    %250 = vmatprep.subr.mxu0 0.0
    %v251 = vand.u32 %v66, 4294901760
    %v252 = vsub.f32 %v66, %v251
    %v253 = vand.u32 %v252, 4294901760
    %v254 = vsub.f32 %v252, %v253
    %v255 = vand.u32 %v254, 4294901760
    %256 = vmatpush1.msra.mxu0 %v255
    %257 = vmatprep.subr.mxu0 0.0
    %v258 = vand.u32 %v67, 4294901760
    %v259 = vsub.f32 %v67, %v258
    %v260 = vand.u32 %v259, 4294901760
    %v261 = vsub.f32 %v259, %v260
    %v262 = vand.u32 %v261, 4294901760
    %263 = vmatpush1.msra.mxu0 %v262
    %264 = vmatprep.subr.mxu0 0.0
    %v265 = vand.u32 %v68, 4294901760
    %v266 = vsub.f32 %v68, %v265
    %v267 = vand.u32 %v266, 4294901760
    %v268 = vsub.f32 %v266, %v267
    %v269 = vand.u32 %v268, 4294901760
    %270 = vmatpush1.msra.mxu0 %v269
    %271 = vmatprep.subr.mxu0 0.0
    %v272 = vand.u32 %v69, 4294901760
    %v273 = vsub.f32 %v69, %v272
    %v274 = vand.u32 %v273, 4294901760
    %v275 = vsub.f32 %v273, %v274
    %v276 = vand.u32 %v275, 4294901760
    %277 = vmatpush1.msra.mxu0 %v276
    %278 = vmatprep.subr.mxu0 0.0
    %v279 = vand.u32 %v70, 4294901760
    %v280 = vsub.f32 %v70, %v279
    %v281 = vand.u32 %v280, 4294901760
    %v282 = vsub.f32 %v280, %v281
    %v283 = vand.u32 %v282, 4294901760
    %284 = vmatpush1.msra.mxu0 %v283
    %285 = vmatprep.subr.mxu0 0.0
    %v286 = vand.u32 %v71, 4294901760
    %v287 = vsub.f32 %v71, %v286
    %v288 = vand.u32 %v287, 4294901760
    %v289 = vsub.f32 %v287, %v288
    %v290 = vand.u32 %v289, 4294901760
    %291 = vmatpush1.msra.mxu0 %v290
    %292 = vmatprep.subr.mxu0 0.0
    %293 = vmatpush1.msra.mxu0 0.0
    %294 = vmatprep.subr.mxu0 0.0
    %295 = vmatpush1.msra.mxu0 0.0
    %296 = vmatprep.subr.mxu0 0.0
    %297 = vmatpush1.msra.mxu0 0.0
    %298 = vmatprep.subr.mxu0 0.0
    %299 = vmatpush1.msra.mxu0 0.0
    %300 = vmatprep.subr.mxu0 0.0
    %301 = vmatpush1.msra.mxu0 0.0
    %302 = vmatprep.subr.mxu0 0.0
    %303 = vmatpush1.msra.mxu0 0.0
    %304 = vmatprep.subr.mxu0 0.0
    %305 = vmatpush1.msra.mxu0 0.0
    %306 = vmatprep.subr.mxu0 0.0
    %307 = vmatpush1.msra.mxu0 0.0
    %308 = vmatprep.subr.mxu0 0.0
    %309 = vmatpush1.msra.mxu0 0.0
    %310 = vmatprep.subr.mxu0 0.0
    %311 = vmatpush1.msra.mxu0 0.0
    %312 = vmatprep.subr.mxu0 0.0
    %313 = vmatpush1.msra.mxu0 0.0
    %314 = vmatprep.subr.mxu0 0.0
    %315 = vmatpush1.msra.mxu0 0.0
    %316 = vmatprep.subr.mxu0 0.0
    %317 = vmatpush1.msra.mxu0 0.0
    %318 = vmatprep.subr.mxu0 0.0
    %319 = vmatpush1.msra.mxu0 0.0
    %320 = vmatprep.subr.mxu0 0.0
    %321 = vmatpush1.msra.mxu0 0.0
    %322 = vmatprep.subr.mxu0 0.0
    %323 = vmatpush1.msra.mxu0 0.0
    %324 = vmatprep.mubr.f32.mxu0 0.0
    %v325 = vand.u32 %v54, 4294901760
    %326 = vmatmul.mubr.f32.gmra.mrb[0].mxu0 %v325
    %v327 = vpop.f32.mrb[0].mxu0
    %v328 = vadd.f32 %v167, %v327
    %v329 = vpop.f32.mrb[0].mxu0
    %330 = vmatprep.mubr.f32.mxu0 0.0
    %v331 = vand.u32 %v55, 4294901760
    %332 = vmatmul.mubr.f32.gmra.mrb[0].mxu0 %v331
    %v333 = vpop.f32.mrb[0].mxu0
    %v334 = vadd.f32 %v177, %v333
    %v335 = vpop.f32.mrb[0].mxu0
    %336 = vdwg.mxu0
    %337 = vmatprep.subr.mxu0 0.0
    %v338 = vand.u32 %v56, 4294901760
    %v339 = vsub.f32 %v56, %v338
    %340 = vmatpush1.msra.mxu0 %v339
    %341 = vmatprep.subr.mxu0 0.0
    %v342 = vand.u32 %v57, 4294901760
    %v343 = vsub.f32 %v57, %v342
    %344 = vmatpush1.msra.mxu0 %v343
    %345 = vmatprep.subr.mxu0 0.0
    %v346 = vand.u32 %v58, 4294901760
    %v347 = vsub.f32 %v58, %v346
    %348 = vmatpush1.msra.mxu0 %v347
    %349 = vmatprep.subr.mxu0 0.0
    %v350 = vand.u32 %v59, 4294901760
    %v351 = vsub.f32 %v59, %v350
    %352 = vmatpush1.msra.mxu0 %v351
    %353 = vmatprep.subr.mxu0 0.0
    %v354 = vand.u32 %v60, 4294901760
    %v355 = vsub.f32 %v60, %v354
    %356 = vmatpush1.msra.mxu0 %v355
    %357 = vmatprep.subr.mxu0 0.0
    %v358 = vand.u32 %v61, 4294901760
    %v359 = vsub.f32 %v61, %v358
    %360 = vmatpush1.msra.mxu0 %v359
    %361 = vmatprep.subr.mxu0 0.0
    %v362 = vand.u32 %v62, 4294901760
    %v363 = vsub.f32 %v62, %v362
    %364 = vmatpush1.msra.mxu0 %v363
    %365 = vmatprep.subr.mxu0 0.0
    %v366 = vand.u32 %v63, 4294901760
    %v367 = vsub.f32 %v63, %v366
    %368 = vmatpush1.msra.mxu0 %v367
    %369 = vmatprep.subr.mxu0 0.0
    %v370 = vand.u32 %v64, 4294901760
    %v371 = vsub.f32 %v64, %v370
    %372 = vmatpush1.msra.mxu0 %v371
    %373 = vmatprep.subr.mxu0 0.0
    %v374 = vand.u32 %v65, 4294901760
    %v375 = vsub.f32 %v65, %v374
    %376 = vmatpush1.msra.mxu0 %v375
    %377 = vmatprep.subr.mxu0 0.0
    %v378 = vand.u32 %v66, 4294901760
    %v379 = vsub.f32 %v66, %v378
    %380 = vmatpush1.msra.mxu0 %v379
    %381 = vmatprep.subr.mxu0 0.0
    %v382 = vand.u32 %v67, 4294901760
    %v383 = vsub.f32 %v67, %v382
    %384 = vmatpush1.msra.mxu0 %v383
    %385 = vmatprep.subr.mxu0 0.0
    %v386 = vand.u32 %v68, 4294901760
    %v387 = vsub.f32 %v68, %v386
    %388 = vmatpush1.msra.mxu0 %v387
    %389 = vmatprep.subr.mxu0 0.0
    %v390 = vand.u32 %v69, 4294901760
    %v391 = vsub.f32 %v69, %v390
    %392 = vmatpush1.msra.mxu0 %v391
    %393 = vmatprep.subr.mxu0 0.0
    %v394 = vand.u32 %v70, 4294901760
    %v395 = vsub.f32 %v70, %v394
    %396 = vmatpush1.msra.mxu0 %v395
    %397 = vmatprep.subr.mxu0 0.0
    %v398 = vand.u32 %v71, 4294901760
    %v399 = vsub.f32 %v71, %v398
    %400 = vmatpush1.msra.mxu0 %v399
    %401 = vmatprep.subr.mxu0 0.0
    %402 = vmatpush1.msra.mxu0 0.0
    %403 = vmatprep.subr.mxu0 0.0
    %404 = vmatpush1.msra.mxu0 0.0
    %405 = vmatprep.subr.mxu0 0.0
    %406 = vmatpush1.msra.mxu0 0.0
    %407 = vmatprep.subr.mxu0 0.0
    %408 = vmatpush1.msra.mxu0 0.0
    %409 = vmatprep.subr.mxu0 0.0
    %410 = vmatpush1.msra.mxu0 0.0
    %411 = vmatprep.subr.mxu0 0.0
    %412 = vmatpush1.msra.mxu0 0.0
    %413 = vmatprep.subr.mxu0 0.0
    %414 = vmatpush1.msra.mxu0 0.0
    %415 = vmatprep.subr.mxu0 0.0
    %416 = vmatpush1.msra.mxu0 0.0
    %417 = vmatprep.subr.mxu0 0.0
    %418 = vmatpush1.msra.mxu0 0.0
    %419 = vmatprep.subr.mxu0 0.0
    %420 = vmatpush1.msra.mxu0 0.0
    %421 = vmatprep.subr.mxu0 0.0
    %422 = vmatpush1.msra.mxu0 0.0
    %423 = vmatprep.subr.mxu0 0.0
    %424 = vmatpush1.msra.mxu0 0.0
    %425 = vmatprep.subr.mxu0 0.0
    %426 = vmatpush1.msra.mxu0 0.0
    %427 = vmatprep.subr.mxu0 0.0
    %428 = vmatpush1.msra.mxu0 0.0
    %429 = vmatprep.subr.mxu0 0.0
    %430 = vmatpush1.msra.mxu0 0.0
    %431 = vmatprep.subr.mxu0 0.0
    %432 = vmatpush1.msra.mxu0 0.0
    %433 = vmatprep.mubr.f32.mxu0 0.0
    %v434 = vand.u32 %v54, 4294901760
    %v435 = vsub.f32 %v54, %v434
    %436 = vmatmul.mubr.f32.gmra.mrb[0].mxu0 %v435
    %v437 = vpop.f32.mrb[0].mxu0
    %v438 = vadd.f32 %v328, %v437
    %v439 = vpop.f32.mrb[0].mxu0
    %440 = vmatprep.mubr.f32.mxu0 0.0
    %v441 = vand.u32 %v55, 4294901760
    %v442 = vsub.f32 %v55, %v441
    %443 = vmatmul.mubr.f32.gmra.mrb[0].mxu0 %v442
    %v444 = vpop.f32.mrb[0].mxu0
    %v445 = vadd.f32 %v334, %v444
    %v446 = vpop.f32.mrb[0].mxu0
    %447 = vdwg.mxu0
    %448 = vmatprep.subr.mxu0 0.0
    %v449 = vand.u32 %v56, 4294901760
    %450 = vmatpush1.msra.mxu0 %v449
    %451 = vmatprep.subr.mxu0 0.0
    %v452 = vand.u32 %v57, 4294901760
    %453 = vmatpush1.msra.mxu0 %v452
    %454 = vmatprep.subr.mxu0 0.0
    %v455 = vand.u32 %v58, 4294901760
    %456 = vmatpush1.msra.mxu0 %v455
    %457 = vmatprep.subr.mxu0 0.0
    %v458 = vand.u32 %v59, 4294901760
    %459 = vmatpush1.msra.mxu0 %v458
    %460 = vmatprep.subr.mxu0 0.0
    %v461 = vand.u32 %v60, 4294901760
    %462 = vmatpush1.msra.mxu0 %v461
    %463 = vmatprep.subr.mxu0 0.0
    %v464 = vand.u32 %v61, 4294901760
    %465 = vmatpush1.msra.mxu0 %v464
    %466 = vmatprep.subr.mxu0 0.0
    %v467 = vand.u32 %v62, 4294901760
    %468 = vmatpush1.msra.mxu0 %v467
    %469 = vmatprep.subr.mxu0 0.0
    %v470 = vand.u32 %v63, 4294901760
    %471 = vmatpush1.msra.mxu0 %v470
    %472 = vmatprep.subr.mxu0 0.0
    %v473 = vand.u32 %v64, 4294901760
    %474 = vmatpush1.msra.mxu0 %v473
    %475 = vmatprep.subr.mxu0 0.0
    %v476 = vand.u32 %v65, 4294901760
    %477 = vmatpush1.msra.mxu0 %v476
    %478 = vmatprep.subr.mxu0 0.0
    %v479 = vand.u32 %v66, 4294901760
    %480 = vmatpush1.msra.mxu0 %v479
    %481 = vmatprep.subr.mxu0 0.0
    %v482 = vand.u32 %v67, 4294901760
    %483 = vmatpush1.msra.mxu0 %v482
    %484 = vmatprep.subr.mxu0 0.0
    %v485 = vand.u32 %v68, 4294901760
    %486 = vmatpush1.msra.mxu0 %v485
    %487 = vmatprep.subr.mxu0 0.0
    %v488 = vand.u32 %v69, 4294901760
    %489 = vmatpush1.msra.mxu0 %v488
    %490 = vmatprep.subr.mxu0 0.0
    %v491 = vand.u32 %v70, 4294901760
    %492 = vmatpush1.msra.mxu0 %v491
    %493 = vmatprep.subr.mxu0 0.0
    %v494 = vand.u32 %v71, 4294901760
    %495 = vmatpush1.msra.mxu0 %v494
    %496 = vmatprep.subr.mxu0 0.0
    %497 = vmatpush1.msra.mxu0 0.0
    %498 = vmatprep.subr.mxu0 0.0
    %499 = vmatpush1.msra.mxu0 0.0
    %500 = vmatprep.subr.mxu0 0.0
    %501 = vmatpush1.msra.mxu0 0.0
    %502 = vmatprep.subr.mxu0 0.0
    %503 = vmatpush1.msra.mxu0 0.0
    %504 = vmatprep.subr.mxu0 0.0
    %505 = vmatpush1.msra.mxu0 0.0
    %506 = vmatprep.subr.mxu0 0.0
    %507 = vmatpush1.msra.mxu0 0.0
    %508 = vmatprep.subr.mxu0 0.0
    %509 = vmatpush1.msra.mxu0 0.0
    %510 = vmatprep.subr.mxu0 0.0
    %511 = vmatpush1.msra.mxu0 0.0
    %512 = vmatprep.subr.mxu0 0.0
    %513 = vmatpush1.msra.mxu0 0.0
    %514 = vmatprep.subr.mxu0 0.0
    %515 = vmatpush1.msra.mxu0 0.0
    %516 = vmatprep.subr.mxu0 0.0
    %517 = vmatpush1.msra.mxu0 0.0
    %518 = vmatprep.subr.mxu0 0.0
    %519 = vmatpush1.msra.mxu0 0.0
    %520 = vmatprep.subr.mxu0 0.0
    %521 = vmatpush1.msra.mxu0 0.0
    %522 = vmatprep.subr.mxu0 0.0
    %523 = vmatpush1.msra.mxu0 0.0
    %524 = vmatprep.subr.mxu0 0.0
    %525 = vmatpush1.msra.mxu0 0.0
    %526 = vmatprep.subr.mxu0 0.0
    %527 = vmatpush1.msra.mxu0 0.0
    %528 = vmatprep.mubr.f32.mxu0 0.0
    %v529 = vand.u32 %v54, 4294901760
    %v530 = vsub.f32 %v54, %v529
    %v531 = vand.u32 %v530, 4294901760
    %532 = vmatmul.mubr.f32.gmra.mrb[0].mxu0 %v531
    %v533 = vpop.f32.mrb[0].mxu0
    %v534 = vadd.f32 %v438, %v533
    %v535 = vpop.f32.mrb[0].mxu0
    %536 = vmatprep.mubr.f32.mxu0 0.0
    %v537 = vand.u32 %v55, 4294901760
    %v538 = vsub.f32 %v55, %v537
    %v539 = vand.u32 %v538, 4294901760
    %540 = vmatmul.mubr.f32.gmra.mrb[0].mxu0 %v539
    %v541 = vpop.f32.mrb[0].mxu0
    %v542 = vadd.f32 %v445, %v541
    %v543 = vpop.f32.mrb[0].mxu0
    %544 = vdwg.mxu0
    %545 = vmatprep.subr.mxu0 0.0
    %v546 = vand.u32 %v56, 4294901760
    %v547 = vsub.f32 %v56, %v546
    %v548 = vand.u32 %v547, 4294901760
    %549 = vmatpush1.msra.mxu0 %v548
    %550 = vmatprep.subr.mxu0 0.0
    %v551 = vand.u32 %v57, 4294901760
    %v552 = vsub.f32 %v57, %v551
    %v553 = vand.u32 %v552, 4294901760
    %554 = vmatpush1.msra.mxu0 %v553
    %555 = vmatprep.subr.mxu0 0.0
    %v556 = vand.u32 %v58, 4294901760
    %v557 = vsub.f32 %v58, %v556
    %v558 = vand.u32 %v557, 4294901760
    %559 = vmatpush1.msra.mxu0 %v558
    %560 = vmatprep.subr.mxu0 0.0
    %v561 = vand.u32 %v59, 4294901760
    %v562 = vsub.f32 %v59, %v561
    %v563 = vand.u32 %v562, 4294901760
    %564 = vmatpush1.msra.mxu0 %v563
    %565 = vmatprep.subr.mxu0 0.0
    %v566 = vand.u32 %v60, 4294901760
    %v567 = vsub.f32 %v60, %v566
    %v568 = vand.u32 %v567, 4294901760
    %569 = vmatpush1.msra.mxu0 %v568
    %570 = vmatprep.subr.mxu0 0.0
    %v571 = vand.u32 %v61, 4294901760
    %v572 = vsub.f32 %v61, %v571
    %v573 = vand.u32 %v572, 4294901760
    %574 = vmatpush1.msra.mxu0 %v573
    %575 = vmatprep.subr.mxu0 0.0
    %v576 = vand.u32 %v62, 4294901760
    %v577 = vsub.f32 %v62, %v576
    %v578 = vand.u32 %v577, 4294901760
    %579 = vmatpush1.msra.mxu0 %v578
    %580 = vmatprep.subr.mxu0 0.0
    %v581 = vand.u32 %v63, 4294901760
    %v582 = vsub.f32 %v63, %v581
    %v583 = vand.u32 %v582, 4294901760
    %584 = vmatpush1.msra.mxu0 %v583
    %585 = vmatprep.subr.mxu0 0.0
    %v586 = vand.u32 %v64, 4294901760
    %v587 = vsub.f32 %v64, %v586
    %v588 = vand.u32 %v587, 4294901760
    %589 = vmatpush1.msra.mxu0 %v588
    %590 = vmatprep.subr.mxu0 0.0
    %v591 = vand.u32 %v65, 4294901760
    %v592 = vsub.f32 %v65, %v591
    %v593 = vand.u32 %v592, 4294901760
    %594 = vmatpush1.msra.mxu0 %v593
    %595 = vmatprep.subr.mxu0 0.0
    %v596 = vand.u32 %v66, 4294901760
    %v597 = vsub.f32 %v66, %v596
    %v598 = vand.u32 %v597, 4294901760
    %599 = vmatpush1.msra.mxu0 %v598
    %600 = vmatprep.subr.mxu0 0.0
    %v601 = vand.u32 %v67, 4294901760
    %v602 = vsub.f32 %v67, %v601
    %v603 = vand.u32 %v602, 4294901760
    %604 = vmatpush1.msra.mxu0 %v603
    %605 = vmatprep.subr.mxu0 0.0
    %v606 = vand.u32 %v68, 4294901760
    %v607 = vsub.f32 %v68, %v606
    %v608 = vand.u32 %v607, 4294901760
    %609 = vmatpush1.msra.mxu0 %v608
    %610 = vmatprep.subr.mxu0 0.0
    %v611 = vand.u32 %v69, 4294901760
    %v612 = vsub.f32 %v69, %v611
    %v613 = vand.u32 %v612, 4294901760
    %614 = vmatpush1.msra.mxu0 %v613
    %615 = vmatprep.subr.mxu0 0.0
    %v616 = vand.u32 %v70, 4294901760
    %v617 = vsub.f32 %v70, %v616
    %v618 = vand.u32 %v617, 4294901760
    %619 = vmatpush1.msra.mxu0 %v618
    %620 = vmatprep.subr.mxu0 0.0
    %v621 = vand.u32 %v71, 4294901760
    %v622 = vsub.f32 %v71, %v621
    %v623 = vand.u32 %v622, 4294901760
    %624 = vmatpush1.msra.mxu0 %v623
    %625 = vmatprep.subr.mxu0 0.0
    %626 = vmatpush1.msra.mxu0 0.0
    %627 = vmatprep.subr.mxu0 0.0
    %628 = vmatpush1.msra.mxu0 0.0
    %629 = vmatprep.subr.mxu0 0.0
    %630 = vmatpush1.msra.mxu0 0.0
    %631 = vmatprep.subr.mxu0 0.0
    %632 = vmatpush1.msra.mxu0 0.0
    %633 = vmatprep.subr.mxu0 0.0
    %634 = vmatpush1.msra.mxu0 0.0
    %635 = vmatprep.subr.mxu0 0.0
    %636 = vmatpush1.msra.mxu0 0.0
    %637 = vmatprep.subr.mxu0 0.0
    %638 = vmatpush1.msra.mxu0 0.0
    %639 = vmatprep.subr.mxu0 0.0
    %640 = vmatpush1.msra.mxu0 0.0
    %641 = vmatprep.subr.mxu0 0.0
    %642 = vmatpush1.msra.mxu0 0.0
    %643 = vmatprep.subr.mxu0 0.0
    %644 = vmatpush1.msra.mxu0 0.0
    %645 = vmatprep.subr.mxu0 0.0
    %646 = vmatpush1.msra.mxu0 0.0
    %647 = vmatprep.subr.mxu0 0.0
    %648 = vmatpush1.msra.mxu0 0.0
    %649 = vmatprep.subr.mxu0 0.0
    %650 = vmatpush1.msra.mxu0 0.0
    %651 = vmatprep.subr.mxu0 0.0
    %652 = vmatpush1.msra.mxu0 0.0
    %653 = vmatprep.subr.mxu0 0.0
    %654 = vmatpush1.msra.mxu0 0.0
    %655 = vmatprep.subr.mxu0 0.0
    %656 = vmatpush1.msra.mxu0 0.0
    %657 = vmatprep.mubr.f32.mxu0 0.0
    %v658 = vand.u32 %v54, 4294901760
    %659 = vmatmul.mubr.f32.gmra.mrb[0].mxu0 %v658
    %v660 = vpop.f32.mrb[0].mxu0
    %v661 = vadd.f32 %v534, %v660
    %v662 = vpop.f32.mrb[0].mxu0
    %663 = vmatprep.mubr.f32.mxu0 0.0
    %v664 = vand.u32 %v55, 4294901760
    %665 = vmatmul.mubr.f32.gmra.mrb[0].mxu0 %v664
    %v666 = vpop.f32.mrb[0].mxu0
    %v667 = vadd.f32 %v542, %v666
    %v668 = vpop.f32.mrb[0].mxu0
    %669 = vdwg.mxu0
    %670 = vmatprep.subr.mxu0 0.0
    %v671 = vand.u32 %v56, 4294901760
    %672 = vmatpush1.msra.mxu0 %v671
    %673 = vmatprep.subr.mxu0 0.0
    %v674 = vand.u32 %v57, 4294901760
    %675 = vmatpush1.msra.mxu0 %v674
    %676 = vmatprep.subr.mxu0 0.0
    %v677 = vand.u32 %v58, 4294901760
    %678 = vmatpush1.msra.mxu0 %v677
    %679 = vmatprep.subr.mxu0 0.0
    %v680 = vand.u32 %v59, 4294901760
    %681 = vmatpush1.msra.mxu0 %v680
    %682 = vmatprep.subr.mxu0 0.0
    %v683 = vand.u32 %v60, 4294901760
    %684 = vmatpush1.msra.mxu0 %v683
    %685 = vmatprep.subr.mxu0 0.0
    %v686 = vand.u32 %v61, 4294901760
    %687 = vmatpush1.msra.mxu0 %v686
    %688 = vmatprep.subr.mxu0 0.0
    %v689 = vand.u32 %v62, 4294901760
    %690 = vmatpush1.msra.mxu0 %v689
    %691 = vmatprep.subr.mxu0 0.0
    %v692 = vand.u32 %v63, 4294901760
    %693 = vmatpush1.msra.mxu0 %v692
    %694 = vmatprep.subr.mxu0 0.0
    %v695 = vand.u32 %v64, 4294901760
    %696 = vmatpush1.msra.mxu0 %v695
    %697 = vmatprep.subr.mxu0 0.0
    %v698 = vand.u32 %v65, 4294901760
    %699 = vmatpush1.msra.mxu0 %v698
    %700 = vmatprep.subr.mxu0 0.0
    %v701 = vand.u32 %v66, 4294901760
    %702 = vmatpush1.msra.mxu0 %v701
    %703 = vmatprep.subr.mxu0 0.0
    %v704 = vand.u32 %v67, 4294901760
    %705 = vmatpush1.msra.mxu0 %v704
    %706 = vmatprep.subr.mxu0 0.0
    %v707 = vand.u32 %v68, 4294901760
    %708 = vmatpush1.msra.mxu0 %v707
    %709 = vmatprep.subr.mxu0 0.0
    %v710 = vand.u32 %v69, 4294901760
    %711 = vmatpush1.msra.mxu0 %v710
    %712 = vmatprep.subr.mxu0 0.0
    %v713 = vand.u32 %v70, 4294901760
    %714 = vmatpush1.msra.mxu0 %v713
    %715 = vmatprep.subr.mxu0 0.0
    %v716 = vand.u32 %v71, 4294901760
    %717 = vmatpush1.msra.mxu0 %v716
    %718 = vmatprep.subr.mxu0 0.0
    %719 = vmatpush1.msra.mxu0 0.0
    %720 = vmatprep.subr.mxu0 0.0
    %721 = vmatpush1.msra.mxu0 0.0
    %722 = vmatprep.subr.mxu0 0.0
    %723 = vmatpush1.msra.mxu0 0.0
    %724 = vmatprep.subr.mxu0 0.0
    %725 = vmatpush1.msra.mxu0 0.0
    %726 = vmatprep.subr.mxu0 0.0
    %727 = vmatpush1.msra.mxu0 0.0
    %728 = vmatprep.subr.mxu0 0.0
    %729 = vmatpush1.msra.mxu0 0.0
    %730 = vmatprep.subr.mxu0 0.0
    %731 = vmatpush1.msra.mxu0 0.0
    %732 = vmatprep.subr.mxu0 0.0
    %733 = vmatpush1.msra.mxu0 0.0
    %734 = vmatprep.subr.mxu0 0.0
    %735 = vmatpush1.msra.mxu0 0.0
    %736 = vmatprep.subr.mxu0 0.0
    %737 = vmatpush1.msra.mxu0 0.0
    %738 = vmatprep.subr.mxu0 0.0
    %739 = vmatpush1.msra.mxu0 0.0
    %740 = vmatprep.subr.mxu0 0.0
    %741 = vmatpush1.msra.mxu0 0.0
    %742 = vmatprep.subr.mxu0 0.0
    %743 = vmatpush1.msra.mxu0 0.0
    %744 = vmatprep.subr.mxu0 0.0
    %745 = vmatpush1.msra.mxu0 0.0
    %746 = vmatprep.subr.mxu0 0.0
    %747 = vmatpush1.msra.mxu0 0.0
    %748 = vmatprep.subr.mxu0 0.0
    %749 = vmatpush1.msra.mxu0 0.0
    %750 = vmatprep.mubr.f32.mxu0 0.0
    %v751 = vand.u32 %v54, 4294901760
    %752 = vmatmul.mubr.f32.gmra.mrb[0].mxu0 %v751
    %v753 = vpop.f32.mrb[0].mxu0
    %v754 = vadd.f32 %v661, %v753
    %v755 = vpop.f32.mrb[0].mxu0
    %756 = vmatprep.mubr.f32.mxu0 0.0
    %v757 = vand.u32 %v55, 4294901760
    %758 = vmatmul.mubr.f32.gmra.mrb[0].mxu0 %v757
    %v759 = vpop.f32.mrb[0].mxu0
    %v760 = vadd.f32 %v667, %v759
    %v761 = vpop.f32.mrb[0].mxu0
    %762 = vdwg.mxu0
    %763 = vst [vmem:[#allocation8] sm:$0xff] %v754
    %764 = vst [vmem:[#allocation8 + $0x8] sm:$0xff] %v760
    // Predicated region
    $region26: #{multi_head_attention.6} parent=1 // pred_check
      _
    $region27: #{multi_head_attention.6} parent=1 // pred_check_branch
      %766 = sbr.rel (0) target = $region29
    $region28: #{multi_head_attention.6} parent=1 // pred_region
      %s768 = ssub.s32 256, 256
      %769 = vsyncadd [#allocation4], %s768
      %s770 = sshll.u32 [#allocation8], 4
      %s771 = int_to_ptr.vmem [resolvable:$true] %s770
      %776 = dma.vmem_to_hbm [thread:$0]  %s771, 256, %s3, [#allocation4], 128, 128, 8
    $region29: #{multi_head_attention.6} parent=1 // pred_fallthru
      _
    // Predicated region
    $region30: #{multi_head_attention.6} parent=1 // pred_check
      _
    $region31: #{multi_head_attention.6} parent=1 // pred_check_branch
      %778 = sbr.rel (0) target = $region33
    $region32: #{multi_head_attention.6} parent=1 // pred_region
      %779 = dma.done [#allocation4], 256
    $region33: #{multi_head_attention.6} parent=1 // pred_fallthru
      _
    %780 = vsyncpa [#allocation3], 1
    %781 = vsyncpa [#allocation6], 1
    %782 = vsyncpa [#allocation4], 1

// kernel: multi_head_attention.8
$region0: #{multi_head_attention.8}
  #allocation0 [shape = 'u32[]', space=smem, size = 0x4, offset = 0x4, fixed_abs, tag = 'smem constant byte address 0x4 - core index']
  #allocation1 [shape = 'u32[144,128]{1,0:T(1,128)}', space=vmem, size = 0x12000, scoped, tag = 'internal scratch']
  %s0 = inlined_call_operand.hbm [shape: f32[2,4,8,8], index: 0, kind: input, shape index: {}]
  %s1 = inlined_call_operand.hbm [shape: f32[2,4,8,8], index: 1, kind: input, shape index: {}]
  %s2 = inlined_call_operand.hbm [shape: f32[2,4,8,8], index: 2, kind: input, shape index: {}]
  %s3 = inlined_call_operand.hbm [shape: f32[2,4,8,8], index: 3, kind: output, shape index: {}]
  %s4 = sld [smem:[#allocation0]]
  $region57: #{multi_head_attention.8} parent=0
    _
  %s6 = ssub.s32 1, %s4
  %s7 = scalar_select 0, %s6, %s4
  $region1: #{multi_head_attention.8} parent=0
    #allocation2 [shape = 'u8[32768]{0}', space=vmem, size = 0x8000, scoped, tag = 'input window, operand 0']
    #allocation3 [shape = 's32[2]{0}', space=sflag, size = 0x8, scoped, tag = 'scoped memory for multi_head_attention.8']
    #allocation4 [shape = 's32[2]{0}', space=sflag, size = 0x8, scoped, tag = 'scoped memory for multi_head_attention.8']
    #allocation5 [shape = 'u8[32768]{0}', space=vmem, size = 0x8000, scoped, tag = 'input window, operand 1']
    #allocation6 [shape = 's32[2]{0}', space=sflag, size = 0x8, scoped, tag = 'scoped memory for multi_head_attention.8']
    #allocation7 [shape = 'u8[32768]{0}', space=vmem, size = 0x8000, scoped, tag = 'input window, operand 2']
    #allocation8 [shape = 'u8[32768]{0}', space=vmem, size = 0x8000, scoped, tag = 'output window, operand 0']
    %8 = vsyncpa [#allocation3], 0
    %s9 = scalar_lea.sflag [#allocation3], 1
    %10 = vsyncpa %s9, 0
    %11 = vsyncpa [#allocation6], 0
    %s12 = scalar_lea.sflag [#allocation6], 1
    %13 = vsyncpa %s12, 0
    %14 = vsyncpa [#allocation4], 0
    %s15 = scalar_lea.sflag [#allocation4], 1
    %16 = vsyncpa %s15, 0
    loop: start=0, step=1, limit=4
    $region2: #{multi_head_attention.8} parent=1 // loop_pre_header
      _
    $region3: #{multi_head_attention.8} parent=1 // loop_header
      %s18 = sphi 0, %s22
      %p19 = scmp.ge.s32.totalorder %s18, 4
      %s28 = sphi 0, %s30
      %s31 = sphi 0, %s28
      %s32 = sphi 0, %s31
      %s48 = sphi 0, %s32
      %s54 = sphi 0, %s56
      %s57 = sphi 0, %s54
      %s58 = sphi 0, %s57
      %s74 = sphi 0, %s58
      %s80 = sphi 0, %s82
      %s83 = sphi 0, %s80
      %s84 = sphi 0, %s83
      %s100 = sphi 0, %s84
      %s106 = sphi 0, %s108
      %s109 = sphi 0, %s106
      %s110 = sphi 0, %s109
      %s126 = sphi 0, %s110
    $region4: #{multi_head_attention.8} parent=1 // loop_header_branch
      %21 = sbr.rel (%p19) target = $region8
    $region5: #{multi_head_attention.8} parent=1 // loop_body
      %s23 = ssub.s32 %s18, 1
      %s24 = ssub.s32 %s18, 2
      %s25 = sadd.s32 %s18, 1
      %s26 = ssub.s32 %s18, %s25
      %p27 = scmp.eq.s32.totalorder %s26, 0
      %s29 = sadd.s32 %s28, 1
      %s30 = scalar_select %p27, %s28, %s29
      %p33 = pneg %p27
      %p34 = scmp.eq.s32.totalorder %s18, 1
      %p35 = por %p33, %p34
      %p36 = scmp.ne.s32.totalorder %s28, %s31
      %p37 = scmp.eq.s32.totalorder %s18, 0
      %p38 = por %p36, %p37
      %p39 = scmp.ne.s32.totalorder %s28, %s31
      %p40 = scmp.eq.s32.totalorder %s23, 1
      %p41 = por %p39, %p40
      %p42 = scmp.ne.s32.totalorder %s31, %s32
      %p43 = scmp.eq.s32.totalorder %s23, 0
      %p44 = por %p42, %p43
      %p45 = scmp.ne.s32.totalorder %s31, %s32
      %p46 = scmp.eq.s32.totalorder %s24, 1
      %p47 = por %p45, %p46
      %p49 = scmp.ne.s32.totalorder %s32, %s48
      %p50 = scmp.eq.s32.totalorder %s24, 0
      %p51 = por %p49, %p50
      %s52 = ssub.s32 %s18, %s25
      %p53 = scmp.eq.s32.totalorder %s52, 0
      %s55 = sadd.s32 %s54, 1
      %s56 = scalar_select %p53, %s54, %s55
      %p59 = pneg %p53
      %p60 = scmp.eq.s32.totalorder %s18, 1
      %p61 = por %p59, %p60
      %p62 = scmp.ne.s32.totalorder %s54, %s57
      %p63 = scmp.eq.s32.totalorder %s18, 0
      %p64 = por %p62, %p63
      %p65 = scmp.ne.s32.totalorder %s54, %s57
      %p66 = scmp.eq.s32.totalorder %s23, 1
      %p67 = por %p65, %p66
      %p68 = scmp.ne.s32.totalorder %s57, %s58
      %p69 = scmp.eq.s32.totalorder %s23, 0
      %p70 = por %p68, %p69
      %p71 = scmp.ne.s32.totalorder %s57, %s58
      %p72 = scmp.eq.s32.totalorder %s24, 1
      %p73 = por %p71, %p72
      %p75 = scmp.ne.s32.totalorder %s58, %s74
      %p76 = scmp.eq.s32.totalorder %s24, 0
      %p77 = por %p75, %p76
      %s78 = ssub.s32 %s18, %s25
      %p79 = scmp.eq.s32.totalorder %s78, 0
      %s81 = sadd.s32 %s80, 1
      %s82 = scalar_select %p79, %s80, %s81
      %p85 = pneg %p79
      %p86 = scmp.eq.s32.totalorder %s18, 1
      %p87 = por %p85, %p86
      %p88 = scmp.ne.s32.totalorder %s80, %s83
      %p89 = scmp.eq.s32.totalorder %s18, 0
      %p90 = por %p88, %p89
      %p91 = scmp.ne.s32.totalorder %s80, %s83
      %p92 = scmp.eq.s32.totalorder %s23, 1
      %p93 = por %p91, %p92
      %p94 = scmp.ne.s32.totalorder %s83, %s84
      %p95 = scmp.eq.s32.totalorder %s23, 0
      %p96 = por %p94, %p95
      %p97 = scmp.ne.s32.totalorder %s83, %s84
      %p98 = scmp.eq.s32.totalorder %s24, 1
      %p99 = por %p97, %p98
      %p101 = scmp.ne.s32.totalorder %s84, %s100
      %p102 = scmp.eq.s32.totalorder %s24, 0
      %p103 = por %p101, %p102
      %s104 = ssub.s32 %s18, %s25
      %p105 = scmp.eq.s32.totalorder %s104, 0
      %s107 = sadd.s32 %s106, 1
      %s108 = scalar_select %p105, %s106, %s107
      %p111 = pneg %p105
      %p112 = scmp.eq.s32.totalorder %s18, 1
      %p113 = por %p111, %p112
      %p114 = scmp.ne.s32.totalorder %s106, %s109
      %p115 = scmp.eq.s32.totalorder %s18, 0
      %p116 = por %p114, %p115
      %p117 = scmp.ne.s32.totalorder %s106, %s109
      %p118 = scmp.eq.s32.totalorder %s23, 1
      %p119 = por %p117, %p118
      %p120 = scmp.ne.s32.totalorder %s109, %s110
      %p121 = scmp.eq.s32.totalorder %s23, 0
      %p122 = por %p120, %p121
      %p123 = scmp.ne.s32.totalorder %s109, %s110
      %p124 = scmp.eq.s32.totalorder %s24, 1
      %p125 = por %p123, %p124
      %p127 = scmp.ne.s32.totalorder %s110, %s126
      %p128 = scmp.eq.s32.totalorder %s24, 0
      %p129 = por %p127, %p128
      %p130 = scmp.le.s32.totalorder 1, %s18
      %p131 = scmp.lt.s32.totalorder %s18, 3
      %p132 = pnand %p130, %p131
      %p133 = pneg %p132
      // Predicated region
      $region9: #{multi_head_attention.8} parent=5 // pred_check
        _
      $region10: #{multi_head_attention.8} parent=5 // pred_check_branch
        %135 = sbr.rel (%p132) target = $region12
      $region11: #{multi_head_attention.8} parent=5 // pred_region
        %s136 = ssub.s32 %s18, 1
      $region12: #{multi_head_attention.8} parent=5 // pred_fallthru
        _
      %p137 = scmp.lt.s32.totalorder %s18, 2
      // Predicated region
      $region13: #{multi_head_attention.8} parent=5 // pred_check
        %p138 = pneg %p137
      $region14: #{multi_head_attention.8} parent=5 // pred_check_branch
        %140 = sbr.rel (%p138) target = $region16
      $region15: #{multi_head_attention.8} parent=5 // pred_region
        // Predicated region
        $region17: #{multi_head_attention.8} parent=15 // pred_check
          %p141 = pneg %p38
        $region18: #{multi_head_attention.8} parent=15 // pred_check_branch
          %143 = sbr.rel (%p141) target = $region20
        $region19: #{multi_head_attention.8} parent=15 // pred_region
          %s144 = sand.u32 %s28, 1
          %s145 = scalar_lea.sflag [#allocation3], %s144
          %s146 = sand.u32 %s28, 1
          %s147 = smul.addr %s146, 32
          %s148 = scalar_lea.vmem [#allocation2], %s147
          %s150 = ssub.s32 512, 512
          %151 = vsyncadd %s145, %s150
          %s152 = smul.addr %s18, 4
          %s153 = smul.addr %s152, 128
          %s154 = scalar_lea.hbm %s0, %s153
          %s155 = sshll.u32 %s148, 4
          %s156 = int_to_ptr.vmem [resolvable:$true] %s155
          %161 = dma.hbm_to_vmem [thread:$0]  %s154, 512, %s156, %s145, 128, 128, 8
        $region20: #{multi_head_attention.8} parent=15 // pred_fallthru
          _
        // Predicated region
        $region21: #{multi_head_attention.8} parent=15 // pred_check
          %p162 = pneg %p64
        $region22: #{multi_head_attention.8} parent=15 // pred_check_branch
          %164 = sbr.rel (%p162) target = $region24
        $region23: #{multi_head_attention.8} parent=15 // pred_region
          %s165 = sand.u32 %s18, 1
          %s166 = scalar_lea.sflag [#allocation6], %s165
          %s167 = sand.u32 %s54, 1
          %s168 = smul.addr %s167, 32
          %s169 = scalar_lea.vmem [#allocation5], %s168
          %s171 = ssub.s32 512, 512
          %172 = vsyncadd %s166, %s171
          %s173 = smul.addr %s18, 4
          %s174 = smul.addr %s173, 128
          %s175 = scalar_lea.hbm %s1, %s174
          %s176 = sshll.u32 %s169, 4
          %s177 = int_to_ptr.vmem [resolvable:$true] %s176
          %182 = dma.hbm_to_vmem [thread:$0]  %s175, 512, %s177, %s166, 128, 128, 8
        $region24: #{multi_head_attention.8} parent=15 // pred_fallthru
          _
        // Predicated region
        $region25: #{multi_head_attention.8} parent=15 // pred_check
          %p183 = pneg %p90
        $region26: #{multi_head_attention.8} parent=15 // pred_check_branch
          %185 = sbr.rel (%p183) target = $region28
        $region27: #{multi_head_attention.8} parent=15 // pred_region
          %s186 = sand.u32 %s18, 1
          %s187 = scalar_lea.sflag [#allocation6], %s186
          %s188 = sand.u32 %s80, 1
          %s189 = smul.addr %s188, 32
          %s190 = scalar_lea.vmem [#allocation7], %s189
          %s192 = ssub.s32 512, 512
          %193 = vsyncadd %s187, %s192
          %s194 = smul.addr %s18, 4
          %s195 = smul.addr %s194, 128
          %s196 = scalar_lea.hbm %s2, %s195
          %s197 = sshll.u32 %s190, 4
          %s198 = int_to_ptr.vmem [resolvable:$true] %s197
          %203 = dma.hbm_to_vmem [thread:$0]  %s196, 512, %s198, %s187, 128, 128, 8
        $region28: #{multi_head_attention.8} parent=15 // pred_fallthru
          _
      $region16: #{multi_head_attention.8} parent=5 // pred_fallthru
        _
      %p204 = scmp.le.s32.totalorder 1, %s18
      %p205 = scmp.lt.s32.totalorder %s18, 3
      %p206 = pnand %p204, %p205
      %p207 = pneg %p206
      // Predicated region
      $region29: #{multi_head_attention.8} parent=5 // pred_check
        _
      $region30: #{multi_head_attention.8} parent=5 // pred_check_branch
        %209 = sbr.rel (%p206) target = $region32
      $region31: #{multi_head_attention.8} parent=5 // pred_region
        %s210 = ssub.s32 %s18, 1
        %s211 = sand.u32 %s31, 1
        %s212 = scalar_lea.sflag [#allocation3], %s211
        %s213 = sand.u32 %s31, 1
        %s214 = smul.addr %s213, 32
        %s215 = scalar_lea.vmem [#allocation2], %s214
        // Predicated region
        $region33: #{multi_head_attention.8} parent=31 // pred_check
          %p216 = pneg %p44
        $region34: #{multi_head_attention.8} parent=31 // pred_check_branch
          %218 = sbr.rel (%p216) target = $region36
        $region35: #{multi_head_attention.8} parent=31 // pred_region
          %219 = dma.done %s212, 512
        $region36: #{multi_head_attention.8} parent=31 // pred_fallthru
          _
        %s220 = sand.u32 %s23, 1
        %s221 = scalar_lea.sflag [#allocation6], %s220
        %s222 = sand.u32 %s57, 1
        %s223 = smul.addr %s222, 32
        %s224 = scalar_lea.vmem [#allocation5], %s223
        // Predicated region
        $region37: #{multi_head_attention.8} parent=31 // pred_check
          %p225 = pneg %p70
        $region38: #{multi_head_attention.8} parent=31 // pred_check_branch
          %227 = sbr.rel (%p225) target = $region40
        $region39: #{multi_head_attention.8} parent=31 // pred_region
          %228 = dma.done %s221, 512
        $region40: #{multi_head_attention.8} parent=31 // pred_fallthru
          _
        %s229 = sand.u32 %s23, 1
        %s230 = scalar_lea.sflag [#allocation6], %s229
        %s231 = sand.u32 %s83, 1
        %s232 = smul.addr %s231, 32
        %s233 = scalar_lea.vmem [#allocation7], %s232
        // Predicated region
        $region41: #{multi_head_attention.8} parent=31 // pred_check
          %p234 = pneg %p96
        $region42: #{multi_head_attention.8} parent=31 // pred_check_branch
          %236 = sbr.rel (%p234) target = $region44
        $region43: #{multi_head_attention.8} parent=31 // pred_region
          %237 = dma.done %s230, 512
        $region44: #{multi_head_attention.8} parent=31 // pred_fallthru
          _
        %s238 = sand.u32 %s31, 1
        %s239 = scalar_lea.sflag [#allocation3], %s238
        %s240 = sand.u32 %s31, 1
        %s241 = smul.addr %s240, 32
        %s242 = scalar_lea.vmem [#allocation2], %s241
        %p243 = pneg %p44
        %p244 = pneg %p41
        %s245 = sand.u32 %s23, 1
        %s246 = scalar_lea.sflag [#allocation6], %s245
        %s247 = sand.u32 %s57, 1
        %s248 = smul.addr %s247, 32
        %s249 = scalar_lea.vmem [#allocation5], %s248
        %p250 = pneg %p70
        %p251 = pneg %p67
        %s252 = sand.u32 %s23, 1
        %s253 = scalar_lea.sflag [#allocation6], %s252
        %s254 = sand.u32 %s83, 1
        %s255 = smul.addr %s254, 32
        %s256 = scalar_lea.vmem [#allocation7], %s255
        %p257 = pneg %p96
        %p258 = pneg %p93
        %p259 = pneg %p122
        %p260 = pneg %p119
        %s261 = sand.u32 %s109, 1
        %s262 = scalar_lea.sflag [#allocation4], %s261
        %s263 = sand.u32 %s109, 1
        %s264 = smul.addr %s263, 32
        %s265 = scalar_lea.vmem [#allocation8], %s264
        %v266 = vld [vmem:[%s215] sm:$0xff]
        %v267 = vld [vmem:[%s215 + $0x8] sm:$0xff]
        %v268 = vld [vmem:[%s215 + $0x10] sm:$0xff]
        %v269 = vld [vmem:[%s215 + $0x18] sm:$0xff]
        %v270 = vld [vmem:[%s224] sm:$0xff]
        %v271 = vld [vmem:[%s224 + $0x8] sm:$0xff]
        %v272 = vld [vmem:[%s224 + $0x10] sm:$0xff]
        %v273 = vld [vmem:[%s224 + $0x18] sm:$0xff]
        %vm274 = vcmask 64512
        %v276 = vsel %vm274, %v266, 0
        %v279 = vsel %vm274, %v270, 0
        %281 = vmatprep.subr.mxu0 0.0
        %v282 = vand.u32 %v279, 4294901760
        %283 = vmatpush1.xpose.msra.mxu0 %v282
        %284 = vmatprep.subr.mxu0 0.0
        %285 = vmatpush1.xpose.msra.mxu0 0.0
        %286 = vmatprep.subr.mxu0 0.0
        %287 = vmatpush1.xpose.msra.mxu0 0.0
        %288 = vmatprep.subr.mxu0 0.0
        %289 = vmatpush1.xpose.msra.mxu0 0.0
        %290 = vmatprep.subr.mxu0 0.0
        %291 = vmatpush1.xpose.msra.mxu0 0.0
        %292 = vmatprep.subr.mxu0 0.0
        %293 = vmatpush1.xpose.msra.mxu0 0.0
        %294 = vmatprep.subr.mxu0 0.0
        %295 = vmatpush1.xpose.msra.mxu0 0.0
        %296 = vmatprep.subr.mxu0 0.0
        %297 = vmatpush1.xpose.msra.mxu0 0.0
        %298 = vmatprep.subr.mxu0 0.0
        %299 = vmatpush1.xpose.msra.mxu0 0.0
        %300 = vmatprep.subr.mxu0 0.0
        %301 = vmatpush1.xpose.msra.mxu0 0.0
        %302 = vmatprep.subr.mxu0 0.0
        %303 = vmatpush1.xpose.msra.mxu0 0.0
        %304 = vmatprep.subr.mxu0 0.0
        %305 = vmatpush1.xpose.msra.mxu0 0.0
        %306 = vmatprep.subr.mxu0 0.0
        %307 = vmatpush1.xpose.msra.mxu0 0.0
        %308 = vmatprep.subr.mxu0 0.0
        %309 = vmatpush1.xpose.msra.mxu0 0.0
        %310 = vmatprep.subr.mxu0 0.0
        %311 = vmatpush1.xpose.msra.mxu0 0.0
        %312 = vmatprep.subr.mxu0 0.0
        %313 = vmatpush1.xpose.msra.mxu0 0.0
        %314 = vmatprep.subr.mxu0 0.0
        %315 = vmatpush1.xpose.msra.mxu0 0.0
        %316 = vmatprep.subr.mxu0 0.0
        %317 = vmatpush1.xpose.msra.mxu0 0.0
        %318 = vmatprep.subr.mxu0 0.0
        %319 = vmatpush1.xpose.msra.mxu0 0.0
        %320 = vmatprep.subr.mxu0 0.0
        %321 = vmatpush1.xpose.msra.mxu0 0.0
        %322 = vmatprep.subr.mxu0 0.0
        %323 = vmatpush1.xpose.msra.mxu0 0.0
        %324 = vmatprep.subr.mxu0 0.0
        %325 = vmatpush1.xpose.msra.mxu0 0.0
        %326 = vmatprep.subr.mxu0 0.0
        %327 = vmatpush1.xpose.msra.mxu0 0.0
        %328 = vmatprep.subr.mxu0 0.0
        %329 = vmatpush1.xpose.msra.mxu0 0.0
        %330 = vmatprep.subr.mxu0 0.0
        %331 = vmatpush1.xpose.msra.mxu0 0.0
        %332 = vmatprep.subr.mxu0 0.0
        %333 = vmatpush1.xpose.msra.mxu0 0.0
        %334 = vmatprep.subr.mxu0 0.0
        %335 = vmatpush1.xpose.msra.mxu0 0.0
        %336 = vmatprep.subr.mxu0 0.0
        %337 = vmatpush1.xpose.msra.mxu0 0.0
        %338 = vmatprep.subr.mxu0 0.0
        %339 = vmatpush1.xpose.msra.mxu0 0.0
        %340 = vmatprep.subr.mxu0 0.0
        %341 = vmatpush1.xpose.msra.mxu0 0.0
        %342 = vmatprep.subr.mxu0 0.0
        %343 = vmatpush1.xpose.msra.mxu0 0.0
        %344 = vmatprep.subr.mxu0 0.0
        %345 = vmatpush1.xpose.msra.mxu0 0.0
        %346 = vmatprep.mubr.f32.mxu0 0.0
        %v347 = vand.u32 %v276, 4294901760
        %v348 = vsub.f32 %v276, %v347
        %v349 = vand.u32 %v348, 4294901760
        %v350 = vsub.f32 %v348, %v349
        %v351 = vand.u32 %v350, 4294901760
        %352 = vmatmul.mubr.f32.gmra.mrb[0].mxu0 %v351
        %v353 = vpop.f32.mrb[0].mxu0
        %v354 = vadd.f32 0.0, %v353
        %v355 = vpop.f32.mrb[0].mxu0
        %356 = vdwg.mxu0
        %357 = vmatprep.subr.mxu0 0.0
        %v358 = vand.u32 %v279, 4294901760
        %v359 = vsub.f32 %v279, %v358
        %v360 = vand.u32 %v359, 4294901760
        %v361 = vsub.f32 %v359, %v360
        %v362 = vand.u32 %v361, 4294901760
        %363 = vmatpush1.xpose.msra.mxu0 %v362
        %364 = vmatprep.subr.mxu0 0.0
        %365 = vmatpush1.xpose.msra.mxu0 0.0
        %366 = vmatprep.subr.mxu0 0.0
        %367 = vmatpush1.xpose.msra.mxu0 0.0
        %368 = vmatprep.subr.mxu0 0.0
        %369 = vmatpush1.xpose.msra.mxu0 0.0
        %370 = vmatprep.subr.mxu0 0.0
        %371 = vmatpush1.xpose.msra.mxu0 0.0
        %372 = vmatprep.subr.mxu0 0.0
        %373 = vmatpush1.xpose.msra.mxu0 0.0
        %374 = vmatprep.subr.mxu0 0.0
        %375 = vmatpush1.xpose.msra.mxu0 0.0
        %376 = vmatprep.subr.mxu0 0.0
        %377 = vmatpush1.xpose.msra.mxu0 0.0
        %378 = vmatprep.subr.mxu0 0.0
        %379 = vmatpush1.xpose.msra.mxu0 0.0
        %380 = vmatprep.subr.mxu0 0.0
        %381 = vmatpush1.xpose.msra.mxu0 0.0
        %382 = vmatprep.subr.mxu0 0.0
        %383 = vmatpush1.xpose.msra.mxu0 0.0
        %384 = vmatprep.subr.mxu0 0.0
        %385 = vmatpush1.xpose.msra.mxu0 0.0
        %386 = vmatprep.subr.mxu0 0.0
        %387 = vmatpush1.xpose.msra.mxu0 0.0
        %388 = vmatprep.subr.mxu0 0.0
        %389 = vmatpush1.xpose.msra.mxu0 0.0
        %390 = vmatprep.subr.mxu0 0.0
        %391 = vmatpush1.xpose.msra.mxu0 0.0
        %392 = vmatprep.subr.mxu0 0.0
        %393 = vmatpush1.xpose.msra.mxu0 0.0
        %394 = vmatprep.subr.mxu0 0.0
        %395 = vmatpush1.xpose.msra.mxu0 0.0
        %396 = vmatprep.subr.mxu0 0.0
        %397 = vmatpush1.xpose.msra.mxu0 0.0
        %398 = vmatprep.subr.mxu0 0.0
        %399 = vmatpush1.xpose.msra.mxu0 0.0
        %400 = vmatprep.subr.mxu0 0.0
        %401 = vmatpush1.xpose.msra.mxu0 0.0
        %402 = vmatprep.subr.mxu0 0.0
        %403 = vmatpush1.xpose.msra.mxu0 0.0
        %404 = vmatprep.subr.mxu0 0.0
        %405 = vmatpush1.xpose.msra.mxu0 0.0
        %406 = vmatprep.subr.mxu0 0.0
        %407 = vmatpush1.xpose.msra.mxu0 0.0
        %408 = vmatprep.subr.mxu0 0.0
        %409 = vmatpush1.xpose.msra.mxu0 0.0
        %410 = vmatprep.subr.mxu0 0.0
        %411 = vmatpush1.xpose.msra.mxu0 0.0
        %412 = vmatprep.subr.mxu0 0.0
        %413 = vmatpush1.xpose.msra.mxu0 0.0
        %414 = vmatprep.subr.mxu0 0.0
        %415 = vmatpush1.xpose.msra.mxu0 0.0
        %416 = vmatprep.subr.mxu0 0.0
        %417 = vmatpush1.xpose.msra.mxu0 0.0
        %418 = vmatprep.subr.mxu0 0.0
        %419 = vmatpush1.xpose.msra.mxu0 0.0
        %420 = vmatprep.subr.mxu0 0.0
        %421 = vmatpush1.xpose.msra.mxu0 0.0
        %422 = vmatprep.subr.mxu0 0.0
        %423 = vmatpush1.xpose.msra.mxu0 0.0
        %424 = vmatprep.subr.mxu0 0.0
        %425 = vmatpush1.xpose.msra.mxu0 0.0
        %426 = vmatprep.mubr.f32.mxu0 0.0
        %v427 = vand.u32 %v276, 4294901760
        %428 = vmatmul.mubr.f32.gmra.mrb[0].mxu0 %v427
        %v429 = vpop.f32.mrb[0].mxu0
        %v430 = vadd.f32 %v354, %v429
        %v431 = vpop.f32.mrb[0].mxu0
        %432 = vdwg.mxu0
        %433 = vmatprep.subr.mxu0 0.0
        %v434 = vand.u32 %v279, 4294901760
        %v435 = vsub.f32 %v279, %v434
        %436 = vmatpush1.xpose.msra.mxu0 %v435
        %437 = vmatprep.subr.mxu0 0.0
        %438 = vmatpush1.xpose.msra.mxu0 0.0
        %439 = vmatprep.subr.mxu0 0.0
        %440 = vmatpush1.xpose.msra.mxu0 0.0
        %441 = vmatprep.subr.mxu0 0.0
        %442 = vmatpush1.xpose.msra.mxu0 0.0
        %443 = vmatprep.subr.mxu0 0.0
        %444 = vmatpush1.xpose.msra.mxu0 0.0
        %445 = vmatprep.subr.mxu0 0.0
        %446 = vmatpush1.xpose.msra.mxu0 0.0
        %447 = vmatprep.subr.mxu0 0.0
        %448 = vmatpush1.xpose.msra.mxu0 0.0
        %449 = vmatprep.subr.mxu0 0.0
        %450 = vmatpush1.xpose.msra.mxu0 0.0
        %451 = vmatprep.subr.mxu0 0.0
        %452 = vmatpush1.xpose.msra.mxu0 0.0
        %453 = vmatprep.subr.mxu0 0.0
        %454 = vmatpush1.xpose.msra.mxu0 0.0
        %455 = vmatprep.subr.mxu0 0.0
        %456 = vmatpush1.xpose.msra.mxu0 0.0
        %457 = vmatprep.subr.mxu0 0.0
        %458 = vmatpush1.xpose.msra.mxu0 0.0
        %459 = vmatprep.subr.mxu0 0.0
        %460 = vmatpush1.xpose.msra.mxu0 0.0
        %461 = vmatprep.subr.mxu0 0.0
        %462 = vmatpush1.xpose.msra.mxu0 0.0
        %463 = vmatprep.subr.mxu0 0.0
        %464 = vmatpush1.xpose.msra.mxu0 0.0
        %465 = vmatprep.subr.mxu0 0.0
        %466 = vmatpush1.xpose.msra.mxu0 0.0
        %467 = vmatprep.subr.mxu0 0.0
        %468 = vmatpush1.xpose.msra.mxu0 0.0
        %469 = vmatprep.subr.mxu0 0.0
        %470 = vmatpush1.xpose.msra.mxu0 0.0
        %471 = vmatprep.subr.mxu0 0.0
        %472 = vmatpush1.xpose.msra.mxu0 0.0
        %473 = vmatprep.subr.mxu0 0.0
        %474 = vmatpush1.xpose.msra.mxu0 0.0
        %475 = vmatprep.subr.mxu0 0.0
        %476 = vmatpush1.xpose.msra.mxu0 0.0
        %477 = vmatprep.subr.mxu0 0.0
        %478 = vmatpush1.xpose.msra.mxu0 0.0
        %479 = vmatprep.subr.mxu0 0.0
        %480 = vmatpush1.xpose.msra.mxu0 0.0
        %481 = vmatprep.subr.mxu0 0.0
        %482 = vmatpush1.xpose.msra.mxu0 0.0
        %483 = vmatprep.subr.mxu0 0.0
        %484 = vmatpush1.xpose.msra.mxu0 0.0
        %485 = vmatprep.subr.mxu0 0.0
        %486 = vmatpush1.xpose.msra.mxu0 0.0
        %487 = vmatprep.subr.mxu0 0.0
        %488 = vmatpush1.xpose.msra.mxu0 0.0
        %489 = vmatprep.subr.mxu0 0.0
        %490 = vmatpush1.xpose.msra.mxu0 0.0
        %491 = vmatprep.subr.mxu0 0.0
        %492 = vmatpush1.xpose.msra.mxu0 0.0
        %493 = vmatprep.subr.mxu0 0.0
        %494 = vmatpush1.xpose.msra.mxu0 0.0
        %495 = vmatprep.subr.mxu0 0.0
        %496 = vmatpush1.xpose.msra.mxu0 0.0
        %497 = vmatprep.subr.mxu0 0.0
        %498 = vmatpush1.xpose.msra.mxu0 0.0
        %499 = vmatprep.mubr.f32.mxu0 0.0
        %v500 = vand.u32 %v276, 4294901760
        %v501 = vsub.f32 %v276, %v500
        %502 = vmatmul.mubr.f32.gmra.mrb[0].mxu0 %v501
        %v503 = vpop.f32.mrb[0].mxu0
        %v504 = vadd.f32 %v430, %v503
        %v505 = vpop.f32.mrb[0].mxu0
        %506 = vdwg.mxu0
        %507 = vmatprep.subr.mxu0 0.0
        %v508 = vand.u32 %v279, 4294901760
        %509 = vmatpush1.xpose.msra.mxu0 %v508
        %510 = vmatprep.subr.mxu0 0.0
        %511 = vmatpush1.xpose.msra.mxu0 0.0
        %512 = vmatprep.subr.mxu0 0.0
        %513 = vmatpush1.xpose.msra.mxu0 0.0
        %514 = vmatprep.subr.mxu0 0.0
        %515 = vmatpush1.xpose.msra.mxu0 0.0
        %516 = vmatprep.subr.mxu0 0.0
        %517 = vmatpush1.xpose.msra.mxu0 0.0
        %518 = vmatprep.subr.mxu0 0.0
        %519 = vmatpush1.xpose.msra.mxu0 0.0
        %520 = vmatprep.subr.mxu0 0.0
        %521 = vmatpush1.xpose.msra.mxu0 0.0
        %522 = vmatprep.subr.mxu0 0.0
        %523 = vmatpush1.xpose.msra.mxu0 0.0
        %524 = vmatprep.subr.mxu0 0.0
        %525 = vmatpush1.xpose.msra.mxu0 0.0
        %526 = vmatprep.subr.mxu0 0.0
        %527 = vmatpush1.xpose.msra.mxu0 0.0
        %528 = vmatprep.subr.mxu0 0.0
        %529 = vmatpush1.xpose.msra.mxu0 0.0
        %530 = vmatprep.subr.mxu0 0.0
        %531 = vmatpush1.xpose.msra.mxu0 0.0
        %532 = vmatprep.subr.mxu0 0.0
        %533 = vmatpush1.xpose.msra.mxu0 0.0
        %534 = vmatprep.subr.mxu0 0.0
        %535 = vmatpush1.xpose.msra.mxu0 0.0
        %536 = vmatprep.subr.mxu0 0.0
        %537 = vmatpush1.xpose.msra.mxu0 0.0
        %538 = vmatprep.subr.mxu0 0.0
        %539 = vmatpush1.xpose.msra.mxu0 0.0
        %540 = vmatprep.subr.mxu0 0.0
        %541 = vmatpush1.xpose.msra.mxu0 0.0
        %542 = vmatprep.subr.mxu0 0.0
        %543 = vmatpush1.xpose.msra.mxu0 0.0
        %544 = vmatprep.subr.mxu0 0.0
        %545 = vmatpush1.xpose.msra.mxu0 0.0
        %546 = vmatprep.subr.mxu0 0.0
        %547 = vmatpush1.xpose.msra.mxu0 0.0
        %548 = vmatprep.subr.mxu0 0.0
        %549 = vmatpush1.xpose.msra.mxu0 0.0
        %550 = vmatprep.subr.mxu0 0.0
        %551 = vmatpush1.xpose.msra.mxu0 0.0
        %552 = vmatprep.subr.mxu0 0.0
        %553 = vmatpush1.xpose.msra.mxu0 0.0
        %554 = vmatprep.subr.mxu0 0.0
        %555 = vmatpush1.xpose.msra.mxu0 0.0
        %556 = vmatprep.subr.mxu0 0.0
        %557 = vmatpush1.xpose.msra.mxu0 0.0
        %558 = vmatprep.subr.mxu0 0.0
        %559 = vmatpush1.xpose.msra.mxu0 0.0
        %560 = vmatprep.subr.mxu0 0.0
        %561 = vmatpush1.xpose.msra.mxu0 0.0
        %562 = vmatprep.subr.mxu0 0.0
        %563 = vmatpush1.xpose.msra.mxu0 0.0
        %564 = vmatprep.subr.mxu0 0.0
        %565 = vmatpush1.xpose.msra.mxu0 0.0
        %566 = vmatprep.subr.mxu0 0.0
        %567 = vmatpush1.xpose.msra.mxu0 0.0
        %568 = vmatprep.subr.mxu0 0.0
        %569 = vmatpush1.xpose.msra.mxu0 0.0
        %570 = vmatprep.subr.mxu0 0.0
        %571 = vmatpush1.xpose.msra.mxu0 0.0
        %572 = vmatprep.mubr.f32.mxu0 0.0
        %v573 = vand.u32 %v276, 4294901760
        %v574 = vsub.f32 %v276, %v573
        %v575 = vand.u32 %v574, 4294901760
        %576 = vmatmul.mubr.f32.gmra.mrb[0].mxu0 %v575
        %v577 = vpop.f32.mrb[0].mxu0
        %v578 = vadd.f32 %v504, %v577
        %v579 = vpop.f32.mrb[0].mxu0
        %580 = vdwg.mxu0
        %581 = vmatprep.subr.mxu0 0.0
        %v582 = vand.u32 %v279, 4294901760
        %v583 = vsub.f32 %v279, %v582
        %v584 = vand.u32 %v583, 4294901760
        %585 = vmatpush1.xpose.msra.mxu0 %v584
        %586 = vmatprep.subr.mxu0 0.0
        %587 = vmatpush1.xpose.msra.mxu0 0.0
        %588 = vmatprep.subr.mxu0 0.0
        %589 = vmatpush1.xpose.msra.mxu0 0.0
        %590 = vmatprep.subr.mxu0 0.0
        %591 = vmatpush1.xpose.msra.mxu0 0.0
        %592 = vmatprep.subr.mxu0 0.0
        %593 = vmatpush1.xpose.msra.mxu0 0.0
        %594 = vmatprep.subr.mxu0 0.0
        %595 = vmatpush1.xpose.msra.mxu0 0.0
        %596 = vmatprep.subr.mxu0 0.0
        %597 = vmatpush1.xpose.msra.mxu0 0.0
        %598 = vmatprep.subr.mxu0 0.0
        %599 = vmatpush1.xpose.msra.mxu0 0.0
        %600 = vmatprep.subr.mxu0 0.0
        %601 = vmatpush1.xpose.msra.mxu0 0.0
        %602 = vmatprep.subr.mxu0 0.0
        %603 = vmatpush1.xpose.msra.mxu0 0.0
        %604 = vmatprep.subr.mxu0 0.0
        %605 = vmatpush1.xpose.msra.mxu0 0.0
        %606 = vmatprep.subr.mxu0 0.0
        %607 = vmatpush1.xpose.msra.mxu0 0.0
        %608 = vmatprep.subr.mxu0 0.0
        %609 = vmatpush1.xpose.msra.mxu0 0.0
        %610 = vmatprep.subr.mxu0 0.0
        %611 = vmatpush1.xpose.msra.mxu0 0.0
        %612 = vmatprep.subr.mxu0 0.0
        %613 = vmatpush1.xpose.msra.mxu0 0.0
        %614 = vmatprep.subr.mxu0 0.0
        %615 = vmatpush1.xpose.msra.mxu0 0.0
        %616 = vmatprep.subr.mxu0 0.0
        %617 = vmatpush1.xpose.msra.mxu0 0.0
        %618 = vmatprep.subr.mxu0 0.0
        %619 = vmatpush1.xpose.msra.mxu0 0.0
        %620 = vmatprep.subr.mxu0 0.0
        %621 = vmatpush1.xpose.msra.mxu0 0.0
        %622 = vmatprep.subr.mxu0 0.0
        %623 = vmatpush1.xpose.msra.mxu0 0.0
        %624 = vmatprep.subr.mxu0 0.0
        %625 = vmatpush1.xpose.msra.mxu0 0.0
        %626 = vmatprep.subr.mxu0 0.0
        %627 = vmatpush1.xpose.msra.mxu0 0.0
        %628 = vmatprep.subr.mxu0 0.0
        %629 = vmatpush1.xpose.msra.mxu0 0.0
        %630 = vmatprep.subr.mxu0 0.0
        %631 = vmatpush1.xpose.msra.mxu0 0.0
        %632 = vmatprep.subr.mxu0 0.0
        %633 = vmatpush1.xpose.msra.mxu0 0.0
        %634 = vmatprep.subr.mxu0 0.0
        %635 = vmatpush1.xpose.msra.mxu0 0.0
        %636 = vmatprep.subr.mxu0 0.0
        %637 = vmatpush1.xpose.msra.mxu0 0.0
        %638 = vmatprep.subr.mxu0 0.0
        %639 = vmatpush1.xpose.msra.mxu0 0.0
        %640 = vmatprep.subr.mxu0 0.0
        %641 = vmatpush1.xpose.msra.mxu0 0.0
        %642 = vmatprep.subr.mxu0 0.0
        %643 = vmatpush1.xpose.msra.mxu0 0.0
        %644 = vmatprep.subr.mxu0 0.0
        %645 = vmatpush1.xpose.msra.mxu0 0.0
        %646 = vmatprep.subr.mxu0 0.0
        %647 = vmatpush1.xpose.msra.mxu0 0.0
        %648 = vmatprep.mubr.f32.mxu0 0.0
        %v649 = vand.u32 %v276, 4294901760
        %650 = vmatmul.mubr.f32.gmra.mrb[0].mxu0 %v649
        %v651 = vpop.f32.mrb[0].mxu0
        %v652 = vadd.f32 %v578, %v651
        %v653 = vpop.f32.mrb[0].mxu0
        %654 = vdwg.mxu0
        %655 = vmatprep.subr.mxu0 0.0
        %v656 = vand.u32 %v279, 4294901760
        %657 = vmatpush1.xpose.msra.mxu0 %v656
        %658 = vmatprep.subr.mxu0 0.0
        %659 = vmatpush1.xpose.msra.mxu0 0.0
        %660 = vmatprep.subr.mxu0 0.0
        %661 = vmatpush1.xpose.msra.mxu0 0.0
        %662 = vmatprep.subr.mxu0 0.0
        %663 = vmatpush1.xpose.msra.mxu0 0.0
        %664 = vmatprep.subr.mxu0 0.0
        %665 = vmatpush1.xpose.msra.mxu0 0.0
        %666 = vmatprep.subr.mxu0 0.0
        %667 = vmatpush1.xpose.msra.mxu0 0.0
        %668 = vmatprep.subr.mxu0 0.0
        %669 = vmatpush1.xpose.msra.mxu0 0.0
        %670 = vmatprep.subr.mxu0 0.0
        %671 = vmatpush1.xpose.msra.mxu0 0.0
        %672 = vmatprep.subr.mxu0 0.0
        %673 = vmatpush1.xpose.msra.mxu0 0.0
        %674 = vmatprep.subr.mxu0 0.0
        %675 = vmatpush1.xpose.msra.mxu0 0.0
        %676 = vmatprep.subr.mxu0 0.0
        %677 = vmatpush1.xpose.msra.mxu0 0.0
        %678 = vmatprep.subr.mxu0 0.0
        %679 = vmatpush1.xpose.msra.mxu0 0.0
        %680 = vmatprep.subr.mxu0 0.0
        %681 = vmatpush1.xpose.msra.mxu0 0.0
        %682 = vmatprep.subr.mxu0 0.0
        %683 = vmatpush1.xpose.msra.mxu0 0.0
        %684 = vmatprep.subr.mxu0 0.0
        %685 = vmatpush1.xpose.msra.mxu0 0.0
        %686 = vmatprep.subr.mxu0 0.0
        %687 = vmatpush1.xpose.msra.mxu0 0.0
        %688 = vmatprep.subr.mxu0 0.0
        %689 = vmatpush1.xpose.msra.mxu0 0.0
        %690 = vmatprep.subr.mxu0 0.0
        %691 = vmatpush1.xpose.msra.mxu0 0.0
        %692 = vmatprep.subr.mxu0 0.0
        %693 = vmatpush1.xpose.msra.mxu0 0.0
        %694 = vmatprep.subr.mxu0 0.0
        %695 = vmatpush1.xpose.msra.mxu0 0.0
        %696 = vmatprep.subr.mxu0 0.0
        %697 = vmatpush1.xpose.msra.mxu0 0.0
        %698 = vmatprep.subr.mxu0 0.0
        %699 = vmatpush1.xpose.msra.mxu0 0.0
        %700 = vmatprep.subr.mxu0 0.0
        %701 = vmatpush1.xpose.msra.mxu0 0.0
        %702 = vmatprep.subr.mxu0 0.0
        %703 = vmatpush1.xpose.msra.mxu0 0.0
        %704 = vmatprep.subr.mxu0 0.0
        %705 = vmatpush1.xpose.msra.mxu0 0.0
        %706 = vmatprep.subr.mxu0 0.0
        %707 = vmatpush1.xpose.msra.mxu0 0.0
        %708 = vmatprep.subr.mxu0 0.0
        %709 = vmatpush1.xpose.msra.mxu0 0.0
        %710 = vmatprep.subr.mxu0 0.0
        %711 = vmatpush1.xpose.msra.mxu0 0.0
        %712 = vmatprep.subr.mxu0 0.0
        %713 = vmatpush1.xpose.msra.mxu0 0.0
        %714 = vmatprep.subr.mxu0 0.0
        %715 = vmatpush1.xpose.msra.mxu0 0.0
        %716 = vmatprep.subr.mxu0 0.0
        %717 = vmatpush1.xpose.msra.mxu0 0.0
        %718 = vmatprep.subr.mxu0 0.0
        %719 = vmatpush1.xpose.msra.mxu0 0.0
        %720 = vmatprep.mubr.f32.mxu0 0.0
        %v721 = vand.u32 %v276, 4294901760
        %722 = vmatmul.mubr.f32.gmra.mrb[0].mxu0 %v721
        %v723 = vpop.f32.mrb[0].mxu0
        %v724 = vadd.f32 %v652, %v723
        %v725 = vpop.f32.mrb[0].mxu0
        %726 = vdwg.mxu0
        %v728 = vsel %vm274, %v267, 0
        %v731 = vsel %vm274, %v271, 0
        %733 = vmatprep.subr.mxu0 0.0
        %v734 = vand.u32 %v731, 4294901760
        %735 = vmatpush1.xpose.msra.mxu0 %v734
        %736 = vmatprep.subr.mxu0 0.0
        %737 = vmatpush1.xpose.msra.mxu0 0.0
        %738 = vmatprep.subr.mxu0 0.0
        %739 = vmatpush1.xpose.msra.mxu0 0.0
        %740 = vmatprep.subr.mxu0 0.0
        %741 = vmatpush1.xpose.msra.mxu0 0.0
        %742 = vmatprep.subr.mxu0 0.0
        %743 = vmatpush1.xpose.msra.mxu0 0.0
        %744 = vmatprep.subr.mxu0 0.0
        %745 = vmatpush1.xpose.msra.mxu0 0.0
        %746 = vmatprep.subr.mxu0 0.0
        %747 = vmatpush1.xpose.msra.mxu0 0.0
        %748 = vmatprep.subr.mxu0 0.0
        %749 = vmatpush1.xpose.msra.mxu0 0.0
        %750 = vmatprep.subr.mxu0 0.0
        %751 = vmatpush1.xpose.msra.mxu0 0.0
        %752 = vmatprep.subr.mxu0 0.0
        %753 = vmatpush1.xpose.msra.mxu0 0.0
        %754 = vmatprep.subr.mxu0 0.0
        %755 = vmatpush1.xpose.msra.mxu0 0.0
        %756 = vmatprep.subr.mxu0 0.0
        %757 = vmatpush1.xpose.msra.mxu0 0.0
        %758 = vmatprep.subr.mxu0 0.0
        %759 = vmatpush1.xpose.msra.mxu0 0.0
        %760 = vmatprep.subr.mxu0 0.0
        %761 = vmatpush1.xpose.msra.mxu0 0.0
        %762 = vmatprep.subr.mxu0 0.0
        %763 = vmatpush1.xpose.msra.mxu0 0.0
        %764 = vmatprep.subr.mxu0 0.0
        %765 = vmatpush1.xpose.msra.mxu0 0.0
        %766 = vmatprep.subr.mxu0 0.0
        %767 = vmatpush1.xpose.msra.mxu0 0.0
        %768 = vmatprep.subr.mxu0 0.0
        %769 = vmatpush1.xpose.msra.mxu0 0.0
        %770 = vmatprep.subr.mxu0 0.0
        %771 = vmatpush1.xpose.msra.mxu0 0.0
        %772 = vmatprep.subr.mxu0 0.0
        %773 = vmatpush1.xpose.msra.mxu0 0.0
        %774 = vmatprep.subr.mxu0 0.0
        %775 = vmatpush1.xpose.msra.mxu0 0.0
        %776 = vmatprep.subr.mxu0 0.0
        %777 = vmatpush1.xpose.msra.mxu0 0.0
        %778 = vmatprep.subr.mxu0 0.0
        %779 = vmatpush1.xpose.msra.mxu0 0.0
        %780 = vmatprep.subr.mxu0 0.0
        %781 = vmatpush1.xpose.msra.mxu0 0.0
        %782 = vmatprep.subr.mxu0 0.0
        %783 = vmatpush1.xpose.msra.mxu0 0.0
        %784 = vmatprep.subr.mxu0 0.0
        %785 = vmatpush1.xpose.msra.mxu0 0.0
        %786 = vmatprep.subr.mxu0 0.0
        %787 = vmatpush1.xpose.msra.mxu0 0.0
        %788 = vmatprep.subr.mxu0 0.0
        %789 = vmatpush1.xpose.msra.mxu0 0.0
        %790 = vmatprep.subr.mxu0 0.0
        %791 = vmatpush1.xpose.msra.mxu0 0.0
        %792 = vmatprep.subr.mxu0 0.0
        %793 = vmatpush1.xpose.msra.mxu0 0.0
        %794 = vmatprep.subr.mxu0 0.0
        %795 = vmatpush1.xpose.msra.mxu0 0.0
        %796 = vmatprep.subr.mxu0 0.0
        %797 = vmatpush1.xpose.msra.mxu0 0.0
        %798 = vmatprep.mubr.f32.mxu0 0.0
        %v799 = vand.u32 %v728, 4294901760
        %v800 = vsub.f32 %v728, %v799
        %v801 = vand.u32 %v800, 4294901760
        %v802 = vsub.f32 %v800, %v801
        %v803 = vand.u32 %v802, 4294901760
        %804 = vmatmul.mubr.f32.gmra.mrb[0].mxu0 %v803
        %v805 = vpop.f32.mrb[0].mxu0
        %v806 = vadd.f32 0.0, %v805
        %v807 = vpop.f32.mrb[0].mxu0
        %808 = vdwg.mxu0
        %809 = vmatprep.subr.mxu0 0.0
        %v810 = vand.u32 %v731, 4294901760
        %v811 = vsub.f32 %v731, %v810
        %v812 = vand.u32 %v811, 4294901760
        %v813 = vsub.f32 %v811, %v812
        %v814 = vand.u32 %v813, 4294901760
        %815 = vmatpush1.xpose.msra.mxu0 %v814
        %816 = vmatprep.subr.mxu0 0.0
        %817 = vmatpush1.xpose.msra.mxu0 0.0
        %818 = vmatprep.subr.mxu0 0.0
        %819 = vmatpush1.xpose.msra.mxu0 0.0
        %820 = vmatprep.subr.mxu0 0.0
        %821 = vmatpush1.xpose.msra.mxu0 0.0
        %822 = vmatprep.subr.mxu0 0.0
        %823 = vmatpush1.xpose.msra.mxu0 0.0
        %824 = vmatprep.subr.mxu0 0.0
        %825 = vmatpush1.xpose.msra.mxu0 0.0
        %826 = vmatprep.subr.mxu0 0.0
        %827 = vmatpush1.xpose.msra.mxu0 0.0
        %828 = vmatprep.subr.mxu0 0.0
        %829 = vmatpush1.xpose.msra.mxu0 0.0
        %830 = vmatprep.subr.mxu0 0.0
        %831 = vmatpush1.xpose.msra.mxu0 0.0
        %832 = vmatprep.subr.mxu0 0.0
        %833 = vmatpush1.xpose.msra.mxu0 0.0
        %834 = vmatprep.subr.mxu0 0.0
        %835 = vmatpush1.xpose.msra.mxu0 0.0
        %836 = vmatprep.subr.mxu0 0.0
        %837 = vmatpush1.xpose.msra.mxu0 0.0
        %838 = vmatprep.subr.mxu0 0.0
        %839 = vmatpush1.xpose.msra.mxu0 0.0
        %840 = vmatprep.subr.mxu0 0.0
        %841 = vmatpush1.xpose.msra.mxu0 0.0
        %842 = vmatprep.subr.mxu0 0.0
        %843 = vmatpush1.xpose.msra.mxu0 0.0
        %844 = vmatprep.subr.mxu0 0.0
        %845 = vmatpush1.xpose.msra.mxu0 0.0
        %846 = vmatprep.subr.mxu0 0.0
        %847 = vmatpush1.xpose.msra.mxu0 0.0
        %848 = vmatprep.subr.mxu0 0.0
        %849 = vmatpush1.xpose.msra.mxu0 0.0
        %850 = vmatprep.subr.mxu0 0.0
        %851 = vmatpush1.xpose.msra.mxu0 0.0
        %852 = vmatprep.subr.mxu0 0.0
        %853 = vmatpush1.xpose.msra.mxu0 0.0
        %854 = vmatprep.subr.mxu0 0.0
        %855 = vmatpush1.xpose.msra.mxu0 0.0
        %856 = vmatprep.subr.mxu0 0.0
        %857 = vmatpush1.xpose.msra.mxu0 0.0
        %858 = vmatprep.subr.mxu0 0.0
        %859 = vmatpush1.xpose.msra.mxu0 0.0
        %860 = vmatprep.subr.mxu0 0.0
        %861 = vmatpush1.xpose.msra.mxu0 0.0
        %862 = vmatprep.subr.mxu0 0.0
        %863 = vmatpush1.xpose.msra.mxu0 0.0
        %864 = vmatprep.subr.mxu0 0.0
        %865 = vmatpush1.xpose.msra.mxu0 0.0
        %866 = vmatprep.subr.mxu0 0.0
        %867 = vmatpush1.xpose.msra.mxu0 0.0
        %868 = vmatprep.subr.mxu0 0.0
        %869 = vmatpush1.xpose.msra.mxu0 0.0
        %870 = vmatprep.subr.mxu0 0.0
        %871 = vmatpush1.xpose.msra.mxu0 0.0
        %872 = vmatprep.subr.mxu0 0.0
        %873 = vmatpush1.xpose.msra.mxu0 0.0
        %874 = vmatprep.subr.mxu0 0.0
        %875 = vmatpush1.xpose.msra.mxu0 0.0
        %876 = vmatprep.subr.mxu0 0.0
        %877 = vmatpush1.xpose.msra.mxu0 0.0
        %878 = vmatprep.mubr.f32.mxu0 0.0
        %v879 = vand.u32 %v728, 4294901760
        %880 = vmatmul.mubr.f32.gmra.mrb[0].mxu0 %v879
        %v881 = vpop.f32.mrb[0].mxu0
        %v882 = vadd.f32 %v806, %v881
        %v883 = vpop.f32.mrb[0].mxu0
        %884 = vdwg.mxu0
        %885 = vmatprep.subr.mxu0 0.0
        %v886 = vand.u32 %v731, 4294901760
        %v887 = vsub.f32 %v731, %v886
        %888 = vmatpush1.xpose.msra.mxu0 %v887
        %889 = vmatprep.subr.mxu0 0.0
        %890 = vmatpush1.xpose.msra.mxu0 0.0
        %891 = vmatprep.subr.mxu0 0.0
        %892 = vmatpush1.xpose.msra.mxu0 0.0
        %893 = vmatprep.subr.mxu0 0.0
        %894 = vmatpush1.xpose.msra.mxu0 0.0
        %895 = vmatprep.subr.mxu0 0.0
        %896 = vmatpush1.xpose.msra.mxu0 0.0
        %897 = vmatprep.subr.mxu0 0.0
        %898 = vmatpush1.xpose.msra.mxu0 0.0
        %899 = vmatprep.subr.mxu0 0.0
        %900 = vmatpush1.xpose.msra.mxu0 0.0
        %901 = vmatprep.subr.mxu0 0.0
        %902 = vmatpush1.xpose.msra.mxu0 0.0
        %903 = vmatprep.subr.mxu0 0.0
        %904 = vmatpush1.xpose.msra.mxu0 0.0
        %905 = vmatprep.subr.mxu0 0.0
        %906 = vmatpush1.xpose.msra.mxu0 0.0
        %907 = vmatprep.subr.mxu0 0.0
        %908 = vmatpush1.xpose.msra.mxu0 0.0
        %909 = vmatprep.subr.mxu0 0.0
        %910 = vmatpush1.xpose.msra.mxu0 0.0
        %911 = vmatprep.subr.mxu0 0.0
        %912 = vmatpush1.xpose.msra.mxu0 0.0
        %913 = vmatprep.subr.mxu0 0.0
        %914 = vmatpush1.xpose.msra.mxu0 0.0
        %915 = vmatprep.subr.mxu0 0.0
        %916 = vmatpush1.xpose.msra.mxu0 0.0
        %917 = vmatprep.subr.mxu0 0.0
        %918 = vmatpush1.xpose.msra.mxu0 0.0
        %919 = vmatprep.subr.mxu0 0.0
        %920 = vmatpush1.xpose.msra.mxu0 0.0
        %921 = vmatprep.subr.mxu0 0.0
        %922 = vmatpush1.xpose.msra.mxu0 0.0
        %923 = vmatprep.subr.mxu0 0.0
        %924 = vmatpush1.xpose.msra.mxu0 0.0
        %925 = vmatprep.subr.mxu0 0.0
        %926 = vmatpush1.xpose.msra.mxu0 0.0
        %927 = vmatprep.subr.mxu0 0.0
        %928 = vmatpush1.xpose.msra.mxu0 0.0
        %929 = vmatprep.subr.mxu0 0.0
        %930 = vmatpush1.xpose.msra.mxu0 0.0
        %931 = vmatprep.subr.mxu0 0.0
        %932 = vmatpush1.xpose.msra.mxu0 0.0
        %933 = vmatprep.subr.mxu0 0.0
        %934 = vmatpush1.xpose.msra.mxu0 0.0
        %935 = vmatprep.subr.mxu0 0.0
        %936 = vmatpush1.xpose.msra.mxu0 0.0
        %937 = vmatprep.subr.mxu0 0.0
        %938 = vmatpush1.xpose.msra.mxu0 0.0
        %939 = vmatprep.subr.mxu0 0.0
        %940 = vmatpush1.xpose.msra.mxu0 0.0
        %941 = vmatprep.subr.mxu0 0.0
        %942 = vmatpush1.xpose.msra.mxu0 0.0
        %943 = vmatprep.subr.mxu0 0.0
        %944 = vmatpush1.xpose.msra.mxu0 0.0
        %945 = vmatprep.subr.mxu0 0.0
        %946 = vmatpush1.xpose.msra.mxu0 0.0
        %947 = vmatprep.subr.mxu0 0.0
        %948 = vmatpush1.xpose.msra.mxu0 0.0
        %949 = vmatprep.subr.mxu0 0.0
        %950 = vmatpush1.xpose.msra.mxu0 0.0
        %951 = vmatprep.mubr.f32.mxu0 0.0
        %v952 = vand.u32 %v728, 4294901760
        %v953 = vsub.f32 %v728, %v952
        %954 = vmatmul.mubr.f32.gmra.mrb[0].mxu0 %v953
        %v955 = vpop.f32.mrb[0].mxu0
        %v956 = vadd.f32 %v882, %v955
        %v957 = vpop.f32.mrb[0].mxu0
        %958 = vdwg.mxu0
        %959 = vmatprep.subr.mxu0 0.0
        %v960 = vand.u32 %v731, 4294901760
        %961 = vmatpush1.xpose.msra.mxu0 %v960
        %962 = vmatprep.subr.mxu0 0.0
        %963 = vmatpush1.xpose.msra.mxu0 0.0
        %964 = vmatprep.subr.mxu0 0.0
        %965 = vmatpush1.xpose.msra.mxu0 0.0
        %966 = vmatprep.subr.mxu0 0.0
        %967 = vmatpush1.xpose.msra.mxu0 0.0
        %968 = vmatprep.subr.mxu0 0.0
        %969 = vmatpush1.xpose.msra.mxu0 0.0
        %970 = vmatprep.subr.mxu0 0.0
        %971 = vmatpush1.xpose.msra.mxu0 0.0
        %972 = vmatprep.subr.mxu0 0.0
        %973 = vmatpush1.xpose.msra.mxu0 0.0
        %974 = vmatprep.subr.mxu0 0.0
        %975 = vmatpush1.xpose.msra.mxu0 0.0
        %976 = vmatprep.subr.mxu0 0.0
        %977 = vmatpush1.xpose.msra.mxu0 0.0
        %978 = vmatprep.subr.mxu0 0.0
        %979 = vmatpush1.xpose.msra.mxu0 0.0
        %980 = vmatprep.subr.mxu0 0.0
        %981 = vmatpush1.xpose.msra.mxu0 0.0
        %982 = vmatprep.subr.mxu0 0.0
        %983 = vmatpush1.xpose.msra.mxu0 0.0
        %984 = vmatprep.subr.mxu0 0.0
        %985 = vmatpush1.xpose.msra.mxu0 0.0
        %986 = vmatprep.subr.mxu0 0.0
        %987 = vmatpush1.xpose.msra.mxu0 0.0
        %988 = vmatprep.subr.mxu0 0.0
        %989 = vmatpush1.xpose.msra.mxu0 0.0
        %990 = vmatprep.subr.mxu0 0.0
        %991 = vmatpush1.xpose.msra.mxu0 0.0
        %992 = vmatprep.subr.mxu0 0.0
        %993 = vmatpush1.xpose.msra.mxu0 0.0
        %994 = vmatprep.subr.mxu0 0.0
        %995 = vmatpush1.xpose.msra.mxu0 0.0
        %996 = vmatprep.subr.mxu0 0.0
        %997 = vmatpush1.xpose.msra.mxu0 0.0
        %998 = vmatprep.subr.mxu0 0.0
        %999 = vmatpush1.xpose.msra.mxu0 0.0
        %1000 = vmatprep.subr.mxu0 0.0
        %1001 = vmatpush1.xpose.msra.mxu0 0.0
        %1002 = vmatprep.subr.mxu0 0.0
        %1003 = vmatpush1.xpose.msra.mxu0 0.0
        %1004 = vmatprep.subr.mxu0 0.0
        %1005 = vmatpush1.xpose.msra.mxu0 0.0
        %1006 = vmatprep.subr.mxu0 0.0
        %1007 = vmatpush1.xpose.msra.mxu0 0.0
        %1008 = vmatprep.subr.mxu0 0.0
        %1009 = vmatpush1.xpose.msra.mxu0 0.0
        %1010 = vmatprep.subr.mxu0 0.0
        %1011 = vmatpush1.xpose.msra.mxu0 0.0
        %1012 = vmatprep.subr.mxu0 0.0
        %1013 = vmatpush1.xpose.msra.mxu0 0.0
        %1014 = vmatprep.subr.mxu0 0.0
        %1015 = vmatpush1.xpose.msra.mxu0 0.0
        %1016 = vmatprep.subr.mxu0 0.0
        %1017 = vmatpush1.xpose.msra.mxu0 0.0
        %1018 = vmatprep.subr.mxu0 0.0
        %1019 = vmatpush1.xpose.msra.mxu0 0.0
        %1020 = vmatprep.subr.mxu0 0.0
        %1021 = vmatpush1.xpose.msra.mxu0 0.0
        %1022 = vmatprep.subr.mxu0 0.0
        %1023 = vmatpush1.xpose.msra.mxu0 0.0
        %1024 = vmatprep.mubr.f32.mxu0 0.0
        %v1025 = vand.u32 %v728, 4294901760
        %v1026 = vsub.f32 %v728, %v1025
        %v1027 = vand.u32 %v1026, 4294901760
        %1028 = vmatmul.mubr.f32.gmra.mrb[0].mxu0 %v1027
        %v1029 = vpop.f32.mrb[0].mxu0
        %v1030 = vadd.f32 %v956, %v1029
        %v1031 = vpop.f32.mrb[0].mxu0
        %1032 = vdwg.mxu0
        %1033 = vmatprep.subr.mxu0 0.0
        %v1034 = vand.u32 %v731, 4294901760
        %v1035 = vsub.f32 %v731, %v1034
        %v1036 = vand.u32 %v1035, 4294901760
        %1037 = vmatpush1.xpose.msra.mxu0 %v1036
        %1038 = vmatprep.subr.mxu0 0.0
        %1039 = vmatpush1.xpose.msra.mxu0 0.0
        %1040 = vmatprep.subr.mxu0 0.0
        %1041 = vmatpush1.xpose.msra.mxu0 0.0
        %1042 = vmatprep.subr.mxu0 0.0
        %1043 = vmatpush1.xpose.msra.mxu0 0.0
        %1044 = vmatprep.subr.mxu0 0.0
        %1045 = vmatpush1.xpose.msra.mxu0 0.0
        %1046 = vmatprep.subr.mxu0 0.0
        %1047 = vmatpush1.xpose.msra.mxu0 0.0
        %1048 = vmatprep.subr.mxu0 0.0
        %1049 = vmatpush1.xpose.msra.mxu0 0.0
        %1050 = vmatprep.subr.mxu0 0.0
        %1051 = vmatpush1.xpose.msra.mxu0 0.0
        %1052 = vmatprep.subr.mxu0 0.0
        %1053 = vmatpush1.xpose.msra.mxu0 0.0
        %1054 = vmatprep.subr.mxu0 0.0
        %1055 = vmatpush1.xpose.msra.mxu0 0.0
        %1056 = vmatprep.subr.mxu0 0.0
        %1057 = vmatpush1.xpose.msra.mxu0 0.0
        %1058 = vmatprep.subr.mxu0 0.0
        %1059 = vmatpush1.xpose.msra.mxu0 0.0
        %1060 = vmatprep.subr.mxu0 0.0
        %1061 = vmatpush1.xpose.msra.mxu0 0.0
        %1062 = vmatprep.subr.mxu0 0.0
        %1063 = vmatpush1.xpose.msra.mxu0 0.0
        %1064 = vmatprep.subr.mxu0 0.0
        %1065 = vmatpush1.xpose.msra.mxu0 0.0
        %1066 = vmatprep.subr.mxu0 0.0
        %1067 = vmatpush1.xpose.msra.mxu0 0.0
        %1068 = vmatprep.subr.mxu0 0.0
        %1069 = vmatpush1.xpose.msra.mxu0 0.0
        %1070 = vmatprep.subr.mxu0 0.0
        %1071 = vmatpush1.xpose.msra.mxu0 0.0
        %1072 = vmatprep.subr.mxu0 0.0
        %1073 = vmatpush1.xpose.msra.mxu0 0.0
        %1074 = vmatprep.subr.mxu0 0.0
        %1075 = vmatpush1.xpose.msra.mxu0 0.0
        %1076 = vmatprep.subr.mxu0 0.0
        %1077 = vmatpush1.xpose.msra.mxu0 0.0
        %1078 = vmatprep.subr.mxu0 0.0
        %1079 = vmatpush1.xpose.msra.mxu0 0.0
        %1080 = vmatprep.subr.mxu0 0.0
        %1081 = vmatpush1.xpose.msra.mxu0 0.0
        %1082 = vmatprep.subr.mxu0 0.0
        %1083 = vmatpush1.xpose.msra.mxu0 0.0
        %1084 = vmatprep.subr.mxu0 0.0
        %1085 = vmatpush1.xpose.msra.mxu0 0.0
        %1086 = vmatprep.subr.mxu0 0.0
        %1087 = vmatpush1.xpose.msra.mxu0 0.0
        %1088 = vmatprep.subr.mxu0 0.0
        %1089 = vmatpush1.xpose.msra.mxu0 0.0
        %1090 = vmatprep.subr.mxu0 0.0
        %1091 = vmatpush1.xpose.msra.mxu0 0.0
        %1092 = vmatprep.subr.mxu0 0.0
        %1093 = vmatpush1.xpose.msra.mxu0 0.0
        %1094 = vmatprep.subr.mxu0 0.0
        %1095 = vmatpush1.xpose.msra.mxu0 0.0
        %1096 = vmatprep.subr.mxu0 0.0
        %1097 = vmatpush1.xpose.msra.mxu0 0.0
        %1098 = vmatprep.subr.mxu0 0.0
        %1099 = vmatpush1.xpose.msra.mxu0 0.0
        %1100 = vmatprep.mubr.f32.mxu0 0.0
        %v1101 = vand.u32 %v728, 4294901760
        %1102 = vmatmul.mubr.f32.gmra.mrb[0].mxu0 %v1101
        %v1103 = vpop.f32.mrb[0].mxu0
        %v1104 = vadd.f32 %v1030, %v1103
        %v1105 = vpop.f32.mrb[0].mxu0
        %1106 = vdwg.mxu0
        %1107 = vmatprep.subr.mxu0 0.0
        %v1108 = vand.u32 %v731, 4294901760
        %1109 = vmatpush1.xpose.msra.mxu0 %v1108
        %1110 = vmatprep.subr.mxu0 0.0
        %1111 = vmatpush1.xpose.msra.mxu0 0.0
        %1112 = vmatprep.subr.mxu0 0.0
        %1113 = vmatpush1.xpose.msra.mxu0 0.0
        %1114 = vmatprep.subr.mxu0 0.0
        %1115 = vmatpush1.xpose.msra.mxu0 0.0
        %1116 = vmatprep.subr.mxu0 0.0
        %1117 = vmatpush1.xpose.msra.mxu0 0.0
        %1118 = vmatprep.subr.mxu0 0.0
        %1119 = vmatpush1.xpose.msra.mxu0 0.0
        %1120 = vmatprep.subr.mxu0 0.0
        %1121 = vmatpush1.xpose.msra.mxu0 0.0
        %1122 = vmatprep.subr.mxu0 0.0
        %1123 = vmatpush1.xpose.msra.mxu0 0.0
        %1124 = vmatprep.subr.mxu0 0.0
        %1125 = vmatpush1.xpose.msra.mxu0 0.0
        %1126 = vmatprep.subr.mxu0 0.0
        %1127 = vmatpush1.xpose.msra.mxu0 0.0
        %1128 = vmatprep.subr.mxu0 0.0
        %1129 = vmatpush1.xpose.msra.mxu0 0.0
        %1130 = vmatprep.subr.mxu0 0.0
        %1131 = vmatpush1.xpose.msra.mxu0 0.0
        %1132 = vmatprep.subr.mxu0 0.0
        %1133 = vmatpush1.xpose.msra.mxu0 0.0
        %1134 = vmatprep.subr.mxu0 0.0
        %1135 = vmatpush1.xpose.msra.mxu0 0.0
        %1136 = vmatprep.subr.mxu0 0.0
        %1137 = vmatpush1.xpose.msra.mxu0 0.0
        %1138 = vmatprep.subr.mxu0 0.0
        %1139 = vmatpush1.xpose.msra.mxu0 0.0
        %1140 = vmatprep.subr.mxu0 0.0
        %1141 = vmatpush1.xpose.msra.mxu0 0.0
        %1142 = vmatprep.subr.mxu0 0.0
        %1143 = vmatpush1.xpose.msra.mxu0 0.0
        %1144 = vmatprep.subr.mxu0 0.0
        %1145 = vmatpush1.xpose.msra.mxu0 0.0
        %1146 = vmatprep.subr.mxu0 0.0
        %1147 = vmatpush1.xpose.msra.mxu0 0.0
        %1148 = vmatprep.subr.mxu0 0.0
        %1149 = vmatpush1.xpose.msra.mxu0 0.0
        %1150 = vmatprep.subr.mxu0 0.0
        %1151 = vmatpush1.xpose.msra.mxu0 0.0
        %1152 = vmatprep.subr.mxu0 0.0
        %1153 = vmatpush1.xpose.msra.mxu0 0.0
        %1154 = vmatprep.subr.mxu0 0.0
        %1155 = vmatpush1.xpose.msra.mxu0 0.0
        %1156 = vmatprep.subr.mxu0 0.0
        %1157 = vmatpush1.xpose.msra.mxu0 0.0
        %1158 = vmatprep.subr.mxu0 0.0
        %1159 = vmatpush1.xpose.msra.mxu0 0.0
        %1160 = vmatprep.subr.mxu0 0.0
        %1161 = vmatpush1.xpose.msra.mxu0 0.0
        %1162 = vmatprep.subr.mxu0 0.0
        %1163 = vmatpush1.xpose.msra.mxu0 0.0
        %1164 = vmatprep.subr.mxu0 0.0
        %1165 = vmatpush1.xpose.msra.mxu0 0.0
        %1166 = vmatprep.subr.mxu0 0.0
        %1167 = vmatpush1.xpose.msra.mxu0 0.0
        %1168 = vmatprep.subr.mxu0 0.0
        %1169 = vmatpush1.xpose.msra.mxu0 0.0
        %1170 = vmatprep.subr.mxu0 0.0
        %1171 = vmatpush1.xpose.msra.mxu0 0.0
        %1172 = vmatprep.mubr.f32.mxu0 0.0
        %v1173 = vand.u32 %v728, 4294901760
        %1174 = vmatmul.mubr.f32.gmra.mrb[0].mxu0 %v1173
        %v1175 = vpop.f32.mrb[0].mxu0
        %v1176 = vadd.f32 %v1104, %v1175
        %v1177 = vpop.f32.mrb[0].mxu0
        %1178 = vdwg.mxu0
        %v1180 = vsel %vm274, %v268, 0
        %v1183 = vsel %vm274, %v272, 0
        %1185 = vmatprep.subr.mxu0 0.0
        %v1186 = vand.u32 %v1183, 4294901760
        %1187 = vmatpush1.xpose.msra.mxu0 %v1186
        %1188 = vmatprep.subr.mxu0 0.0
        %1189 = vmatpush1.xpose.msra.mxu0 0.0
        %1190 = vmatprep.subr.mxu0 0.0
        %1191 = vmatpush1.xpose.msra.mxu0 0.0
        %1192 = vmatprep.subr.mxu0 0.0
        %1193 = vmatpush1.xpose.msra.mxu0 0.0
        %1194 = vmatprep.subr.mxu0 0.0
        %1195 = vmatpush1.xpose.msra.mxu0 0.0
        %1196 = vmatprep.subr.mxu0 0.0
        %1197 = vmatpush1.xpose.msra.mxu0 0.0
        %1198 = vmatprep.subr.mxu0 0.0
        %1199 = vmatpush1.xpose.msra.mxu0 0.0
        %1200 = vmatprep.subr.mxu0 0.0
        %1201 = vmatpush1.xpose.msra.mxu0 0.0
        %1202 = vmatprep.subr.mxu0 0.0
        %1203 = vmatpush1.xpose.msra.mxu0 0.0
        %1204 = vmatprep.subr.mxu0 0.0
        %1205 = vmatpush1.xpose.msra.mxu0 0.0
        %1206 = vmatprep.subr.mxu0 0.0
        %1207 = vmatpush1.xpose.msra.mxu0 0.0
        %1208 = vmatprep.subr.mxu0 0.0
        %1209 = vmatpush1.xpose.msra.mxu0 0.0
        %1210 = vmatprep.subr.mxu0 0.0
        %1211 = vmatpush1.xpose.msra.mxu0 0.0
        %1212 = vmatprep.subr.mxu0 0.0
        %1213 = vmatpush1.xpose.msra.mxu0 0.0
        %1214 = vmatprep.subr.mxu0 0.0
        %1215 = vmatpush1.xpose.msra.mxu0 0.0
        %1216 = vmatprep.subr.mxu0 0.0
        %1217 = vmatpush1.xpose.msra.mxu0 0.0
        %1218 = vmatprep.subr.mxu0 0.0
        %1219 = vmatpush1.xpose.msra.mxu0 0.0
        %1220 = vmatprep.subr.mxu0 0.0
        %1221 = vmatpush1.xpose.msra.mxu0 0.0
        %1222 = vmatprep.subr.mxu0 0.0
        %1223 = vmatpush1.xpose.msra.mxu0 0.0
        %1224 = vmatprep.subr.mxu0 0.0
        %1225 = vmatpush1.xpose.msra.mxu0 0.0
        %1226 = vmatprep.subr.mxu0 0.0
        %1227 = vmatpush1.xpose.msra.mxu0 0.0
        %1228 = vmatprep.subr.mxu0 0.0
        %1229 = vmatpush1.xpose.msra.mxu0 0.0
        %1230 = vmatprep.subr.mxu0 0.0
        %1231 = vmatpush1.xpose.msra.mxu0 0.0
        %1232 = vmatprep.subr.mxu0 0.0
        %1233 = vmatpush1.xpose.msra.mxu0 0.0
        %1234 = vmatprep.subr.mxu0 0.0
        %1235 = vmatpush1.xpose.msra.mxu0 0.0
        %1236 = vmatprep.subr.mxu0 0.0
        %1237 = vmatpush1.xpose.msra.mxu0 0.0
        %1238 = vmatprep.subr.mxu0 0.0
        %1239 = vmatpush1.xpose.msra.mxu0 0.0
        %1240 = vmatprep.subr.mxu0 0.0
        %1241 = vmatpush1.xpose.msra.mxu0 0.0
        %1242 = vmatprep.subr.mxu0 0.0
        %1243 = vmatpush1.xpose.msra.mxu0 0.0
        %1244 = vmatprep.subr.mxu0 0.0
        %1245 = vmatpush1.xpose.msra.mxu0 0.0
        %1246 = vmatprep.subr.mxu0 0.0
        %1247 = vmatpush1.xpose.msra.mxu0 0.0
        %1248 = vmatprep.subr.mxu0 0.0
        %1249 = vmatpush1.xpose.msra.mxu0 0.0
        %1250 = vmatprep.mubr.f32.mxu0 0.0
        %v1251 = vand.u32 %v1180, 4294901760
        %v1252 = vsub.f32 %v1180, %v1251
        %v1253 = vand.u32 %v1252, 4294901760
        %v1254 = vsub.f32 %v1252, %v1253
        %v1255 = vand.u32 %v1254, 4294901760
        %1256 = vmatmul.mubr.f32.gmra.mrb[0].mxu0 %v1255
        %v1257 = vpop.f32.mrb[0].mxu0
        %v1258 = vadd.f32 0.0, %v1257
        %v1259 = vpop.f32.mrb[0].mxu0
        %1260 = vdwg.mxu0
        %1261 = vmatprep.subr.mxu0 0.0
        %v1262 = vand.u32 %v1183, 4294901760
        %v1263 = vsub.f32 %v1183, %v1262
        %v1264 = vand.u32 %v1263, 4294901760
        %v1265 = vsub.f32 %v1263, %v1264
        %v1266 = vand.u32 %v1265, 4294901760
        %1267 = vmatpush1.xpose.msra.mxu0 %v1266
        %1268 = vmatprep.subr.mxu0 0.0
        %1269 = vmatpush1.xpose.msra.mxu0 0.0
        %1270 = vmatprep.subr.mxu0 0.0
        %1271 = vmatpush1.xpose.msra.mxu0 0.0
        %1272 = vmatprep.subr.mxu0 0.0
        %1273 = vmatpush1.xpose.msra.mxu0 0.0
        %1274 = vmatprep.subr.mxu0 0.0
        %1275 = vmatpush1.xpose.msra.mxu0 0.0
        %1276 = vmatprep.subr.mxu0 0.0
        %1277 = vmatpush1.xpose.msra.mxu0 0.0
        %1278 = vmatprep.subr.mxu0 0.0
        %1279 = vmatpush1.xpose.msra.mxu0 0.0
        %1280 = vmatprep.subr.mxu0 0.0
        %1281 = vmatpush1.xpose.msra.mxu0 0.0
        %1282 = vmatprep.subr.mxu0 0.0
        %1283 = vmatpush1.xpose.msra.mxu0 0.0
        %1284 = vmatprep.subr.mxu0 0.0
        %1285 = vmatpush1.xpose.msra.mxu0 0.0
        %1286 = vmatprep.subr.mxu0 0.0
        %1287 = vmatpush1.xpose.msra.mxu0 0.0
        %1288 = vmatprep.subr.mxu0 0.0
        %1289 = vmatpush1.xpose.msra.mxu0 0.0
        %1290 = vmatprep.subr.mxu0 0.0
        %1291 = vmatpush1.xpose.msra.mxu0 0.0
        %1292 = vmatprep.subr.mxu0 0.0
        %1293 = vmatpush1.xpose.msra.mxu0 0.0
        %1294 = vmatprep.subr.mxu0 0.0
        %1295 = vmatpush1.xpose.msra.mxu0 0.0
        %1296 = vmatprep.subr.mxu0 0.0
        %1297 = vmatpush1.xpose.msra.mxu0 0.0
        %1298 = vmatprep.subr.mxu0 0.0
        %1299 = vmatpush1.xpose.msra.mxu0 0.0
        %1300 = vmatprep.subr.mxu0 0.0
        %1301 = vmatpush1.xpose.msra.mxu0 0.0
        %1302 = vmatprep.subr.mxu0 0.0
        %1303 = vmatpush1.xpose.msra.mxu0 0.0
        %1304 = vmatprep.subr.mxu0 0.0
        %1305 = vmatpush1.xpose.msra.mxu0 0.0
        %1306 = vmatprep.subr.mxu0 0.0
        %1307 = vmatpush1.xpose.msra.mxu0 0.0
        %1308 = vmatprep.subr.mxu0 0.0
        %1309 = vmatpush1.xpose.msra.mxu0 0.0
        %1310 = vmatprep.subr.mxu0 0.0
        %1311 = vmatpush1.xpose.msra.mxu0 0.0
        %1312 = vmatprep.subr.mxu0 0.0
        %1313 = vmatpush1.xpose.msra.mxu0 0.0
        %1314 = vmatprep.subr.mxu0 0.0
        %1315 = vmatpush1.xpose.msra.mxu0 0.0
        %1316 = vmatprep.subr.mxu0 0.0
        %1317 = vmatpush1.xpose.msra.mxu0 0.0
        %1318 = vmatprep.subr.mxu0 0.0
        %1319 = vmatpush1.xpose.msra.mxu0 0.0
        %1320 = vmatprep.subr.mxu0 0.0
        %1321 = vmatpush1.xpose.msra.mxu0 0.0
        %1322 = vmatprep.subr.mxu0 0.0
        %1323 = vmatpush1.xpose.msra.mxu0 0.0
        %1324 = vmatprep.subr.mxu0 0.0
        %1325 = vmatpush1.xpose.msra.mxu0 0.0
        %1326 = vmatprep.subr.mxu0 0.0
        %1327 = vmatpush1.xpose.msra.mxu0 0.0
        %1328 = vmatprep.subr.mxu0 0.0
        %1329 = vmatpush1.xpose.msra.mxu0 0.0
        %1330 = vmatprep.mubr.f32.mxu0 0.0
        %v1331 = vand.u32 %v1180, 4294901760
        %1332 = vmatmul.mubr.f32.gmra.mrb[0].mxu0 %v1331
        %v1333 = vpop.f32.mrb[0].mxu0
        %v1334 = vadd.f32 %v1258, %v1333
        %v1335 = vpop.f32.mrb[0].mxu0
        %1336 = vdwg.mxu0
        %1337 = vmatprep.subr.mxu0 0.0
        %v1338 = vand.u32 %v1183, 4294901760
        %v1339 = vsub.f32 %v1183, %v1338
        %1340 = vmatpush1.xpose.msra.mxu0 %v1339
        %1341 = vmatprep.subr.mxu0 0.0
        %1342 = vmatpush1.xpose.msra.mxu0 0.0
        %1343 = vmatprep.subr.mxu0 0.0
        %1344 = vmatpush1.xpose.msra.mxu0 0.0
        %1345 = vmatprep.subr.mxu0 0.0
        %1346 = vmatpush1.xpose.msra.mxu0 0.0
        %1347 = vmatprep.subr.mxu0 0.0
        %1348 = vmatpush1.xpose.msra.mxu0 0.0
        %1349 = vmatprep.subr.mxu0 0.0
        %1350 = vmatpush1.xpose.msra.mxu0 0.0
        %1351 = vmatprep.subr.mxu0 0.0
        %1352 = vmatpush1.xpose.msra.mxu0 0.0
        %1353 = vmatprep.subr.mxu0 0.0
        %1354 = vmatpush1.xpose.msra.mxu0 0.0
        %1355 = vmatprep.subr.mxu0 0.0
        %1356 = vmatpush1.xpose.msra.mxu0 0.0
        %1357 = vmatprep.subr.mxu0 0.0
        %1358 = vmatpush1.xpose.msra.mxu0 0.0
        %1359 = vmatprep.subr.mxu0 0.0
        %1360 = vmatpush1.xpose.msra.mxu0 0.0
        %1361 = vmatprep.subr.mxu0 0.0
        %1362 = vmatpush1.xpose.msra.mxu0 0.0
        %1363 = vmatprep.subr.mxu0 0.0
        %1364 = vmatpush1.xpose.msra.mxu0 0.0
        %1365 = vmatprep.subr.mxu0 0.0
        %1366 = vmatpush1.xpose.msra.mxu0 0.0
        %1367 = vmatprep.subr.mxu0 0.0
        %1368 = vmatpush1.xpose.msra.mxu0 0.0
        %1369 = vmatprep.subr.mxu0 0.0
        %1370 = vmatpush1.xpose.msra.mxu0 0.0
        %1371 = vmatprep.subr.mxu0 0.0
        %1372 = vmatpush1.xpose.msra.mxu0 0.0
        %1373 = vmatprep.subr.mxu0 0.0
        %1374 = vmatpush1.xpose.msra.mxu0 0.0
        %1375 = vmatprep.subr.mxu0 0.0
        %1376 = vmatpush1.xpose.msra.mxu0 0.0
        %1377 = vmatprep.subr.mxu0 0.0
        %1378 = vmatpush1.xpose.msra.mxu0 0.0
        %1379 = vmatprep.subr.mxu0 0.0
        %1380 = vmatpush1.xpose.msra.mxu0 0.0
        %1381 = vmatprep.subr.mxu0 0.0
        %1382 = vmatpush1.xpose.msra.mxu0 0.0
        %1383 = vmatprep.subr.mxu0 0.0
        %1384 = vmatpush1.xpose.msra.mxu0 0.0
        %1385 = vmatprep.subr.mxu0 0.0
        %1386 = vmatpush1.xpose.msra.mxu0 0.0
        %1387 = vmatprep.subr.mxu0 0.0
        %1388 = vmatpush1.xpose.msra.mxu0 0.0
        %1389 = vmatprep.subr.mxu0 0.0
        %1390 = vmatpush1.xpose.msra.mxu0 0.0
        %1391 = vmatprep.subr.mxu0 0.0
        %1392 = vmatpush1.xpose.msra.mxu0 0.0
        %1393 = vmatprep.subr.mxu0 0.0
        %1394 = vmatpush1.xpose.msra.mxu0 0.0
        %1395 = vmatprep.subr.mxu0 0.0
        %1396 = vmatpush1.xpose.msra.mxu0 0.0
        %1397 = vmatprep.subr.mxu0 0.0
        %1398 = vmatpush1.xpose.msra.mxu0 0.0
        %1399 = vmatprep.subr.mxu0 0.0
        %1400 = vmatpush1.xpose.msra.mxu0 0.0
        %1401 = vmatprep.subr.mxu0 0.0
        %1402 = vmatpush1.xpose.msra.mxu0 0.0
        %1403 = vmatprep.mubr.f32.mxu0 0.0
        %v1404 = vand.u32 %v1180, 4294901760
        %v1405 = vsub.f32 %v1180, %v1404
        %1406 = vmatmul.mubr.f32.gmra.mrb[0].mxu0 %v1405
        %v1407 = vpop.f32.mrb[0].mxu0
        %v1408 = vadd.f32 %v1334, %v1407
        %v1409 = vpop.f32.mrb[0].mxu0
        %1410 = vdwg.mxu0
        %1411 = vmatprep.subr.mxu0 0.0
        %v1412 = vand.u32 %v1183, 4294901760
        %1413 = vmatpush1.xpose.msra.mxu0 %v1412
        %1414 = vmatprep.subr.mxu0 0.0
        %1415 = vmatpush1.xpose.msra.mxu0 0.0
        %1416 = vmatprep.subr.mxu0 0.0
        %1417 = vmatpush1.xpose.msra.mxu0 0.0
        %1418 = vmatprep.subr.mxu0 0.0
        %1419 = vmatpush1.xpose.msra.mxu0 0.0
        %1420 = vmatprep.subr.mxu0 0.0
        %1421 = vmatpush1.xpose.msra.mxu0 0.0
        %1422 = vmatprep.subr.mxu0 0.0
        %1423 = vmatpush1.xpose.msra.mxu0 0.0
        %1424 = vmatprep.subr.mxu0 0.0
        %1425 = vmatpush1.xpose.msra.mxu0 0.0
        %1426 = vmatprep.subr.mxu0 0.0
        %1427 = vmatpush1.xpose.msra.mxu0 0.0
        %1428 = vmatprep.subr.mxu0 0.0
        %1429 = vmatpush1.xpose.msra.mxu0 0.0
        %1430 = vmatprep.subr.mxu0 0.0
        %1431 = vmatpush1.xpose.msra.mxu0 0.0
        %1432 = vmatprep.subr.mxu0 0.0
        %1433 = vmatpush1.xpose.msra.mxu0 0.0
        %1434 = vmatprep.subr.mxu0 0.0
        %1435 = vmatpush1.xpose.msra.mxu0 0.0
        %1436 = vmatprep.subr.mxu0 0.0
        %1437 = vmatpush1.xpose.msra.mxu0 0.0
        %1438 = vmatprep.subr.mxu0 0.0
        %1439 = vmatpush1.xpose.msra.mxu0 0.0
        %1440 = vmatprep.subr.mxu0 0.0
        %1441 = vmatpush1.xpose.msra.mxu0 0.0
        %1442 = vmatprep.subr.mxu0 0.0
        %1443 = vmatpush1.xpose.msra.mxu0 0.0
        %1444 = vmatprep.subr.mxu0 0.0
        %1445 = vmatpush1.xpose.msra.mxu0 0.0
        %1446 = vmatprep.subr.mxu0 0.0
        %1447 = vmatpush1.xpose.msra.mxu0 0.0
        %1448 = vmatprep.subr.mxu0 0.0
        %1449 = vmatpush1.xpose.msra.mxu0 0.0
        %1450 = vmatprep.subr.mxu0 0.0
        %1451 = vmatpush1.xpose.msra.mxu0 0.0
        %1452 = vmatprep.subr.mxu0 0.0
        %1453 = vmatpush1.xpose.msra.mxu0 0.0
        %1454 = vmatprep.subr.mxu0 0.0
        %1455 = vmatpush1.xpose.msra.mxu0 0.0
        %1456 = vmatprep.subr.mxu0 0.0
        %1457 = vmatpush1.xpose.msra.mxu0 0.0
        %1458 = vmatprep.subr.mxu0 0.0
        %1459 = vmatpush1.xpose.msra.mxu0 0.0
        %1460 = vmatprep.subr.mxu0 0.0
        %1461 = vmatpush1.xpose.msra.mxu0 0.0
        %1462 = vmatprep.subr.mxu0 0.0
        %1463 = vmatpush1.xpose.msra.mxu0 0.0
        %1464 = vmatprep.subr.mxu0 0.0
        %1465 = vmatpush1.xpose.msra.mxu0 0.0
        %1466 = vmatprep.subr.mxu0 0.0
        %1467 = vmatpush1.xpose.msra.mxu0 0.0
        %1468 = vmatprep.subr.mxu0 0.0
        %1469 = vmatpush1.xpose.msra.mxu0 0.0
        %1470 = vmatprep.subr.mxu0 0.0
        %1471 = vmatpush1.xpose.msra.mxu0 0.0
        %1472 = vmatprep.subr.mxu0 0.0
        %1473 = vmatpush1.xpose.msra.mxu0 0.0
        %1474 = vmatprep.subr.mxu0 0.0
        %1475 = vmatpush1.xpose.msra.mxu0 0.0
        %1476 = vmatprep.mubr.f32.mxu0 0.0
        %v1477 = vand.u32 %v1180, 4294901760
        %v1478 = vsub.f32 %v1180, %v1477
        %v1479 = vand.u32 %v1478, 4294901760
        %1480 = vmatmul.mubr.f32.gmra.mrb[0].mxu0 %v1479
        %v1481 = vpop.f32.mrb[0].mxu0
        %v1482 = vadd.f32 %v1408, %v1481
        %v1483 = vpop.f32.mrb[0].mxu0
        %1484 = vdwg.mxu0
        %1485 = vmatprep.subr.mxu0 0.0
        %v1486 = vand.u32 %v1183, 4294901760
        %v1487 = vsub.f32 %v1183, %v1486
        %v1488 = vand.u32 %v1487, 4294901760
        %1489 = vmatpush1.xpose.msra.mxu0 %v1488
        %1490 = vmatprep.subr.mxu0 0.0
        %1491 = vmatpush1.xpose.msra.mxu0 0.0
        %1492 = vmatprep.subr.mxu0 0.0
        %1493 = vmatpush1.xpose.msra.mxu0 0.0
        %1494 = vmatprep.subr.mxu0 0.0
        %1495 = vmatpush1.xpose.msra.mxu0 0.0
        %1496 = vmatprep.subr.mxu0 0.0
        %1497 = vmatpush1.xpose.msra.mxu0 0.0
        %1498 = vmatprep.subr.mxu0 0.0
        %1499 = vmatpush1.xpose.msra.mxu0 0.0
        %1500 = vmatprep.subr.mxu0 0.0
        %1501 = vmatpush1.xpose.msra.mxu0 0.0
        %1502 = vmatprep.subr.mxu0 0.0
        %1503 = vmatpush1.xpose.msra.mxu0 0.0
        %1504 = vmatprep.subr.mxu0 0.0
        %1505 = vmatpush1.xpose.msra.mxu0 0.0
        %1506 = vmatprep.subr.mxu0 0.0
        %1507 = vmatpush1.xpose.msra.mxu0 0.0
        %1508 = vmatprep.subr.mxu0 0.0
        %1509 = vmatpush1.xpose.msra.mxu0 0.0
        %1510 = vmatprep.subr.mxu0 0.0
        %1511 = vmatpush1.xpose.msra.mxu0 0.0
        %1512 = vmatprep.subr.mxu0 0.0
        %1513 = vmatpush1.xpose.msra.mxu0 0.0
        %1514 = vmatprep.subr.mxu0 0.0
        %1515 = vmatpush1.xpose.msra.mxu0 0.0
        %1516 = vmatprep.subr.mxu0 0.0
        %1517 = vmatpush1.xpose.msra.mxu0 0.0
        %1518 = vmatprep.subr.mxu0 0.0
        %1519 = vmatpush1.xpose.msra.mxu0 0.0
        %1520 = vmatprep.subr.mxu0 0.0
        %1521 = vmatpush1.xpose.msra.mxu0 0.0
        %1522 = vmatprep.subr.mxu0 0.0
        %1523 = vmatpush1.xpose.msra.mxu0 0.0
        %1524 = vmatprep.subr.mxu0 0.0
        %1525 = vmatpush1.xpose.msra.mxu0 0.0
        %1526 = vmatprep.subr.mxu0 0.0
        %1527 = vmatpush1.xpose.msra.mxu0 0.0
        %1528 = vmatprep.subr.mxu0 0.0
        %1529 = vmatpush1.xpose.msra.mxu0 0.0
        %1530 = vmatprep.subr.mxu0 0.0
        %1531 = vmatpush1.xpose.msra.mxu0 0.0
        %1532 = vmatprep.subr.mxu0 0.0
        %1533 = vmatpush1.xpose.msra.mxu0 0.0
        %1534 = vmatprep.subr.mxu0 0.0
        %1535 = vmatpush1.xpose.msra.mxu0 0.0
        %1536 = vmatprep.subr.mxu0 0.0
        %1537 = vmatpush1.xpose.msra.mxu0 0.0
        %1538 = vmatprep.subr.mxu0 0.0
        %1539 = vmatpush1.xpose.msra.mxu0 0.0
        %1540 = vmatprep.subr.mxu0 0.0
        %1541 = vmatpush1.xpose.msra.mxu0 0.0
        %1542 = vmatprep.subr.mxu0 0.0
        %1543 = vmatpush1.xpose.msra.mxu0 0.0
        %1544 = vmatprep.subr.mxu0 0.0
        %1545 = vmatpush1.xpose.msra.mxu0 0.0
        %1546 = vmatprep.subr.mxu0 0.0
        %1547 = vmatpush1.xpose.msra.mxu0 0.0
        %1548 = vmatprep.subr.mxu0 0.0
        %1549 = vmatpush1.xpose.msra.mxu0 0.0
        %1550 = vmatprep.subr.mxu0 0.0
        %1551 = vmatpush1.xpose.msra.mxu0 0.0
        %1552 = vmatprep.mubr.f32.mxu0 0.0
        %v1553 = vand.u32 %v1180, 4294901760
        %1554 = vmatmul.mubr.f32.gmra.mrb[0].mxu0 %v1553
        %v1555 = vpop.f32.mrb[0].mxu0
        %v1556 = vadd.f32 %v1482, %v1555
        %v1557 = vpop.f32.mrb[0].mxu0
        %1558 = vdwg.mxu0
        %1559 = vmatprep.subr.mxu0 0.0
        %v1560 = vand.u32 %v1183, 4294901760
        %1561 = vmatpush1.xpose.msra.mxu0 %v1560
        %1562 = vmatprep.subr.mxu0 0.0
        %1563 = vmatpush1.xpose.msra.mxu0 0.0
        %1564 = vmatprep.subr.mxu0 0.0
        %1565 = vmatpush1.xpose.msra.mxu0 0.0
        %1566 = vmatprep.subr.mxu0 0.0
        %1567 = vmatpush1.xpose.msra.mxu0 0.0
        %1568 = vmatprep.subr.mxu0 0.0
        %1569 = vmatpush1.xpose.msra.mxu0 0.0
        %1570 = vmatprep.subr.mxu0 0.0
        %1571 = vmatpush1.xpose.msra.mxu0 0.0
        %1572 = vmatprep.subr.mxu0 0.0
        %1573 = vmatpush1.xpose.msra.mxu0 0.0
        %1574 = vmatprep.subr.mxu0 0.0
        %1575 = vmatpush1.xpose.msra.mxu0 0.0
        %1576 = vmatprep.subr.mxu0 0.0
        %1577 = vmatpush1.xpose.msra.mxu0 0.0
        %1578 = vmatprep.subr.mxu0 0.0
        %1579 = vmatpush1.xpose.msra.mxu0 0.0
        %1580 = vmatprep.subr.mxu0 0.0
        %1581 = vmatpush1.xpose.msra.mxu0 0.0
        %1582 = vmatprep.subr.mxu0 0.0
        %1583 = vmatpush1.xpose.msra.mxu0 0.0
        %1584 = vmatprep.subr.mxu0 0.0
        %1585 = vmatpush1.xpose.msra.mxu0 0.0
        %1586 = vmatprep.subr.mxu0 0.0
        %1587 = vmatpush1.xpose.msra.mxu0 0.0
        %1588 = vmatprep.subr.mxu0 0.0
        %1589 = vmatpush1.xpose.msra.mxu0 0.0
        %1590 = vmatprep.subr.mxu0 0.0
        %1591 = vmatpush1.xpose.msra.mxu0 0.0
        %1592 = vmatprep.subr.mxu0 0.0
        %1593 = vmatpush1.xpose.msra.mxu0 0.0
        %1594 = vmatprep.subr.mxu0 0.0
        %1595 = vmatpush1.xpose.msra.mxu0 0.0
        %1596 = vmatprep.subr.mxu0 0.0
        %1597 = vmatpush1.xpose.msra.mxu0 0.0
        %1598 = vmatprep.subr.mxu0 0.0
        %1599 = vmatpush1.xpose.msra.mxu0 0.0
        %1600 = vmatprep.subr.mxu0 0.0
        %1601 = vmatpush1.xpose.msra.mxu0 0.0
        %1602 = vmatprep.subr.mxu0 0.0
        %1603 = vmatpush1.xpose.msra.mxu0 0.0
        %1604 = vmatprep.subr.mxu0 0.0
        %1605 = vmatpush1.xpose.msra.mxu0 0.0
        %1606 = vmatprep.subr.mxu0 0.0
        %1607 = vmatpush1.xpose.msra.mxu0 0.0
        %1608 = vmatprep.subr.mxu0 0.0
        %1609 = vmatpush1.xpose.msra.mxu0 0.0
        %1610 = vmatprep.subr.mxu0 0.0
        %1611 = vmatpush1.xpose.msra.mxu0 0.0
        %1612 = vmatprep.subr.mxu0 0.0
        %1613 = vmatpush1.xpose.msra.mxu0 0.0
        %1614 = vmatprep.subr.mxu0 0.0
        %1615 = vmatpush1.xpose.msra.mxu0 0.0
        %1616 = vmatprep.subr.mxu0 0.0
        %1617 = vmatpush1.xpose.msra.mxu0 0.0
        %1618 = vmatprep.subr.mxu0 0.0
        %1619 = vmatpush1.xpose.msra.mxu0 0.0
        %1620 = vmatprep.subr.mxu0 0.0
        %1621 = vmatpush1.xpose.msra.mxu0 0.0
        %1622 = vmatprep.subr.mxu0 0.0
        %1623 = vmatpush1.xpose.msra.mxu0 0.0
        %1624 = vmatprep.mubr.f32.mxu0 0.0
        %v1625 = vand.u32 %v1180, 4294901760
        %1626 = vmatmul.mubr.f32.gmra.mrb[0].mxu0 %v1625
        %v1627 = vpop.f32.mrb[0].mxu0
        %v1628 = vadd.f32 %v1556, %v1627
        %v1629 = vpop.f32.mrb[0].mxu0
        %1630 = vdwg.mxu0
        %v1632 = vsel %vm274, %v269, 0
        %v1635 = vsel %vm274, %v273, 0
        %1637 = vmatprep.subr.mxu0 0.0
        %v1638 = vand.u32 %v1635, 4294901760
        %1639 = vmatpush1.xpose.msra.mxu0 %v1638
        %1640 = vmatprep.subr.mxu0 0.0
        %1641 = vmatpush1.xpose.msra.mxu0 0.0
        %1642 = vmatprep.subr.mxu0 0.0
        %1643 = vmatpush1.xpose.msra.mxu0 0.0
        %1644 = vmatprep.subr.mxu0 0.0
        %1645 = vmatpush1.xpose.msra.mxu0 0.0
        %1646 = vmatprep.subr.mxu0 0.0
        %1647 = vmatpush1.xpose.msra.mxu0 0.0
        %1648 = vmatprep.subr.mxu0 0.0
        %1649 = vmatpush1.xpose.msra.mxu0 0.0
        %1650 = vmatprep.subr.mxu0 0.0
        %1651 = vmatpush1.xpose.msra.mxu0 0.0
        %1652 = vmatprep.subr.mxu0 0.0
        %1653 = vmatpush1.xpose.msra.mxu0 0.0
        %1654 = vmatprep.subr.mxu0 0.0
        %1655 = vmatpush1.xpose.msra.mxu0 0.0
        %1656 = vmatprep.subr.mxu0 0.0
        %1657 = vmatpush1.xpose.msra.mxu0 0.0
        %1658 = vmatprep.subr.mxu0 0.0
        %1659 = vmatpush1.xpose.msra.mxu0 0.0
        %1660 = vmatprep.subr.mxu0 0.0
        %1661 = vmatpush1.xpose.msra.mxu0 0.0
        %1662 = vmatprep.subr.mxu0 0.0
        %1663 = vmatpush1.xpose.msra.mxu0 0.0
        %1664 = vmatprep.subr.mxu0 0.0
        %1665 = vmatpush1.xpose.msra.mxu0 0.0
        %1666 = vmatprep.subr.mxu0 0.0
        %1667 = vmatpush1.xpose.msra.mxu0 0.0
        %1668 = vmatprep.subr.mxu0 0.0
        %1669 = vmatpush1.xpose.msra.mxu0 0.0
        %1670 = vmatprep.subr.mxu0 0.0
        %1671 = vmatpush1.xpose.msra.mxu0 0.0
        %1672 = vmatprep.subr.mxu0 0.0
        %1673 = vmatpush1.xpose.msra.mxu0 0.0
        %1674 = vmatprep.subr.mxu0 0.0
        %1675 = vmatpush1.xpose.msra.mxu0 0.0
        %1676 = vmatprep.subr.mxu0 0.0
        %1677 = vmatpush1.xpose.msra.mxu0 0.0
        %1678 = vmatprep.subr.mxu0 0.0
        %1679 = vmatpush1.xpose.msra.mxu0 0.0
        %1680 = vmatprep.subr.mxu0 0.0
        %1681 = vmatpush1.xpose.msra.mxu0 0.0
        %1682 = vmatprep.subr.mxu0 0.0
        %1683 = vmatpush1.xpose.msra.mxu0 0.0
        %1684 = vmatprep.subr.mxu0 0.0
        %1685 = vmatpush1.xpose.msra.mxu0 0.0
        %1686 = vmatprep.subr.mxu0 0.0
        %1687 = vmatpush1.xpose.msra.mxu0 0.0
        %1688 = vmatprep.subr.mxu0 0.0
        %1689 = vmatpush1.xpose.msra.mxu0 0.0
        %1690 = vmatprep.subr.mxu0 0.0
        %1691 = vmatpush1.xpose.msra.mxu0 0.0
        %1692 = vmatprep.subr.mxu0 0.0
        %1693 = vmatpush1.xpose.msra.mxu0 0.0
        %1694 = vmatprep.subr.mxu0 0.0
        %1695 = vmatpush1.xpose.msra.mxu0 0.0
        %1696 = vmatprep.subr.mxu0 0.0
        %1697 = vmatpush1.xpose.msra.mxu0 0.0
        %1698 = vmatprep.subr.mxu0 0.0
        %1699 = vmatpush1.xpose.msra.mxu0 0.0
        %1700 = vmatprep.subr.mxu0 0.0
        %1701 = vmatpush1.xpose.msra.mxu0 0.0
        %1702 = vmatprep.mubr.f32.mxu0 0.0
        %v1703 = vand.u32 %v1632, 4294901760
        %v1704 = vsub.f32 %v1632, %v1703
        %v1705 = vand.u32 %v1704, 4294901760
        %v1706 = vsub.f32 %v1704, %v1705
        %v1707 = vand.u32 %v1706, 4294901760
        %1708 = vmatmul.mubr.f32.gmra.mrb[0].mxu0 %v1707
        %v1709 = vpop.f32.mrb[0].mxu0
        %v1710 = vadd.f32 0.0, %v1709
        %v1711 = vpop.f32.mrb[0].mxu0
        %1712 = vdwg.mxu0
        %1713 = vmatprep.subr.mxu0 0.0
        %v1714 = vand.u32 %v1635, 4294901760
        %v1715 = vsub.f32 %v1635, %v1714
        %v1716 = vand.u32 %v1715, 4294901760
        %v1717 = vsub.f32 %v1715, %v1716
        %v1718 = vand.u32 %v1717, 4294901760
        %1719 = vmatpush1.xpose.msra.mxu0 %v1718
        %1720 = vmatprep.subr.mxu0 0.0
        %1721 = vmatpush1.xpose.msra.mxu0 0.0
        %1722 = vmatprep.subr.mxu0 0.0
        %1723 = vmatpush1.xpose.msra.mxu0 0.0
        %1724 = vmatprep.subr.mxu0 0.0
        %1725 = vmatpush1.xpose.msra.mxu0 0.0
        %1726 = vmatprep.subr.mxu0 0.0
        %1727 = vmatpush1.xpose.msra.mxu0 0.0
        %1728 = vmatprep.subr.mxu0 0.0
        %1729 = vmatpush1.xpose.msra.mxu0 0.0
        %1730 = vmatprep.subr.mxu0 0.0
        %1731 = vmatpush1.xpose.msra.mxu0 0.0
        %1732 = vmatprep.subr.mxu0 0.0
        %1733 = vmatpush1.xpose.msra.mxu0 0.0
        %1734 = vmatprep.subr.mxu0 0.0
        %1735 = vmatpush1.xpose.msra.mxu0 0.0
        %1736 = vmatprep.subr.mxu0 0.0
        %1737 = vmatpush1.xpose.msra.mxu0 0.0
        %1738 = vmatprep.subr.mxu0 0.0
        %1739 = vmatpush1.xpose.msra.mxu0 0.0
        %1740 = vmatprep.subr.mxu0 0.0
        %1741 = vmatpush1.xpose.msra.mxu0 0.0
        %1742 = vmatprep.subr.mxu0 0.0
        %1743 = vmatpush1.xpose.msra.mxu0 0.0
        %1744 = vmatprep.subr.mxu0 0.0
        %1745 = vmatpush1.xpose.msra.mxu0 0.0
        %1746 = vmatprep.subr.mxu0 0.0
        %1747 = vmatpush1.xpose.msra.mxu0 0.0
        %1748 = vmatprep.subr.mxu0 0.0
        %1749 = vmatpush1.xpose.msra.mxu0 0.0
        %1750 = vmatprep.subr.mxu0 0.0
        %1751 = vmatpush1.xpose.msra.mxu0 0.0
        %1752 = vmatprep.subr.mxu0 0.0
        %1753 = vmatpush1.xpose.msra.mxu0 0.0
        %1754 = vmatprep.subr.mxu0 0.0
        %1755 = vmatpush1.xpose.msra.mxu0 0.0
        %1756 = vmatprep.subr.mxu0 0.0
        %1757 = vmatpush1.xpose.msra.mxu0 0.0
        %1758 = vmatprep.subr.mxu0 0.0
        %1759 = vmatpush1.xpose.msra.mxu0 0.0
        %1760 = vmatprep.subr.mxu0 0.0
        %1761 = vmatpush1.xpose.msra.mxu0 0.0
        %1762 = vmatprep.subr.mxu0 0.0
        %1763 = vmatpush1.xpose.msra.mxu0 0.0
        %1764 = vmatprep.subr.mxu0 0.0
        %1765 = vmatpush1.xpose.msra.mxu0 0.0
        %1766 = vmatprep.subr.mxu0 0.0
        %1767 = vmatpush1.xpose.msra.mxu0 0.0
        %1768 = vmatprep.subr.mxu0 0.0
        %1769 = vmatpush1.xpose.msra.mxu0 0.0
        %1770 = vmatprep.subr.mxu0 0.0
        %1771 = vmatpush1.xpose.msra.mxu0 0.0
        %1772 = vmatprep.subr.mxu0 0.0
        %1773 = vmatpush1.xpose.msra.mxu0 0.0
        %1774 = vmatprep.subr.mxu0 0.0
        %1775 = vmatpush1.xpose.msra.mxu0 0.0
        %1776 = vmatprep.subr.mxu0 0.0
        %1777 = vmatpush1.xpose.msra.mxu0 0.0
        %1778 = vmatprep.subr.mxu0 0.0
        %1779 = vmatpush1.xpose.msra.mxu0 0.0
        %1780 = vmatprep.subr.mxu0 0.0
        %1781 = vmatpush1.xpose.msra.mxu0 0.0
        %1782 = vmatprep.mubr.f32.mxu0 0.0
        %v1783 = vand.u32 %v1632, 4294901760
        %1784 = vmatmul.mubr.f32.gmra.mrb[0].mxu0 %v1783
        %v1785 = vpop.f32.mrb[0].mxu0
        %v1786 = vadd.f32 %v1710, %v1785
        %v1787 = vpop.f32.mrb[0].mxu0
        %1788 = vdwg.mxu0
        %1789 = vmatprep.subr.mxu0 0.0
        %v1790 = vand.u32 %v1635, 4294901760
        %v1791 = vsub.f32 %v1635, %v1790
        %1792 = vmatpush1.xpose.msra.mxu0 %v1791
        %1793 = vmatprep.subr.mxu0 0.0
        %1794 = vmatpush1.xpose.msra.mxu0 0.0
        %1795 = vmatprep.subr.mxu0 0.0
        %1796 = vmatpush1.xpose.msra.mxu0 0.0
        %1797 = vmatprep.subr.mxu0 0.0
        %1798 = vmatpush1.xpose.msra.mxu0 0.0
        %1799 = vmatprep.subr.mxu0 0.0
        %1800 = vmatpush1.xpose.msra.mxu0 0.0
        %1801 = vmatprep.subr.mxu0 0.0
        %1802 = vmatpush1.xpose.msra.mxu0 0.0
        %1803 = vmatprep.subr.mxu0 0.0
        %1804 = vmatpush1.xpose.msra.mxu0 0.0
        %1805 = vmatprep.subr.mxu0 0.0
        %1806 = vmatpush1.xpose.msra.mxu0 0.0
        %1807 = vmatprep.subr.mxu0 0.0
        %1808 = vmatpush1.xpose.msra.mxu0 0.0
        %1809 = vmatprep.subr.mxu0 0.0
        %1810 = vmatpush1.xpose.msra.mxu0 0.0
        %1811 = vmatprep.subr.mxu0 0.0
        %1812 = vmatpush1.xpose.msra.mxu0 0.0
        %1813 = vmatprep.subr.mxu0 0.0
        %1814 = vmatpush1.xpose.msra.mxu0 0.0
        %1815 = vmatprep.subr.mxu0 0.0
        %1816 = vmatpush1.xpose.msra.mxu0 0.0
        %1817 = vmatprep.subr.mxu0 0.0
        %1818 = vmatpush1.xpose.msra.mxu0 0.0
        %1819 = vmatprep.subr.mxu0 0.0
        %1820 = vmatpush1.xpose.msra.mxu0 0.0
        %1821 = vmatprep.subr.mxu0 0.0
        %1822 = vmatpush1.xpose.msra.mxu0 0.0
        %1823 = vmatprep.subr.mxu0 0.0
        %1824 = vmatpush1.xpose.msra.mxu0 0.0
        %1825 = vmatprep.subr.mxu0 0.0
        %1826 = vmatpush1.xpose.msra.mxu0 0.0
        %1827 = vmatprep.subr.mxu0 0.0
        %1828 = vmatpush1.xpose.msra.mxu0 0.0
        %1829 = vmatprep.subr.mxu0 0.0
        %1830 = vmatpush1.xpose.msra.mxu0 0.0
        %1831 = vmatprep.subr.mxu0 0.0
        %1832 = vmatpush1.xpose.msra.mxu0 0.0
        %1833 = vmatprep.subr.mxu0 0.0
        %1834 = vmatpush1.xpose.msra.mxu0 0.0
        %1835 = vmatprep.subr.mxu0 0.0
        %1836 = vmatpush1.xpose.msra.mxu0 0.0
        %1837 = vmatprep.subr.mxu0 0.0
        %1838 = vmatpush1.xpose.msra.mxu0 0.0
        %1839 = vmatprep.subr.mxu0 0.0
        %1840 = vmatpush1.xpose.msra.mxu0 0.0
        %1841 = vmatprep.subr.mxu0 0.0
        %1842 = vmatpush1.xpose.msra.mxu0 0.0
        %1843 = vmatprep.subr.mxu0 0.0
        %1844 = vmatpush1.xpose.msra.mxu0 0.0
        %1845 = vmatprep.subr.mxu0 0.0
        %1846 = vmatpush1.xpose.msra.mxu0 0.0
        %1847 = vmatprep.subr.mxu0 0.0
        %1848 = vmatpush1.xpose.msra.mxu0 0.0
        %1849 = vmatprep.subr.mxu0 0.0
        %1850 = vmatpush1.xpose.msra.mxu0 0.0
        %1851 = vmatprep.subr.mxu0 0.0
        %1852 = vmatpush1.xpose.msra.mxu0 0.0
        %1853 = vmatprep.subr.mxu0 0.0
        %1854 = vmatpush1.xpose.msra.mxu0 0.0
        %1855 = vmatprep.mubr.f32.mxu0 0.0
        %v1856 = vand.u32 %v1632, 4294901760
        %v1857 = vsub.f32 %v1632, %v1856
        %1858 = vmatmul.mubr.f32.gmra.mrb[0].mxu0 %v1857
        %v1859 = vpop.f32.mrb[0].mxu0
        %v1860 = vadd.f32 %v1786, %v1859
        %v1861 = vpop.f32.mrb[0].mxu0
        %1862 = vdwg.mxu0
        %1863 = vmatprep.subr.mxu0 0.0
        %v1864 = vand.u32 %v1635, 4294901760
        %1865 = vmatpush1.xpose.msra.mxu0 %v1864
        %1866 = vmatprep.subr.mxu0 0.0
        %1867 = vmatpush1.xpose.msra.mxu0 0.0
        %1868 = vmatprep.subr.mxu0 0.0
        %1869 = vmatpush1.xpose.msra.mxu0 0.0
        %1870 = vmatprep.subr.mxu0 0.0
        %1871 = vmatpush1.xpose.msra.mxu0 0.0
        %1872 = vmatprep.subr.mxu0 0.0
        %1873 = vmatpush1.xpose.msra.mxu0 0.0
        %1874 = vmatprep.subr.mxu0 0.0
        %1875 = vmatpush1.xpose.msra.mxu0 0.0
        %1876 = vmatprep.subr.mxu0 0.0
        %1877 = vmatpush1.xpose.msra.mxu0 0.0
        %1878 = vmatprep.subr.mxu0 0.0
        %1879 = vmatpush1.xpose.msra.mxu0 0.0
        %1880 = vmatprep.subr.mxu0 0.0
        %1881 = vmatpush1.xpose.msra.mxu0 0.0
        %1882 = vmatprep.subr.mxu0 0.0
        %1883 = vmatpush1.xpose.msra.mxu0 0.0
        %1884 = vmatprep.subr.mxu0 0.0
        %1885 = vmatpush1.xpose.msra.mxu0 0.0
        %1886 = vmatprep.subr.mxu0 0.0
        %1887 = vmatpush1.xpose.msra.mxu0 0.0
        %1888 = vmatprep.subr.mxu0 0.0
        %1889 = vmatpush1.xpose.msra.mxu0 0.0
        %1890 = vmatprep.subr.mxu0 0.0
        %1891 = vmatpush1.xpose.msra.mxu0 0.0
        %1892 = vmatprep.subr.mxu0 0.0
        %1893 = vmatpush1.xpose.msra.mxu0 0.0
        %1894 = vmatprep.subr.mxu0 0.0
        %1895 = vmatpush1.xpose.msra.mxu0 0.0
        %1896 = vmatprep.subr.mxu0 0.0
        %1897 = vmatpush1.xpose.msra.mxu0 0.0
        %1898 = vmatprep.subr.mxu0 0.0
        %1899 = vmatpush1.xpose.msra.mxu0 0.0
        %1900 = vmatprep.subr.mxu0 0.0
        %1901 = vmatpush1.xpose.msra.mxu0 0.0
        %1902 = vmatprep.subr.mxu0 0.0
        %1903 = vmatpush1.xpose.msra.mxu0 0.0
        %1904 = vmatprep.subr.mxu0 0.0
        %1905 = vmatpush1.xpose.msra.mxu0 0.0
        %1906 = vmatprep.subr.mxu0 0.0
        %1907 = vmatpush1.xpose.msra.mxu0 0.0
        %1908 = vmatprep.subr.mxu0 0.0
        %1909 = vmatpush1.xpose.msra.mxu0 0.0
        %1910 = vmatprep.subr.mxu0 0.0
        %1911 = vmatpush1.xpose.msra.mxu0 0.0
        %1912 = vmatprep.subr.mxu0 0.0
        %1913 = vmatpush1.xpose.msra.mxu0 0.0
        %1914 = vmatprep.subr.mxu0 0.0
        %1915 = vmatpush1.xpose.msra.mxu0 0.0
        %1916 = vmatprep.subr.mxu0 0.0
        %1917 = vmatpush1.xpose.msra.mxu0 0.0
        %1918 = vmatprep.subr.mxu0 0.0
        %1919 = vmatpush1.xpose.msra.mxu0 0.0
        %1920 = vmatprep.subr.mxu0 0.0
        %1921 = vmatpush1.xpose.msra.mxu0 0.0
        %1922 = vmatprep.subr.mxu0 0.0
        %1923 = vmatpush1.xpose.msra.mxu0 0.0
        %1924 = vmatprep.subr.mxu0 0.0
        %1925 = vmatpush1.xpose.msra.mxu0 0.0
        %1926 = vmatprep.subr.mxu0 0.0
        %1927 = vmatpush1.xpose.msra.mxu0 0.0
        %1928 = vmatprep.mubr.f32.mxu0 0.0
        %v1929 = vand.u32 %v1632, 4294901760
        %v1930 = vsub.f32 %v1632, %v1929
        %v1931 = vand.u32 %v1930, 4294901760
        %1932 = vmatmul.mubr.f32.gmra.mrb[0].mxu0 %v1931
        %v1933 = vpop.f32.mrb[0].mxu0
        %v1934 = vadd.f32 %v1860, %v1933
        %v1935 = vpop.f32.mrb[0].mxu0
        %1936 = vdwg.mxu0
        %1937 = vmatprep.subr.mxu0 0.0
        %v1938 = vand.u32 %v1635, 4294901760
        %v1939 = vsub.f32 %v1635, %v1938
        %v1940 = vand.u32 %v1939, 4294901760
        %1941 = vmatpush1.xpose.msra.mxu0 %v1940
        %1942 = vmatprep.subr.mxu0 0.0
        %1943 = vmatpush1.xpose.msra.mxu0 0.0
        %1944 = vmatprep.subr.mxu0 0.0
        %1945 = vmatpush1.xpose.msra.mxu0 0.0
        %1946 = vmatprep.subr.mxu0 0.0
        %1947 = vmatpush1.xpose.msra.mxu0 0.0
        %1948 = vmatprep.subr.mxu0 0.0
        %1949 = vmatpush1.xpose.msra.mxu0 0.0
        %1950 = vmatprep.subr.mxu0 0.0
        %1951 = vmatpush1.xpose.msra.mxu0 0.0
        %1952 = vmatprep.subr.mxu0 0.0
        %1953 = vmatpush1.xpose.msra.mxu0 0.0
        %1954 = vmatprep.subr.mxu0 0.0
        %1955 = vmatpush1.xpose.msra.mxu0 0.0
        %1956 = vmatprep.subr.mxu0 0.0
        %1957 = vmatpush1.xpose.msra.mxu0 0.0
        %1958 = vmatprep.subr.mxu0 0.0
        %1959 = vmatpush1.xpose.msra.mxu0 0.0
        %1960 = vmatprep.subr.mxu0 0.0
        %1961 = vmatpush1.xpose.msra.mxu0 0.0
        %1962 = vmatprep.subr.mxu0 0.0
        %1963 = vmatpush1.xpose.msra.mxu0 0.0
        %1964 = vmatprep.subr.mxu0 0.0
        %1965 = vmatpush1.xpose.msra.mxu0 0.0
        %1966 = vmatprep.subr.mxu0 0.0
        %1967 = vmatpush1.xpose.msra.mxu0 0.0
        %1968 = vmatprep.subr.mxu0 0.0
        %1969 = vmatpush1.xpose.msra.mxu0 0.0
        %1970 = vmatprep.subr.mxu0 0.0
        %1971 = vmatpush1.xpose.msra.mxu0 0.0
        %1972 = vmatprep.subr.mxu0 0.0
        %1973 = vmatpush1.xpose.msra.mxu0 0.0
        %1974 = vmatprep.subr.mxu0 0.0
        %1975 = vmatpush1.xpose.msra.mxu0 0.0
        %1976 = vmatprep.subr.mxu0 0.0
        %1977 = vmatpush1.xpose.msra.mxu0 0.0
        %1978 = vmatprep.subr.mxu0 0.0
        %1979 = vmatpush1.xpose.msra.mxu0 0.0
        %1980 = vmatprep.subr.mxu0 0.0
        %1981 = vmatpush1.xpose.msra.mxu0 0.0
        %1982 = vmatprep.subr.mxu0 0.0
        %1983 = vmatpush1.xpose.msra.mxu0 0.0
        %1984 = vmatprep.subr.mxu0 0.0
        %1985 = vmatpush1.xpose.msra.mxu0 0.0
        %1986 = vmatprep.subr.mxu0 0.0
        %1987 = vmatpush1.xpose.msra.mxu0 0.0
        %1988 = vmatprep.subr.mxu0 0.0
        %1989 = vmatpush1.xpose.msra.mxu0 0.0
        %1990 = vmatprep.subr.mxu0 0.0
        %1991 = vmatpush1.xpose.msra.mxu0 0.0
        %1992 = vmatprep.subr.mxu0 0.0
        %1993 = vmatpush1.xpose.msra.mxu0 0.0
        %1994 = vmatprep.subr.mxu0 0.0
        %1995 = vmatpush1.xpose.msra.mxu0 0.0
        %1996 = vmatprep.subr.mxu0 0.0
        %1997 = vmatpush1.xpose.msra.mxu0 0.0
        %1998 = vmatprep.subr.mxu0 0.0
        %1999 = vmatpush1.xpose.msra.mxu0 0.0
        %2000 = vmatprep.subr.mxu0 0.0
        %2001 = vmatpush1.xpose.msra.mxu0 0.0
        %2002 = vmatprep.subr.mxu0 0.0
        %2003 = vmatpush1.xpose.msra.mxu0 0.0
        %2004 = vmatprep.mubr.f32.mxu0 0.0
        %v2005 = vand.u32 %v1632, 4294901760
        %2006 = vmatmul.mubr.f32.gmra.mrb[0].mxu0 %v2005
        %v2007 = vpop.f32.mrb[0].mxu0
        %v2008 = vadd.f32 %v1934, %v2007
        %v2009 = vpop.f32.mrb[0].mxu0
        %2010 = vdwg.mxu0
        %2011 = vmatprep.subr.mxu0 0.0
        %v2012 = vand.u32 %v1635, 4294901760
        %2013 = vmatpush1.xpose.msra.mxu0 %v2012
        %2014 = vmatprep.subr.mxu0 0.0
        %2015 = vmatpush1.xpose.msra.mxu0 0.0
        %2016 = vmatprep.subr.mxu0 0.0
        %2017 = vmatpush1.xpose.msra.mxu0 0.0
        %2018 = vmatprep.subr.mxu0 0.0
        %2019 = vmatpush1.xpose.msra.mxu0 0.0
        %2020 = vmatprep.subr.mxu0 0.0
        %2021 = vmatpush1.xpose.msra.mxu0 0.0
        %2022 = vmatprep.subr.mxu0 0.0
        %2023 = vmatpush1.xpose.msra.mxu0 0.0
        %2024 = vmatprep.subr.mxu0 0.0
        %2025 = vmatpush1.xpose.msra.mxu0 0.0
        %2026 = vmatprep.subr.mxu0 0.0
        %2027 = vmatpush1.xpose.msra.mxu0 0.0
        %2028 = vmatprep.subr.mxu0 0.0
        %2029 = vmatpush1.xpose.msra.mxu0 0.0
        %2030 = vmatprep.subr.mxu0 0.0
        %2031 = vmatpush1.xpose.msra.mxu0 0.0
        %2032 = vmatprep.subr.mxu0 0.0
        %2033 = vmatpush1.xpose.msra.mxu0 0.0
        %2034 = vmatprep.subr.mxu0 0.0
        %2035 = vmatpush1.xpose.msra.mxu0 0.0
        %2036 = vmatprep.subr.mxu0 0.0
        %2037 = vmatpush1.xpose.msra.mxu0 0.0
        %2038 = vmatprep.subr.mxu0 0.0
        %2039 = vmatpush1.xpose.msra.mxu0 0.0
        %2040 = vmatprep.subr.mxu0 0.0
        %2041 = vmatpush1.xpose.msra.mxu0 0.0
        %2042 = vmatprep.subr.mxu0 0.0
        %2043 = vmatpush1.xpose.msra.mxu0 0.0
        %2044 = vmatprep.subr.mxu0 0.0
        %2045 = vmatpush1.xpose.msra.mxu0 0.0
        %2046 = vmatprep.subr.mxu0 0.0
        %2047 = vmatpush1.xpose.msra.mxu0 0.0
        %2048 = vmatprep.subr.mxu0 0.0
        %2049 = vmatpush1.xpose.msra.mxu0 0.0
        %2050 = vmatprep.subr.mxu0 0.0
        %2051 = vmatpush1.xpose.msra.mxu0 0.0
        %2052 = vmatprep.subr.mxu0 0.0
        %2053 = vmatpush1.xpose.msra.mxu0 0.0
        %2054 = vmatprep.subr.mxu0 0.0
        %2055 = vmatpush1.xpose.msra.mxu0 0.0
        %2056 = vmatprep.subr.mxu0 0.0
        %2057 = vmatpush1.xpose.msra.mxu0 0.0
        %2058 = vmatprep.subr.mxu0 0.0
        %2059 = vmatpush1.xpose.msra.mxu0 0.0
        %2060 = vmatprep.subr.mxu0 0.0
        %2061 = vmatpush1.xpose.msra.mxu0 0.0
        %2062 = vmatprep.subr.mxu0 0.0
        %2063 = vmatpush1.xpose.msra.mxu0 0.0
        %2064 = vmatprep.subr.mxu0 0.0
        %2065 = vmatpush1.xpose.msra.mxu0 0.0
        %2066 = vmatprep.subr.mxu0 0.0
        %2067 = vmatpush1.xpose.msra.mxu0 0.0
        %2068 = vmatprep.subr.mxu0 0.0
        %2069 = vmatpush1.xpose.msra.mxu0 0.0
        %2070 = vmatprep.subr.mxu0 0.0
        %2071 = vmatpush1.xpose.msra.mxu0 0.0
        %2072 = vmatprep.subr.mxu0 0.0
        %2073 = vmatpush1.xpose.msra.mxu0 0.0
        %2074 = vmatprep.subr.mxu0 0.0
        %2075 = vmatpush1.xpose.msra.mxu0 0.0
        %2076 = vmatprep.mubr.f32.mxu0 0.0
        %v2077 = vand.u32 %v1632, 4294901760
        %2078 = vmatmul.mubr.f32.gmra.mrb[0].mxu0 %v2077
        %v2079 = vpop.f32.mrb[0].mxu0
        %v2080 = vadd.f32 %v2008, %v2079
        %v2081 = vpop.f32.mrb[0].mxu0
        %2082 = vdwg.mxu0
        %v2083 = vmul.f32 %v724, 0.35355338
        %v2084 = vmul.f32 %v1176, 0.35355338
        %v2085 = vmul.f32 %v1628, 0.35355338
        %v2086 = vmul.f32 %v2080, 0.35355338
        %v2087 = vsel %vm274, %v2083, -inf
        %2088 = vmax.xlane.f32.xlu0 %v2087
        %v2089 = vpop.xlane.xlu0 %2088
        %v2090 = vsel %vm274, %v2084, -inf
        %2091 = vmax.xlane.f32.xlu0 %v2090
        %v2092 = vpop.xlane.xlu0 %2091
        %v2093 = vsel %vm274, %v2085, -inf
        %2094 = vmax.xlane.f32.xlu0 %v2093
        %v2095 = vpop.xlane.xlu0 %2094
        %v2096 = vsel %vm274, %v2086, -inf
        %2097 = vmax.xlane.f32.xlu0 %v2096
        %v2098 = vpop.xlane.xlu0 %2097
        %v2099 = vsub.f32 %v2083, %v2089
        %v2100 = vsub.f32 %v2084, %v2092
        %v2101 = vsub.f32 %v2085, %v2095
        %v2102 = vsub.f32 %v2086, %v2098
        %v2103 = vmul.f32 %v2099, 1.442695
        %v2104 = vpow.pop %v2103
        %v2105 = vmul.f32 %v2100, 1.442695
        %v2106 = vpow.pop %v2105
        %v2107 = vmul.f32 %v2101, 1.442695
        %v2108 = vpow.pop %v2107
        %v2109 = vmul.f32 %v2102, 1.442695
        %v2110 = vpow.pop %v2109
        %v2111 = vsel %vm274, %v2104, 0.0
        %2112 = vadd.xlane.f32.xlu0 %v2111
        %v2113 = vpop.xlane.xlu0 %2112
        %v2114 = vsel %vm274, %v2106, 0.0
        %2115 = vadd.xlane.f32.xlu0 %v2114
        %v2116 = vpop.xlane.xlu0 %2115
        %v2117 = vsel %vm274, %v2108, 0.0
        %2118 = vadd.xlane.f32.xlu0 %v2117
        %v2119 = vpop.xlane.xlu0 %2118
        %v2120 = vsel %vm274, %v2110, 0.0
        %2121 = vadd.xlane.f32.xlu0 %v2120
        %v2122 = vpop.xlane.xlu0 %2121
        %v2123 = vrcp.pop %v2113
        %v2124 = vmul.f32 %v2104, %v2123
        %v2125 = vrcp.pop %v2116
        %v2126 = vmul.f32 %v2106, %v2125
        %v2127 = vrcp.pop %v2119
        %v2128 = vmul.f32 %v2108, %v2127
        %v2129 = vrcp.pop %v2122
        %v2130 = vmul.f32 %v2110, %v2129
        %v2131 = vld [vmem:[%s233] sm:$0xff]
        %v2132 = vld [vmem:[%s233 + $0x8] sm:$0xff]
        %v2133 = vld [vmem:[%s233 + $0x10] sm:$0xff]
        %v2134 = vld [vmem:[%s233 + $0x18] sm:$0xff]
        %v2136 = vsel %vm274, %v2124, 0
        %2138 = vmatprep.subr.mxu0 0.0
        %v2139 = vand.u32 %v2131, 4294901760
        %2140 = vmatpush1.msra.mxu0 %v2139
        %2141 = vmatprep.subr.mxu0 0.0
        %2142 = vmatpush1.msra.mxu0 0.0
        %2143 = vmatprep.subr.mxu0 0.0
        %2144 = vmatpush1.msra.mxu0 0.0
        %2145 = vmatprep.subr.mxu0 0.0
        %2146 = vmatpush1.msra.mxu0 0.0
        %2147 = vmatprep.subr.mxu0 0.0
        %2148 = vmatpush1.msra.mxu0 0.0
        %2149 = vmatprep.subr.mxu0 0.0
        %2150 = vmatpush1.msra.mxu0 0.0
        %2151 = vmatprep.subr.mxu0 0.0
        %2152 = vmatpush1.msra.mxu0 0.0
        %2153 = vmatprep.subr.mxu0 0.0
        %2154 = vmatpush1.msra.mxu0 0.0
        %2155 = vmatprep.subr.mxu0 0.0
        %2156 = vmatpush1.msra.mxu0 0.0
        %2157 = vmatprep.subr.mxu0 0.0
        %2158 = vmatpush1.msra.mxu0 0.0
        %2159 = vmatprep.subr.mxu0 0.0
        %2160 = vmatpush1.msra.mxu0 0.0
        %2161 = vmatprep.subr.mxu0 0.0
        %2162 = vmatpush1.msra.mxu0 0.0
        %2163 = vmatprep.subr.mxu0 0.0
        %2164 = vmatpush1.msra.mxu0 0.0
        %2165 = vmatprep.subr.mxu0 0.0
        %2166 = vmatpush1.msra.mxu0 0.0
        %2167 = vmatprep.subr.mxu0 0.0
        %2168 = vmatpush1.msra.mxu0 0.0
        %2169 = vmatprep.subr.mxu0 0.0
        %2170 = vmatpush1.msra.mxu0 0.0
        %2171 = vmatprep.subr.mxu0 0.0
        %2172 = vmatpush1.msra.mxu0 0.0
        %2173 = vmatprep.subr.mxu0 0.0
        %2174 = vmatpush1.msra.mxu0 0.0
        %2175 = vmatprep.subr.mxu0 0.0
        %2176 = vmatpush1.msra.mxu0 0.0
        %2177 = vmatprep.subr.mxu0 0.0
        %2178 = vmatpush1.msra.mxu0 0.0
        %2179 = vmatprep.subr.mxu0 0.0
        %2180 = vmatpush1.msra.mxu0 0.0
        %2181 = vmatprep.subr.mxu0 0.0
        %2182 = vmatpush1.msra.mxu0 0.0
        %2183 = vmatprep.subr.mxu0 0.0
        %2184 = vmatpush1.msra.mxu0 0.0
        %2185 = vmatprep.subr.mxu0 0.0
        %2186 = vmatpush1.msra.mxu0 0.0
        %2187 = vmatprep.subr.mxu0 0.0
        %2188 = vmatpush1.msra.mxu0 0.0
        %2189 = vmatprep.subr.mxu0 0.0
        %2190 = vmatpush1.msra.mxu0 0.0
        %2191 = vmatprep.subr.mxu0 0.0
        %2192 = vmatpush1.msra.mxu0 0.0
        %2193 = vmatprep.subr.mxu0 0.0
        %2194 = vmatpush1.msra.mxu0 0.0
        %2195 = vmatprep.subr.mxu0 0.0
        %2196 = vmatpush1.msra.mxu0 0.0
        %2197 = vmatprep.subr.mxu0 0.0
        %2198 = vmatpush1.msra.mxu0 0.0
        %2199 = vmatprep.subr.mxu0 0.0
        %2200 = vmatpush1.msra.mxu0 0.0
        %2201 = vmatprep.subr.mxu0 0.0
        %2202 = vmatpush1.msra.mxu0 0.0
        %2203 = vmatprep.mubr.f32.mxu0 0.0
        %v2204 = vand.u32 %v2136, 4294901760
        %v2205 = vsub.f32 %v2136, %v2204
        %v2206 = vand.u32 %v2205, 4294901760
        %v2207 = vsub.f32 %v2205, %v2206
        %v2208 = vand.u32 %v2207, 4294901760
        %2209 = vmatmul.mubr.f32.gmra.mrb[0].mxu0 %v2208
        %v2210 = vpop.f32.mrb[0].mxu0
        %v2211 = vadd.f32 0.0, %v2210
        %v2212 = vpop.f32.mrb[0].mxu0
        %2213 = vdwg.mxu0
        %2214 = vmatprep.subr.mxu0 0.0
        %v2215 = vand.u32 %v2131, 4294901760
        %v2216 = vsub.f32 %v2131, %v2215
        %v2217 = vand.u32 %v2216, 4294901760
        %v2218 = vsub.f32 %v2216, %v2217
        %v2219 = vand.u32 %v2218, 4294901760
        %2220 = vmatpush1.msra.mxu0 %v2219
        %2221 = vmatprep.subr.mxu0 0.0
        %2222 = vmatpush1.msra.mxu0 0.0
        %2223 = vmatprep.subr.mxu0 0.0
        %2224 = vmatpush1.msra.mxu0 0.0
        %2225 = vmatprep.subr.mxu0 0.0
        %2226 = vmatpush1.msra.mxu0 0.0
        %2227 = vmatprep.subr.mxu0 0.0
        %2228 = vmatpush1.msra.mxu0 0.0
        %2229 = vmatprep.subr.mxu0 0.0
        %2230 = vmatpush1.msra.mxu0 0.0
        %2231 = vmatprep.subr.mxu0 0.0
        %2232 = vmatpush1.msra.mxu0 0.0
        %2233 = vmatprep.subr.mxu0 0.0
        %2234 = vmatpush1.msra.mxu0 0.0
        %2235 = vmatprep.subr.mxu0 0.0
        %2236 = vmatpush1.msra.mxu0 0.0
        %2237 = vmatprep.subr.mxu0 0.0
        %2238 = vmatpush1.msra.mxu0 0.0
        %2239 = vmatprep.subr.mxu0 0.0
        %2240 = vmatpush1.msra.mxu0 0.0
        %2241 = vmatprep.subr.mxu0 0.0
        %2242 = vmatpush1.msra.mxu0 0.0
        %2243 = vmatprep.subr.mxu0 0.0
        %2244 = vmatpush1.msra.mxu0 0.0
        %2245 = vmatprep.subr.mxu0 0.0
        %2246 = vmatpush1.msra.mxu0 0.0
        %2247 = vmatprep.subr.mxu0 0.0
        %2248 = vmatpush1.msra.mxu0 0.0
        %2249 = vmatprep.subr.mxu0 0.0
        %2250 = vmatpush1.msra.mxu0 0.0
        %2251 = vmatprep.subr.mxu0 0.0
        %2252 = vmatpush1.msra.mxu0 0.0
        %2253 = vmatprep.subr.mxu0 0.0
        %2254 = vmatpush1.msra.mxu0 0.0
        %2255 = vmatprep.subr.mxu0 0.0
        %2256 = vmatpush1.msra.mxu0 0.0
        %2257 = vmatprep.subr.mxu0 0.0
        %2258 = vmatpush1.msra.mxu0 0.0
        %2259 = vmatprep.subr.mxu0 0.0
        %2260 = vmatpush1.msra.mxu0 0.0
        %2261 = vmatprep.subr.mxu0 0.0
        %2262 = vmatpush1.msra.mxu0 0.0
        %2263 = vmatprep.subr.mxu0 0.0
        %2264 = vmatpush1.msra.mxu0 0.0
        %2265 = vmatprep.subr.mxu0 0.0
        %2266 = vmatpush1.msra.mxu0 0.0
        %2267 = vmatprep.subr.mxu0 0.0
        %2268 = vmatpush1.msra.mxu0 0.0
        %2269 = vmatprep.subr.mxu0 0.0
        %2270 = vmatpush1.msra.mxu0 0.0
        %2271 = vmatprep.subr.mxu0 0.0
        %2272 = vmatpush1.msra.mxu0 0.0
        %2273 = vmatprep.subr.mxu0 0.0
        %2274 = vmatpush1.msra.mxu0 0.0
        %2275 = vmatprep.subr.mxu0 0.0
        %2276 = vmatpush1.msra.mxu0 0.0
        %2277 = vmatprep.subr.mxu0 0.0
        %2278 = vmatpush1.msra.mxu0 0.0
        %2279 = vmatprep.subr.mxu0 0.0
        %2280 = vmatpush1.msra.mxu0 0.0
        %2281 = vmatprep.subr.mxu0 0.0
        %2282 = vmatpush1.msra.mxu0 0.0
        %2283 = vmatprep.mubr.f32.mxu0 0.0
        %v2284 = vand.u32 %v2136, 4294901760
        %2285 = vmatmul.mubr.f32.gmra.mrb[0].mxu0 %v2284
        %v2286 = vpop.f32.mrb[0].mxu0
        %v2287 = vadd.f32 %v2211, %v2286
        %v2288 = vpop.f32.mrb[0].mxu0
        %2289 = vdwg.mxu0
        %2290 = vmatprep.subr.mxu0 0.0
        %v2291 = vand.u32 %v2131, 4294901760
        %v2292 = vsub.f32 %v2131, %v2291
        %2293 = vmatpush1.msra.mxu0 %v2292
        %2294 = vmatprep.subr.mxu0 0.0
        %2295 = vmatpush1.msra.mxu0 0.0
        %2296 = vmatprep.subr.mxu0 0.0
        %2297 = vmatpush1.msra.mxu0 0.0
        %2298 = vmatprep.subr.mxu0 0.0
        %2299 = vmatpush1.msra.mxu0 0.0
        %2300 = vmatprep.subr.mxu0 0.0
        %2301 = vmatpush1.msra.mxu0 0.0
        %2302 = vmatprep.subr.mxu0 0.0
        %2303 = vmatpush1.msra.mxu0 0.0
        %2304 = vmatprep.subr.mxu0 0.0
        %2305 = vmatpush1.msra.mxu0 0.0
        %2306 = vmatprep.subr.mxu0 0.0
        %2307 = vmatpush1.msra.mxu0 0.0
        %2308 = vmatprep.subr.mxu0 0.0
        %2309 = vmatpush1.msra.mxu0 0.0
        %2310 = vmatprep.subr.mxu0 0.0
        %2311 = vmatpush1.msra.mxu0 0.0
        %2312 = vmatprep.subr.mxu0 0.0
        %2313 = vmatpush1.msra.mxu0 0.0
        %2314 = vmatprep.subr.mxu0 0.0
        %2315 = vmatpush1.msra.mxu0 0.0
        %2316 = vmatprep.subr.mxu0 0.0
        %2317 = vmatpush1.msra.mxu0 0.0
        %2318 = vmatprep.subr.mxu0 0.0
        %2319 = vmatpush1.msra.mxu0 0.0
        %2320 = vmatprep.subr.mxu0 0.0
        %2321 = vmatpush1.msra.mxu0 0.0
        %2322 = vmatprep.subr.mxu0 0.0
        %2323 = vmatpush1.msra.mxu0 0.0
        %2324 = vmatprep.subr.mxu0 0.0
        %2325 = vmatpush1.msra.mxu0 0.0
        %2326 = vmatprep.subr.mxu0 0.0
        %2327 = vmatpush1.msra.mxu0 0.0
        %2328 = vmatprep.subr.mxu0 0.0
        %2329 = vmatpush1.msra.mxu0 0.0
        %2330 = vmatprep.subr.mxu0 0.0
        %2331 = vmatpush1.msra.mxu0 0.0
        %2332 = vmatprep.subr.mxu0 0.0
        %2333 = vmatpush1.msra.mxu0 0.0
        %2334 = vmatprep.subr.mxu0 0.0
        %2335 = vmatpush1.msra.mxu0 0.0
        %2336 = vmatprep.subr.mxu0 0.0
        %2337 = vmatpush1.msra.mxu0 0.0
        %2338 = vmatprep.subr.mxu0 0.0
        %2339 = vmatpush1.msra.mxu0 0.0
        %2340 = vmatprep.subr.mxu0 0.0
        %2341 = vmatpush1.msra.mxu0 0.0
        %2342 = vmatprep.subr.mxu0 0.0
        %2343 = vmatpush1.msra.mxu0 0.0
        %2344 = vmatprep.subr.mxu0 0.0
        %2345 = vmatpush1.msra.mxu0 0.0
        %2346 = vmatprep.subr.mxu0 0.0
        %2347 = vmatpush1.msra.mxu0 0.0
        %2348 = vmatprep.subr.mxu0 0.0
        %2349 = vmatpush1.msra.mxu0 0.0
        %2350 = vmatprep.subr.mxu0 0.0
        %2351 = vmatpush1.msra.mxu0 0.0
        %2352 = vmatprep.subr.mxu0 0.0
        %2353 = vmatpush1.msra.mxu0 0.0
        %2354 = vmatprep.subr.mxu0 0.0
        %2355 = vmatpush1.msra.mxu0 0.0
        %2356 = vmatprep.mubr.f32.mxu0 0.0
        %v2357 = vand.u32 %v2136, 4294901760
        %v2358 = vsub.f32 %v2136, %v2357
        %2359 = vmatmul.mubr.f32.gmra.mrb[0].mxu0 %v2358
        %v2360 = vpop.f32.mrb[0].mxu0
        %v2361 = vadd.f32 %v2287, %v2360
        %v2362 = vpop.f32.mrb[0].mxu0
        %2363 = vdwg.mxu0
        %2364 = vmatprep.subr.mxu0 0.0
        %v2365 = vand.u32 %v2131, 4294901760
        %2366 = vmatpush1.msra.mxu0 %v2365
        %2367 = vmatprep.subr.mxu0 0.0
        %2368 = vmatpush1.msra.mxu0 0.0
        %2369 = vmatprep.subr.mxu0 0.0
        %2370 = vmatpush1.msra.mxu0 0.0
        %2371 = vmatprep.subr.mxu0 0.0
        %2372 = vmatpush1.msra.mxu0 0.0
        %2373 = vmatprep.subr.mxu0 0.0
        %2374 = vmatpush1.msra.mxu0 0.0
        %2375 = vmatprep.subr.mxu0 0.0
        %2376 = vmatpush1.msra.mxu0 0.0
        %2377 = vmatprep.subr.mxu0 0.0
        %2378 = vmatpush1.msra.mxu0 0.0
        %2379 = vmatprep.subr.mxu0 0.0
        %2380 = vmatpush1.msra.mxu0 0.0
        %2381 = vmatprep.subr.mxu0 0.0
        %2382 = vmatpush1.msra.mxu0 0.0
        %2383 = vmatprep.subr.mxu0 0.0
        %2384 = vmatpush1.msra.mxu0 0.0
        %2385 = vmatprep.subr.mxu0 0.0
        %2386 = vmatpush1.msra.mxu0 0.0
        %2387 = vmatprep.subr.mxu0 0.0
        %2388 = vmatpush1.msra.mxu0 0.0
        %2389 = vmatprep.subr.mxu0 0.0
        %2390 = vmatpush1.msra.mxu0 0.0
        %2391 = vmatprep.subr.mxu0 0.0
        %2392 = vmatpush1.msra.mxu0 0.0
        %2393 = vmatprep.subr.mxu0 0.0
        %2394 = vmatpush1.msra.mxu0 0.0
        %2395 = vmatprep.subr.mxu0 0.0
        %2396 = vmatpush1.msra.mxu0 0.0
        %2397 = vmatprep.subr.mxu0 0.0
        %2398 = vmatpush1.msra.mxu0 0.0
        %2399 = vmatprep.subr.mxu0 0.0
        %2400 = vmatpush1.msra.mxu0 0.0
        %2401 = vmatprep.subr.mxu0 0.0
        %2402 = vmatpush1.msra.mxu0 0.0
        %2403 = vmatprep.subr.mxu0 0.0
        %2404 = vmatpush1.msra.mxu0 0.0
        %2405 = vmatprep.subr.mxu0 0.0
        %2406 = vmatpush1.msra.mxu0 0.0
        %2407 = vmatprep.subr.mxu0 0.0
        %2408 = vmatpush1.msra.mxu0 0.0
        %2409 = vmatprep.subr.mxu0 0.0
        %2410 = vmatpush1.msra.mxu0 0.0
        %2411 = vmatprep.subr.mxu0 0.0
        %2412 = vmatpush1.msra.mxu0 0.0
        %2413 = vmatprep.subr.mxu0 0.0
        %2414 = vmatpush1.msra.mxu0 0.0
        %2415 = vmatprep.subr.mxu0 0.0
        %2416 = vmatpush1.msra.mxu0 0.0
        %2417 = vmatprep.subr.mxu0 0.0
        %2418 = vmatpush1.msra.mxu0 0.0
        %2419 = vmatprep.subr.mxu0 0.0
        %2420 = vmatpush1.msra.mxu0 0.0
        %2421 = vmatprep.subr.mxu0 0.0
        %2422 = vmatpush1.msra.mxu0 0.0
        %2423 = vmatprep.subr.mxu0 0.0
        %2424 = vmatpush1.msra.mxu0 0.0
        %2425 = vmatprep.subr.mxu0 0.0
        %2426 = vmatpush1.msra.mxu0 0.0
        %2427 = vmatprep.subr.mxu0 0.0
        %2428 = vmatpush1.msra.mxu0 0.0
        %2429 = vmatprep.mubr.f32.mxu0 0.0
        %v2430 = vand.u32 %v2136, 4294901760
        %v2431 = vsub.f32 %v2136, %v2430
        %v2432 = vand.u32 %v2431, 4294901760
        %2433 = vmatmul.mubr.f32.gmra.mrb[0].mxu0 %v2432
        %v2434 = vpop.f32.mrb[0].mxu0
        %v2435 = vadd.f32 %v2361, %v2434
        %v2436 = vpop.f32.mrb[0].mxu0
        %2437 = vdwg.mxu0
        %2438 = vmatprep.subr.mxu0 0.0
        %v2439 = vand.u32 %v2131, 4294901760
        %v2440 = vsub.f32 %v2131, %v2439
        %v2441 = vand.u32 %v2440, 4294901760
        %2442 = vmatpush1.msra.mxu0 %v2441
        %2443 = vmatprep.subr.mxu0 0.0
        %2444 = vmatpush1.msra.mxu0 0.0
        %2445 = vmatprep.subr.mxu0 0.0
        %2446 = vmatpush1.msra.mxu0 0.0
        %2447 = vmatprep.subr.mxu0 0.0
        %2448 = vmatpush1.msra.mxu0 0.0
        %2449 = vmatprep.subr.mxu0 0.0
        %2450 = vmatpush1.msra.mxu0 0.0
        %2451 = vmatprep.subr.mxu0 0.0
        %2452 = vmatpush1.msra.mxu0 0.0
        %2453 = vmatprep.subr.mxu0 0.0
        %2454 = vmatpush1.msra.mxu0 0.0
        %2455 = vmatprep.subr.mxu0 0.0
        %2456 = vmatpush1.msra.mxu0 0.0
        %2457 = vmatprep.subr.mxu0 0.0
        %2458 = vmatpush1.msra.mxu0 0.0
        %2459 = vmatprep.subr.mxu0 0.0
        %2460 = vmatpush1.msra.mxu0 0.0
        %2461 = vmatprep.subr.mxu0 0.0
        %2462 = vmatpush1.msra.mxu0 0.0
        %2463 = vmatprep.subr.mxu0 0.0
        %2464 = vmatpush1.msra.mxu0 0.0
        %2465 = vmatprep.subr.mxu0 0.0
        %2466 = vmatpush1.msra.mxu0 0.0
        %2467 = vmatprep.subr.mxu0 0.0
        %2468 = vmatpush1.msra.mxu0 0.0
        %2469 = vmatprep.subr.mxu0 0.0
        %2470 = vmatpush1.msra.mxu0 0.0
        %2471 = vmatprep.subr.mxu0 0.0
        %2472 = vmatpush1.msra.mxu0 0.0
        %2473 = vmatprep.subr.mxu0 0.0
        %2474 = vmatpush1.msra.mxu0 0.0
        %2475 = vmatprep.subr.mxu0 0.0
        %2476 = vmatpush1.msra.mxu0 0.0
        %2477 = vmatprep.subr.mxu0 0.0
        %2478 = vmatpush1.msra.mxu0 0.0
        %2479 = vmatprep.subr.mxu0 0.0
        %2480 = vmatpush1.msra.mxu0 0.0
        %2481 = vmatprep.subr.mxu0 0.0
        %2482 = vmatpush1.msra.mxu0 0.0
        %2483 = vmatprep.subr.mxu0 0.0
        %2484 = vmatpush1.msra.mxu0 0.0
        %2485 = vmatprep.subr.mxu0 0.0
        %2486 = vmatpush1.msra.mxu0 0.0
        %2487 = vmatprep.subr.mxu0 0.0
        %2488 = vmatpush1.msra.mxu0 0.0
        %2489 = vmatprep.subr.mxu0 0.0
        %2490 = vmatpush1.msra.mxu0 0.0
        %2491 = vmatprep.subr.mxu0 0.0
        %2492 = vmatpush1.msra.mxu0 0.0
        %2493 = vmatprep.subr.mxu0 0.0
        %2494 = vmatpush1.msra.mxu0 0.0
        %2495 = vmatprep.subr.mxu0 0.0
        %2496 = vmatpush1.msra.mxu0 0.0
        %2497 = vmatprep.subr.mxu0 0.0
        %2498 = vmatpush1.msra.mxu0 0.0
        %2499 = vmatprep.subr.mxu0 0.0
        %2500 = vmatpush1.msra.mxu0 0.0
        %2501 = vmatprep.subr.mxu0 0.0
        %2502 = vmatpush1.msra.mxu0 0.0
        %2503 = vmatprep.subr.mxu0 0.0
        %2504 = vmatpush1.msra.mxu0 0.0
        %2505 = vmatprep.mubr.f32.mxu0 0.0
        %v2506 = vand.u32 %v2136, 4294901760
        %2507 = vmatmul.mubr.f32.gmra.mrb[0].mxu0 %v2506
        %v2508 = vpop.f32.mrb[0].mxu0
        %v2509 = vadd.f32 %v2435, %v2508
        %v2510 = vpop.f32.mrb[0].mxu0
        %2511 = vdwg.mxu0
        %2512 = vmatprep.subr.mxu0 0.0
        %v2513 = vand.u32 %v2131, 4294901760
        %2514 = vmatpush1.msra.mxu0 %v2513
        %2515 = vmatprep.subr.mxu0 0.0
        %2516 = vmatpush1.msra.mxu0 0.0
        %2517 = vmatprep.subr.mxu0 0.0
        %2518 = vmatpush1.msra.mxu0 0.0
        %2519 = vmatprep.subr.mxu0 0.0
        %2520 = vmatpush1.msra.mxu0 0.0
        %2521 = vmatprep.subr.mxu0 0.0
        %2522 = vmatpush1.msra.mxu0 0.0
        %2523 = vmatprep.subr.mxu0 0.0
        %2524 = vmatpush1.msra.mxu0 0.0
        %2525 = vmatprep.subr.mxu0 0.0
        %2526 = vmatpush1.msra.mxu0 0.0
        %2527 = vmatprep.subr.mxu0 0.0
        %2528 = vmatpush1.msra.mxu0 0.0
        %2529 = vmatprep.subr.mxu0 0.0
        %2530 = vmatpush1.msra.mxu0 0.0
        %2531 = vmatprep.subr.mxu0 0.0
        %2532 = vmatpush1.msra.mxu0 0.0
        %2533 = vmatprep.subr.mxu0 0.0
        %2534 = vmatpush1.msra.mxu0 0.0
        %2535 = vmatprep.subr.mxu0 0.0
        %2536 = vmatpush1.msra.mxu0 0.0
        %2537 = vmatprep.subr.mxu0 0.0
        %2538 = vmatpush1.msra.mxu0 0.0
        %2539 = vmatprep.subr.mxu0 0.0
        %2540 = vmatpush1.msra.mxu0 0.0
        %2541 = vmatprep.subr.mxu0 0.0
        %2542 = vmatpush1.msra.mxu0 0.0
        %2543 = vmatprep.subr.mxu0 0.0
        %2544 = vmatpush1.msra.mxu0 0.0
        %2545 = vmatprep.subr.mxu0 0.0
        %2546 = vmatpush1.msra.mxu0 0.0
        %2547 = vmatprep.subr.mxu0 0.0
        %2548 = vmatpush1.msra.mxu0 0.0
        %2549 = vmatprep.subr.mxu0 0.0
        %2550 = vmatpush1.msra.mxu0 0.0
        %2551 = vmatprep.subr.mxu0 0.0
        %2552 = vmatpush1.msra.mxu0 0.0
        %2553 = vmatprep.subr.mxu0 0.0
        %2554 = vmatpush1.msra.mxu0 0.0
        %2555 = vmatprep.subr.mxu0 0.0
        %2556 = vmatpush1.msra.mxu0 0.0
        %2557 = vmatprep.subr.mxu0 0.0
        %2558 = vmatpush1.msra.mxu0 0.0
        %2559 = vmatprep.subr.mxu0 0.0
        %2560 = vmatpush1.msra.mxu0 0.0
        %2561 = vmatprep.subr.mxu0 0.0
        %2562 = vmatpush1.msra.mxu0 0.0
        %2563 = vmatprep.subr.mxu0 0.0
        %2564 = vmatpush1.msra.mxu0 0.0
        %2565 = vmatprep.subr.mxu0 0.0
        %2566 = vmatpush1.msra.mxu0 0.0
        %2567 = vmatprep.subr.mxu0 0.0
        %2568 = vmatpush1.msra.mxu0 0.0
        %2569 = vmatprep.subr.mxu0 0.0
        %2570 = vmatpush1.msra.mxu0 0.0
        %2571 = vmatprep.subr.mxu0 0.0
        %2572 = vmatpush1.msra.mxu0 0.0
        %2573 = vmatprep.subr.mxu0 0.0
        %2574 = vmatpush1.msra.mxu0 0.0
        %2575 = vmatprep.subr.mxu0 0.0
        %2576 = vmatpush1.msra.mxu0 0.0
        %2577 = vmatprep.mubr.f32.mxu0 0.0
        %v2578 = vand.u32 %v2136, 4294901760
        %2579 = vmatmul.mubr.f32.gmra.mrb[0].mxu0 %v2578
        %v2580 = vpop.f32.mrb[0].mxu0
        %v2581 = vadd.f32 %v2509, %v2580
        %v2582 = vpop.f32.mrb[0].mxu0
        %2583 = vdwg.mxu0
        %v2585 = vsel %vm274, %v2126, 0
        %2587 = vmatprep.subr.mxu0 0.0
        %v2588 = vand.u32 %v2132, 4294901760
        %2589 = vmatpush1.msra.mxu0 %v2588
        %2590 = vmatprep.subr.mxu0 0.0
        %2591 = vmatpush1.msra.mxu0 0.0
        %2592 = vmatprep.subr.mxu0 0.0
        %2593 = vmatpush1.msra.mxu0 0.0
        %2594 = vmatprep.subr.mxu0 0.0
        %2595 = vmatpush1.msra.mxu0 0.0
        %2596 = vmatprep.subr.mxu0 0.0
        %2597 = vmatpush1.msra.mxu0 0.0
        %2598 = vmatprep.subr.mxu0 0.0
        %2599 = vmatpush1.msra.mxu0 0.0
        %2600 = vmatprep.subr.mxu0 0.0
        %2601 = vmatpush1.msra.mxu0 0.0
        %2602 = vmatprep.subr.mxu0 0.0
        %2603 = vmatpush1.msra.mxu0 0.0
        %2604 = vmatprep.subr.mxu0 0.0
        %2605 = vmatpush1.msra.mxu0 0.0
        %2606 = vmatprep.subr.mxu0 0.0
        %2607 = vmatpush1.msra.mxu0 0.0
        %2608 = vmatprep.subr.mxu0 0.0
        %2609 = vmatpush1.msra.mxu0 0.0
        %2610 = vmatprep.subr.mxu0 0.0
        %2611 = vmatpush1.msra.mxu0 0.0
        %2612 = vmatprep.subr.mxu0 0.0
        %2613 = vmatpush1.msra.mxu0 0.0
        %2614 = vmatprep.subr.mxu0 0.0
        %2615 = vmatpush1.msra.mxu0 0.0
        %2616 = vmatprep.subr.mxu0 0.0
        %2617 = vmatpush1.msra.mxu0 0.0
        %2618 = vmatprep.subr.mxu0 0.0
        %2619 = vmatpush1.msra.mxu0 0.0
        %2620 = vmatprep.subr.mxu0 0.0
        %2621 = vmatpush1.msra.mxu0 0.0
        %2622 = vmatprep.subr.mxu0 0.0
        %2623 = vmatpush1.msra.mxu0 0.0
        %2624 = vmatprep.subr.mxu0 0.0
        %2625 = vmatpush1.msra.mxu0 0.0
        %2626 = vmatprep.subr.mxu0 0.0
        %2627 = vmatpush1.msra.mxu0 0.0
        %2628 = vmatprep.subr.mxu0 0.0
        %2629 = vmatpush1.msra.mxu0 0.0
        %2630 = vmatprep.subr.mxu0 0.0
        %2631 = vmatpush1.msra.mxu0 0.0
        %2632 = vmatprep.subr.mxu0 0.0
        %2633 = vmatpush1.msra.mxu0 0.0
        %2634 = vmatprep.subr.mxu0 0.0
        %2635 = vmatpush1.msra.mxu0 0.0
        %2636 = vmatprep.subr.mxu0 0.0
        %2637 = vmatpush1.msra.mxu0 0.0
        %2638 = vmatprep.subr.mxu0 0.0
        %2639 = vmatpush1.msra.mxu0 0.0
        %2640 = vmatprep.subr.mxu0 0.0
        %2641 = vmatpush1.msra.mxu0 0.0
        %2642 = vmatprep.subr.mxu0 0.0
        %2643 = vmatpush1.msra.mxu0 0.0
        %2644 = vmatprep.subr.mxu0 0.0
        %2645 = vmatpush1.msra.mxu0 0.0
        %2646 = vmatprep.subr.mxu0 0.0
        %2647 = vmatpush1.msra.mxu0 0.0
        %2648 = vmatprep.subr.mxu0 0.0
        %2649 = vmatpush1.msra.mxu0 0.0
        %2650 = vmatprep.subr.mxu0 0.0
        %2651 = vmatpush1.msra.mxu0 0.0
        %2652 = vmatprep.mubr.f32.mxu0 0.0
        %v2653 = vand.u32 %v2585, 4294901760
        %v2654 = vsub.f32 %v2585, %v2653
        %v2655 = vand.u32 %v2654, 4294901760
        %v2656 = vsub.f32 %v2654, %v2655
        %v2657 = vand.u32 %v2656, 4294901760
        %2658 = vmatmul.mubr.f32.gmra.mrb[0].mxu0 %v2657
        %v2659 = vpop.f32.mrb[0].mxu0
        %v2660 = vadd.f32 0.0, %v2659
        %v2661 = vpop.f32.mrb[0].mxu0
        %2662 = vdwg.mxu0
        %2663 = vmatprep.subr.mxu0 0.0
        %v2664 = vand.u32 %v2132, 4294901760
        %v2665 = vsub.f32 %v2132, %v2664
        %v2666 = vand.u32 %v2665, 4294901760
        %v2667 = vsub.f32 %v2665, %v2666
        %v2668 = vand.u32 %v2667, 4294901760
        %2669 = vmatpush1.msra.mxu0 %v2668
        %2670 = vmatprep.subr.mxu0 0.0
        %2671 = vmatpush1.msra.mxu0 0.0
        %2672 = vmatprep.subr.mxu0 0.0
        %2673 = vmatpush1.msra.mxu0 0.0
        %2674 = vmatprep.subr.mxu0 0.0
        %2675 = vmatpush1.msra.mxu0 0.0
        %2676 = vmatprep.subr.mxu0 0.0
        %2677 = vmatpush1.msra.mxu0 0.0
        %2678 = vmatprep.subr.mxu0 0.0
        %2679 = vmatpush1.msra.mxu0 0.0
        %2680 = vmatprep.subr.mxu0 0.0
        %2681 = vmatpush1.msra.mxu0 0.0
        %2682 = vmatprep.subr.mxu0 0.0
        %2683 = vmatpush1.msra.mxu0 0.0
        %2684 = vmatprep.subr.mxu0 0.0
        %2685 = vmatpush1.msra.mxu0 0.0
        %2686 = vmatprep.subr.mxu0 0.0
        %2687 = vmatpush1.msra.mxu0 0.0
        %2688 = vmatprep.subr.mxu0 0.0
        %2689 = vmatpush1.msra.mxu0 0.0
        %2690 = vmatprep.subr.mxu0 0.0
        %2691 = vmatpush1.msra.mxu0 0.0
        %2692 = vmatprep.subr.mxu0 0.0
        %2693 = vmatpush1.msra.mxu0 0.0
        %2694 = vmatprep.subr.mxu0 0.0
        %2695 = vmatpush1.msra.mxu0 0.0
        %2696 = vmatprep.subr.mxu0 0.0
        %2697 = vmatpush1.msra.mxu0 0.0
        %2698 = vmatprep.subr.mxu0 0.0
        %2699 = vmatpush1.msra.mxu0 0.0
        %2700 = vmatprep.subr.mxu0 0.0
        %2701 = vmatpush1.msra.mxu0 0.0
        %2702 = vmatprep.subr.mxu0 0.0
        %2703 = vmatpush1.msra.mxu0 0.0
        %2704 = vmatprep.subr.mxu0 0.0
        %2705 = vmatpush1.msra.mxu0 0.0
        %2706 = vmatprep.subr.mxu0 0.0
        %2707 = vmatpush1.msra.mxu0 0.0
        %2708 = vmatprep.subr.mxu0 0.0
        %2709 = vmatpush1.msra.mxu0 0.0
        %2710 = vmatprep.subr.mxu0 0.0
        %2711 = vmatpush1.msra.mxu0 0.0
        %2712 = vmatprep.subr.mxu0 0.0
        %2713 = vmatpush1.msra.mxu0 0.0
        %2714 = vmatprep.subr.mxu0 0.0
        %2715 = vmatpush1.msra.mxu0 0.0
        %2716 = vmatprep.subr.mxu0 0.0
        %2717 = vmatpush1.msra.mxu0 0.0
        %2718 = vmatprep.subr.mxu0 0.0
        %2719 = vmatpush1.msra.mxu0 0.0
        %2720 = vmatprep.subr.mxu0 0.0
        %2721 = vmatpush1.msra.mxu0 0.0
        %2722 = vmatprep.subr.mxu0 0.0
        %2723 = vmatpush1.msra.mxu0 0.0
        %2724 = vmatprep.subr.mxu0 0.0
        %2725 = vmatpush1.msra.mxu0 0.0
        %2726 = vmatprep.subr.mxu0 0.0
        %2727 = vmatpush1.msra.mxu0 0.0
        %2728 = vmatprep.subr.mxu0 0.0
        %2729 = vmatpush1.msra.mxu0 0.0
        %2730 = vmatprep.subr.mxu0 0.0
        %2731 = vmatpush1.msra.mxu0 0.0
        %2732 = vmatprep.mubr.f32.mxu0 0.0
        %v2733 = vand.u32 %v2585, 4294901760
        %2734 = vmatmul.mubr.f32.gmra.mrb[0].mxu0 %v2733
        %v2735 = vpop.f32.mrb[0].mxu0
        %v2736 = vadd.f32 %v2660, %v2735
        %v2737 = vpop.f32.mrb[0].mxu0
        %2738 = vdwg.mxu0
        %2739 = vmatprep.subr.mxu0 0.0
        %v2740 = vand.u32 %v2132, 4294901760
        %v2741 = vsub.f32 %v2132, %v2740
        %2742 = vmatpush1.msra.mxu0 %v2741
        %2743 = vmatprep.subr.mxu0 0.0
        %2744 = vmatpush1.msra.mxu0 0.0
        %2745 = vmatprep.subr.mxu0 0.0
        %2746 = vmatpush1.msra.mxu0 0.0
        %2747 = vmatprep.subr.mxu0 0.0
        %2748 = vmatpush1.msra.mxu0 0.0
        %2749 = vmatprep.subr.mxu0 0.0
        %2750 = vmatpush1.msra.mxu0 0.0
        %2751 = vmatprep.subr.mxu0 0.0
        %2752 = vmatpush1.msra.mxu0 0.0
        %2753 = vmatprep.subr.mxu0 0.0
        %2754 = vmatpush1.msra.mxu0 0.0
        %2755 = vmatprep.subr.mxu0 0.0
        %2756 = vmatpush1.msra.mxu0 0.0
        %2757 = vmatprep.subr.mxu0 0.0
        %2758 = vmatpush1.msra.mxu0 0.0
        %2759 = vmatprep.subr.mxu0 0.0
        %2760 = vmatpush1.msra.mxu0 0.0
        %2761 = vmatprep.subr.mxu0 0.0
        %2762 = vmatpush1.msra.mxu0 0.0
        %2763 = vmatprep.subr.mxu0 0.0
        %2764 = vmatpush1.msra.mxu0 0.0
        %2765 = vmatprep.subr.mxu0 0.0
        %2766 = vmatpush1.msra.mxu0 0.0
        %2767 = vmatprep.subr.mxu0 0.0
        %2768 = vmatpush1.msra.mxu0 0.0
        %2769 = vmatprep.subr.mxu0 0.0
        %2770 = vmatpush1.msra.mxu0 0.0
        %2771 = vmatprep.subr.mxu0 0.0
        %2772 = vmatpush1.msra.mxu0 0.0
        %2773 = vmatprep.subr.mxu0 0.0
        %2774 = vmatpush1.msra.mxu0 0.0
        %2775 = vmatprep.subr.mxu0 0.0
        %2776 = vmatpush1.msra.mxu0 0.0
        %2777 = vmatprep.subr.mxu0 0.0
        %2778 = vmatpush1.msra.mxu0 0.0
        %2779 = vmatprep.subr.mxu0 0.0
        %2780 = vmatpush1.msra.mxu0 0.0
        %2781 = vmatprep.subr.mxu0 0.0
        %2782 = vmatpush1.msra.mxu0 0.0
        %2783 = vmatprep.subr.mxu0 0.0
        %2784 = vmatpush1.msra.mxu0 0.0
        %2785 = vmatprep.subr.mxu0 0.0
        %2786 = vmatpush1.msra.mxu0 0.0
        %2787 = vmatprep.subr.mxu0 0.0
        %2788 = vmatpush1.msra.mxu0 0.0
        %2789 = vmatprep.subr.mxu0 0.0
        %2790 = vmatpush1.msra.mxu0 0.0
        %2791 = vmatprep.subr.mxu0 0.0
        %2792 = vmatpush1.msra.mxu0 0.0
        %2793 = vmatprep.subr.mxu0 0.0
        %2794 = vmatpush1.msra.mxu0 0.0
        %2795 = vmatprep.subr.mxu0 0.0
        %2796 = vmatpush1.msra.mxu0 0.0
        %2797 = vmatprep.subr.mxu0 0.0
        %2798 = vmatpush1.msra.mxu0 0.0
        %2799 = vmatprep.subr.mxu0 0.0
        %2800 = vmatpush1.msra.mxu0 0.0
        %2801 = vmatprep.subr.mxu0 0.0
        %2802 = vmatpush1.msra.mxu0 0.0
        %2803 = vmatprep.subr.mxu0 0.0
        %2804 = vmatpush1.msra.mxu0 0.0
        %2805 = vmatprep.mubr.f32.mxu0 0.0
        %v2806 = vand.u32 %v2585, 4294901760
        %v2807 = vsub.f32 %v2585, %v2806
        %2808 = vmatmul.mubr.f32.gmra.mrb[0].mxu0 %v2807
        %v2809 = vpop.f32.mrb[0].mxu0
        %v2810 = vadd.f32 %v2736, %v2809
        %v2811 = vpop.f32.mrb[0].mxu0
        %2812 = vdwg.mxu0
        %2813 = vmatprep.subr.mxu0 0.0
        %v2814 = vand.u32 %v2132, 4294901760
        %2815 = vmatpush1.msra.mxu0 %v2814
        %2816 = vmatprep.subr.mxu0 0.0
        %2817 = vmatpush1.msra.mxu0 0.0
        %2818 = vmatprep.subr.mxu0 0.0
        %2819 = vmatpush1.msra.mxu0 0.0
        %2820 = vmatprep.subr.mxu0 0.0
        %2821 = vmatpush1.msra.mxu0 0.0
        %2822 = vmatprep.subr.mxu0 0.0
        %2823 = vmatpush1.msra.mxu0 0.0
        %2824 = vmatprep.subr.mxu0 0.0
        %2825 = vmatpush1.msra.mxu0 0.0
        %2826 = vmatprep.subr.mxu0 0.0
        %2827 = vmatpush1.msra.mxu0 0.0
        %2828 = vmatprep.subr.mxu0 0.0
        %2829 = vmatpush1.msra.mxu0 0.0
        %2830 = vmatprep.subr.mxu0 0.0
        %2831 = vmatpush1.msra.mxu0 0.0
        %2832 = vmatprep.subr.mxu0 0.0
        %2833 = vmatpush1.msra.mxu0 0.0
        %2834 = vmatprep.subr.mxu0 0.0
        %2835 = vmatpush1.msra.mxu0 0.0
        %2836 = vmatprep.subr.mxu0 0.0
        %2837 = vmatpush1.msra.mxu0 0.0
        %2838 = vmatprep.subr.mxu0 0.0
        %2839 = vmatpush1.msra.mxu0 0.0
        %2840 = vmatprep.subr.mxu0 0.0
        %2841 = vmatpush1.msra.mxu0 0.0
        %2842 = vmatprep.subr.mxu0 0.0
        %2843 = vmatpush1.msra.mxu0 0.0
        %2844 = vmatprep.subr.mxu0 0.0
        %2845 = vmatpush1.msra.mxu0 0.0
        %2846 = vmatprep.subr.mxu0 0.0
        %2847 = vmatpush1.msra.mxu0 0.0
        %2848 = vmatprep.subr.mxu0 0.0
        %2849 = vmatpush1.msra.mxu0 0.0
        %2850 = vmatprep.subr.mxu0 0.0
        %2851 = vmatpush1.msra.mxu0 0.0
        %2852 = vmatprep.subr.mxu0 0.0
        %2853 = vmatpush1.msra.mxu0 0.0
        %2854 = vmatprep.subr.mxu0 0.0
        %2855 = vmatpush1.msra.mxu0 0.0
        %2856 = vmatprep.subr.mxu0 0.0
        %2857 = vmatpush1.msra.mxu0 0.0
        %2858 = vmatprep.subr.mxu0 0.0
        %2859 = vmatpush1.msra.mxu0 0.0
        %2860 = vmatprep.subr.mxu0 0.0
        %2861 = vmatpush1.msra.mxu0 0.0
        %2862 = vmatprep.subr.mxu0 0.0
        %2863 = vmatpush1.msra.mxu0 0.0
        %2864 = vmatprep.subr.mxu0 0.0
        %2865 = vmatpush1.msra.mxu0 0.0
        %2866 = vmatprep.subr.mxu0 0.0
        %2867 = vmatpush1.msra.mxu0 0.0
        %2868 = vmatprep.subr.mxu0 0.0
        %2869 = vmatpush1.msra.mxu0 0.0
        %2870 = vmatprep.subr.mxu0 0.0
        %2871 = vmatpush1.msra.mxu0 0.0
        %2872 = vmatprep.subr.mxu0 0.0
        %2873 = vmatpush1.msra.mxu0 0.0
        %2874 = vmatprep.subr.mxu0 0.0
        %2875 = vmatpush1.msra.mxu0 0.0
        %2876 = vmatprep.subr.mxu0 0.0
        %2877 = vmatpush1.msra.mxu0 0.0
        %2878 = vmatprep.mubr.f32.mxu0 0.0
        %v2879 = vand.u32 %v2585, 4294901760
        %v2880 = vsub.f32 %v2585, %v2879
        %v2881 = vand.u32 %v2880, 4294901760
        %2882 = vmatmul.mubr.f32.gmra.mrb[0].mxu0 %v2881
        %v2883 = vpop.f32.mrb[0].mxu0
        %v2884 = vadd.f32 %v2810, %v2883
        %v2885 = vpop.f32.mrb[0].mxu0
        %2886 = vdwg.mxu0
        %2887 = vmatprep.subr.mxu0 0.0
        %v2888 = vand.u32 %v2132, 4294901760
        %v2889 = vsub.f32 %v2132, %v2888
        %v2890 = vand.u32 %v2889, 4294901760
        %2891 = vmatpush1.msra.mxu0 %v2890
        %2892 = vmatprep.subr.mxu0 0.0
        %2893 = vmatpush1.msra.mxu0 0.0
        %2894 = vmatprep.subr.mxu0 0.0
        %2895 = vmatpush1.msra.mxu0 0.0
        %2896 = vmatprep.subr.mxu0 0.0
        %2897 = vmatpush1.msra.mxu0 0.0
        %2898 = vmatprep.subr.mxu0 0.0
        %2899 = vmatpush1.msra.mxu0 0.0
        %2900 = vmatprep.subr.mxu0 0.0
        %2901 = vmatpush1.msra.mxu0 0.0
        %2902 = vmatprep.subr.mxu0 0.0
        %2903 = vmatpush1.msra.mxu0 0.0
        %2904 = vmatprep.subr.mxu0 0.0
        %2905 = vmatpush1.msra.mxu0 0.0
        %2906 = vmatprep.subr.mxu0 0.0
        %2907 = vmatpush1.msra.mxu0 0.0
        %2908 = vmatprep.subr.mxu0 0.0
        %2909 = vmatpush1.msra.mxu0 0.0
        %2910 = vmatprep.subr.mxu0 0.0
        %2911 = vmatpush1.msra.mxu0 0.0
        %2912 = vmatprep.subr.mxu0 0.0
        %2913 = vmatpush1.msra.mxu0 0.0
        %2914 = vmatprep.subr.mxu0 0.0
        %2915 = vmatpush1.msra.mxu0 0.0
        %2916 = vmatprep.subr.mxu0 0.0
        %2917 = vmatpush1.msra.mxu0 0.0
        %2918 = vmatprep.subr.mxu0 0.0
        %2919 = vmatpush1.msra.mxu0 0.0
        %2920 = vmatprep.subr.mxu0 0.0
        %2921 = vmatpush1.msra.mxu0 0.0
        %2922 = vmatprep.subr.mxu0 0.0
        %2923 = vmatpush1.msra.mxu0 0.0
        %2924 = vmatprep.subr.mxu0 0.0
        %2925 = vmatpush1.msra.mxu0 0.0
        %2926 = vmatprep.subr.mxu0 0.0
        %2927 = vmatpush1.msra.mxu0 0.0
        %2928 = vmatprep.subr.mxu0 0.0
        %2929 = vmatpush1.msra.mxu0 0.0
        %2930 = vmatprep.subr.mxu0 0.0
        %2931 = vmatpush1.msra.mxu0 0.0
        %2932 = vmatprep.subr.mxu0 0.0
        %2933 = vmatpush1.msra.mxu0 0.0
        %2934 = vmatprep.subr.mxu0 0.0
        %2935 = vmatpush1.msra.mxu0 0.0
        %2936 = vmatprep.subr.mxu0 0.0
        %2937 = vmatpush1.msra.mxu0 0.0
        %2938 = vmatprep.subr.mxu0 0.0
        %2939 = vmatpush1.msra.mxu0 0.0
        %2940 = vmatprep.subr.mxu0 0.0
        %2941 = vmatpush1.msra.mxu0 0.0
        %2942 = vmatprep.subr.mxu0 0.0
        %2943 = vmatpush1.msra.mxu0 0.0
        %2944 = vmatprep.subr.mxu0 0.0
        %2945 = vmatpush1.msra.mxu0 0.0
        %2946 = vmatprep.subr.mxu0 0.0
        %2947 = vmatpush1.msra.mxu0 0.0
        %2948 = vmatprep.subr.mxu0 0.0
        %2949 = vmatpush1.msra.mxu0 0.0
        %2950 = vmatprep.subr.mxu0 0.0
        %2951 = vmatpush1.msra.mxu0 0.0
        %2952 = vmatprep.subr.mxu0 0.0
        %2953 = vmatpush1.msra.mxu0 0.0
        %2954 = vmatprep.mubr.f32.mxu0 0.0
        %v2955 = vand.u32 %v2585, 4294901760
        %2956 = vmatmul.mubr.f32.gmra.mrb[0].mxu0 %v2955
        %v2957 = vpop.f32.mrb[0].mxu0
        %v2958 = vadd.f32 %v2884, %v2957
        %v2959 = vpop.f32.mrb[0].mxu0
        %2960 = vdwg.mxu0
        %2961 = vmatprep.subr.mxu0 0.0
        %v2962 = vand.u32 %v2132, 4294901760
        %2963 = vmatpush1.msra.mxu0 %v2962
        %2964 = vmatprep.subr.mxu0 0.0
        %2965 = vmatpush1.msra.mxu0 0.0
        %2966 = vmatprep.subr.mxu0 0.0
        %2967 = vmatpush1.msra.mxu0 0.0
        %2968 = vmatprep.subr.mxu0 0.0
        %2969 = vmatpush1.msra.mxu0 0.0
        %2970 = vmatprep.subr.mxu0 0.0
        %2971 = vmatpush1.msra.mxu0 0.0
        %2972 = vmatprep.subr.mxu0 0.0
        %2973 = vmatpush1.msra.mxu0 0.0
        %2974 = vmatprep.subr.mxu0 0.0
        %2975 = vmatpush1.msra.mxu0 0.0
        %2976 = vmatprep.subr.mxu0 0.0
        %2977 = vmatpush1.msra.mxu0 0.0
        %2978 = vmatprep.subr.mxu0 0.0
        %2979 = vmatpush1.msra.mxu0 0.0
        %2980 = vmatprep.subr.mxu0 0.0
        %2981 = vmatpush1.msra.mxu0 0.0
        %2982 = vmatprep.subr.mxu0 0.0
        %2983 = vmatpush1.msra.mxu0 0.0
        %2984 = vmatprep.subr.mxu0 0.0
        %2985 = vmatpush1.msra.mxu0 0.0
        %2986 = vmatprep.subr.mxu0 0.0
        %2987 = vmatpush1.msra.mxu0 0.0
        %2988 = vmatprep.subr.mxu0 0.0
        %2989 = vmatpush1.msra.mxu0 0.0
        %2990 = vmatprep.subr.mxu0 0.0
        %2991 = vmatpush1.msra.mxu0 0.0
        %2992 = vmatprep.subr.mxu0 0.0
        %2993 = vmatpush1.msra.mxu0 0.0
        %2994 = vmatprep.subr.mxu0 0.0
        %2995 = vmatpush1.msra.mxu0 0.0
        %2996 = vmatprep.subr.mxu0 0.0
        %2997 = vmatpush1.msra.mxu0 0.0
        %2998 = vmatprep.subr.mxu0 0.0
        %2999 = vmatpush1.msra.mxu0 0.0
        %3000 = vmatprep.subr.mxu0 0.0
        %3001 = vmatpush1.msra.mxu0 0.0
        %3002 = vmatprep.subr.mxu0 0.0
        %3003 = vmatpush1.msra.mxu0 0.0
        %3004 = vmatprep.subr.mxu0 0.0
        %3005 = vmatpush1.msra.mxu0 0.0
        %3006 = vmatprep.subr.mxu0 0.0
        %3007 = vmatpush1.msra.mxu0 0.0
        %3008 = vmatprep.subr.mxu0 0.0
        %3009 = vmatpush1.msra.mxu0 0.0
        %3010 = vmatprep.subr.mxu0 0.0
        %3011 = vmatpush1.msra.mxu0 0.0
        %3012 = vmatprep.subr.mxu0 0.0
        %3013 = vmatpush1.msra.mxu0 0.0
        %3014 = vmatprep.subr.mxu0 0.0
        %3015 = vmatpush1.msra.mxu0 0.0
        %3016 = vmatprep.subr.mxu0 0.0
        %3017 = vmatpush1.msra.mxu0 0.0
        %3018 = vmatprep.subr.mxu0 0.0
        %3019 = vmatpush1.msra.mxu0 0.0
        %3020 = vmatprep.subr.mxu0 0.0
        %3021 = vmatpush1.msra.mxu0 0.0
        %3022 = vmatprep.subr.mxu0 0.0
        %3023 = vmatpush1.msra.mxu0 0.0
        %3024 = vmatprep.subr.mxu0 0.0
        %3025 = vmatpush1.msra.mxu0 0.0
        %3026 = vmatprep.mubr.f32.mxu0 0.0
        %v3027 = vand.u32 %v2585, 4294901760
        %3028 = vmatmul.mubr.f32.gmra.mrb[0].mxu0 %v3027
        %v3029 = vpop.f32.mrb[0].mxu0
        %v3030 = vadd.f32 %v2958, %v3029
        %v3031 = vpop.f32.mrb[0].mxu0
        %3032 = vdwg.mxu0
        %v3034 = vsel %vm274, %v2128, 0
        %3036 = vmatprep.subr.mxu0 0.0
        %v3037 = vand.u32 %v2133, 4294901760
        %3038 = vmatpush1.msra.mxu0 %v3037
        %3039 = vmatprep.subr.mxu0 0.0
        %3040 = vmatpush1.msra.mxu0 0.0
        %3041 = vmatprep.subr.mxu0 0.0
        %3042 = vmatpush1.msra.mxu0 0.0
        %3043 = vmatprep.subr.mxu0 0.0
        %3044 = vmatpush1.msra.mxu0 0.0
        %3045 = vmatprep.subr.mxu0 0.0
        %3046 = vmatpush1.msra.mxu0 0.0
        %3047 = vmatprep.subr.mxu0 0.0
        %3048 = vmatpush1.msra.mxu0 0.0
        %3049 = vmatprep.subr.mxu0 0.0
        %3050 = vmatpush1.msra.mxu0 0.0
        %3051 = vmatprep.subr.mxu0 0.0
        %3052 = vmatpush1.msra.mxu0 0.0
        %3053 = vmatprep.subr.mxu0 0.0
        %3054 = vmatpush1.msra.mxu0 0.0
        %3055 = vmatprep.subr.mxu0 0.0
        %3056 = vmatpush1.msra.mxu0 0.0
        %3057 = vmatprep.subr.mxu0 0.0
        %3058 = vmatpush1.msra.mxu0 0.0
        %3059 = vmatprep.subr.mxu0 0.0
        %3060 = vmatpush1.msra.mxu0 0.0
        %3061 = vmatprep.subr.mxu0 0.0
        %3062 = vmatpush1.msra.mxu0 0.0
        %3063 = vmatprep.subr.mxu0 0.0
        %3064 = vmatpush1.msra.mxu0 0.0
        %3065 = vmatprep.subr.mxu0 0.0
        %3066 = vmatpush1.msra.mxu0 0.0
        %3067 = vmatprep.subr.mxu0 0.0
        %3068 = vmatpush1.msra.mxu0 0.0
        %3069 = vmatprep.subr.mxu0 0.0
        %3070 = vmatpush1.msra.mxu0 0.0
        %3071 = vmatprep.subr.mxu0 0.0
        %3072 = vmatpush1.msra.mxu0 0.0
        %3073 = vmatprep.subr.mxu0 0.0
        %3074 = vmatpush1.msra.mxu0 0.0
        %3075 = vmatprep.subr.mxu0 0.0
        %3076 = vmatpush1.msra.mxu0 0.0
        %3077 = vmatprep.subr.mxu0 0.0
        %3078 = vmatpush1.msra.mxu0 0.0
        %3079 = vmatprep.subr.mxu0 0.0
        %3080 = vmatpush1.msra.mxu0 0.0
        %3081 = vmatprep.subr.mxu0 0.0
        %3082 = vmatpush1.msra.mxu0 0.0
        %3083 = vmatprep.subr.mxu0 0.0
        %3084 = vmatpush1.msra.mxu0 0.0
        %3085 = vmatprep.subr.mxu0 0.0
        %3086 = vmatpush1.msra.mxu0 0.0
        %3087 = vmatprep.subr.mxu0 0.0
        %3088 = vmatpush1.msra.mxu0 0.0
        %3089 = vmatprep.subr.mxu0 0.0
        %3090 = vmatpush1.msra.mxu0 0.0
        %3091 = vmatprep.subr.mxu0 0.0
        %3092 = vmatpush1.msra.mxu0 0.0
        %3093 = vmatprep.subr.mxu0 0.0
        %3094 = vmatpush1.msra.mxu0 0.0
        %3095 = vmatprep.subr.mxu0 0.0
        %3096 = vmatpush1.msra.mxu0 0.0
        %3097 = vmatprep.subr.mxu0 0.0
        %3098 = vmatpush1.msra.mxu0 0.0
        %3099 = vmatprep.subr.mxu0 0.0
        %3100 = vmatpush1.msra.mxu0 0.0
        %3101 = vmatprep.mubr.f32.mxu0 0.0
        %v3102 = vand.u32 %v3034, 4294901760
        %v3103 = vsub.f32 %v3034, %v3102
        %v3104 = vand.u32 %v3103, 4294901760
        %v3105 = vsub.f32 %v3103, %v3104
        %v3106 = vand.u32 %v3105, 4294901760
        %3107 = vmatmul.mubr.f32.gmra.mrb[0].mxu0 %v3106
        %v3108 = vpop.f32.mrb[0].mxu0
        %v3109 = vadd.f32 0.0, %v3108
        %v3110 = vpop.f32.mrb[0].mxu0
        %3111 = vdwg.mxu0
        %3112 = vmatprep.subr.mxu0 0.0
        %v3113 = vand.u32 %v2133, 4294901760
        %v3114 = vsub.f32 %v2133, %v3113
        %v3115 = vand.u32 %v3114, 4294901760
        %v3116 = vsub.f32 %v3114, %v3115
        %v3117 = vand.u32 %v3116, 4294901760
        %3118 = vmatpush1.msra.mxu0 %v3117
        %3119 = vmatprep.subr.mxu0 0.0
        %3120 = vmatpush1.msra.mxu0 0.0
        %3121 = vmatprep.subr.mxu0 0.0
        %3122 = vmatpush1.msra.mxu0 0.0
        %3123 = vmatprep.subr.mxu0 0.0
        %3124 = vmatpush1.msra.mxu0 0.0
        %3125 = vmatprep.subr.mxu0 0.0
        %3126 = vmatpush1.msra.mxu0 0.0
        %3127 = vmatprep.subr.mxu0 0.0
        %3128 = vmatpush1.msra.mxu0 0.0
        %3129 = vmatprep.subr.mxu0 0.0
        %3130 = vmatpush1.msra.mxu0 0.0
        %3131 = vmatprep.subr.mxu0 0.0
        %3132 = vmatpush1.msra.mxu0 0.0
        %3133 = vmatprep.subr.mxu0 0.0
        %3134 = vmatpush1.msra.mxu0 0.0
        %3135 = vmatprep.subr.mxu0 0.0
        %3136 = vmatpush1.msra.mxu0 0.0
        %3137 = vmatprep.subr.mxu0 0.0
        %3138 = vmatpush1.msra.mxu0 0.0
        %3139 = vmatprep.subr.mxu0 0.0
        %3140 = vmatpush1.msra.mxu0 0.0
        %3141 = vmatprep.subr.mxu0 0.0
        %3142 = vmatpush1.msra.mxu0 0.0
        %3143 = vmatprep.subr.mxu0 0.0
        %3144 = vmatpush1.msra.mxu0 0.0
        %3145 = vmatprep.subr.mxu0 0.0
        %3146 = vmatpush1.msra.mxu0 0.0
        %3147 = vmatprep.subr.mxu0 0.0
        %3148 = vmatpush1.msra.mxu0 0.0
        %3149 = vmatprep.subr.mxu0 0.0
        %3150 = vmatpush1.msra.mxu0 0.0
        %3151 = vmatprep.subr.mxu0 0.0
        %3152 = vmatpush1.msra.mxu0 0.0
        %3153 = vmatprep.subr.mxu0 0.0
        %3154 = vmatpush1.msra.mxu0 0.0
        %3155 = vmatprep.subr.mxu0 0.0
        %3156 = vmatpush1.msra.mxu0 0.0
        %3157 = vmatprep.subr.mxu0 0.0
        %3158 = vmatpush1.msra.mxu0 0.0
        %3159 = vmatprep.subr.mxu0 0.0
        %3160 = vmatpush1.msra.mxu0 0.0
        %3161 = vmatprep.subr.mxu0 0.0
        %3162 = vmatpush1.msra.mxu0 0.0
        %3163 = vmatprep.subr.mxu0 0.0
        %3164 = vmatpush1.msra.mxu0 0.0
        %3165 = vmatprep.subr.mxu0 0.0
        %3166 = vmatpush1.msra.mxu0 0.0
        %3167 = vmatprep.subr.mxu0 0.0
        %3168 = vmatpush1.msra.mxu0 0.0
        %3169 = vmatprep.subr.mxu0 0.0
        %3170 = vmatpush1.msra.mxu0 0.0
        %3171 = vmatprep.subr.mxu0 0.0
        %3172 = vmatpush1.msra.mxu0 0.0
        %3173 = vmatprep.subr.mxu0 0.0
        %3174 = vmatpush1.msra.mxu0 0.0
        %3175 = vmatprep.subr.mxu0 0.0
        %3176 = vmatpush1.msra.mxu0 0.0
        %3177 = vmatprep.subr.mxu0 0.0
        %3178 = vmatpush1.msra.mxu0 0.0
        %3179 = vmatprep.subr.mxu0 0.0
        %3180 = vmatpush1.msra.mxu0 0.0
        %3181 = vmatprep.mubr.f32.mxu0 0.0
        %v3182 = vand.u32 %v3034, 4294901760
        %3183 = vmatmul.mubr.f32.gmra.mrb[0].mxu0 %v3182
        %v3184 = vpop.f32.mrb[0].mxu0
        %v3185 = vadd.f32 %v3109, %v3184
        %v3186 = vpop.f32.mrb[0].mxu0
        %3187 = vdwg.mxu0
        %3188 = vmatprep.subr.mxu0 0.0
        %v3189 = vand.u32 %v2133, 4294901760
        %v3190 = vsub.f32 %v2133, %v3189
        %3191 = vmatpush1.msra.mxu0 %v3190
        %3192 = vmatprep.subr.mxu0 0.0
        %3193 = vmatpush1.msra.mxu0 0.0
        %3194 = vmatprep.subr.mxu0 0.0
        %3195 = vmatpush1.msra.mxu0 0.0
        %3196 = vmatprep.subr.mxu0 0.0
        %3197 = vmatpush1.msra.mxu0 0.0
        %3198 = vmatprep.subr.mxu0 0.0
        %3199 = vmatpush1.msra.mxu0 0.0
        %3200 = vmatprep.subr.mxu0 0.0
        %3201 = vmatpush1.msra.mxu0 0.0
        %3202 = vmatprep.subr.mxu0 0.0
        %3203 = vmatpush1.msra.mxu0 0.0
        %3204 = vmatprep.subr.mxu0 0.0
        %3205 = vmatpush1.msra.mxu0 0.0
        %3206 = vmatprep.subr.mxu0 0.0
        %3207 = vmatpush1.msra.mxu0 0.0
        %3208 = vmatprep.subr.mxu0 0.0
        %3209 = vmatpush1.msra.mxu0 0.0
        %3210 = vmatprep.subr.mxu0 0.0
        %3211 = vmatpush1.msra.mxu0 0.0
        %3212 = vmatprep.subr.mxu0 0.0
        %3213 = vmatpush1.msra.mxu0 0.0
        %3214 = vmatprep.subr.mxu0 0.0
        %3215 = vmatpush1.msra.mxu0 0.0
        %3216 = vmatprep.subr.mxu0 0.0
        %3217 = vmatpush1.msra.mxu0 0.0
        %3218 = vmatprep.subr.mxu0 0.0
        %3219 = vmatpush1.msra.mxu0 0.0
        %3220 = vmatprep.subr.mxu0 0.0
        %3221 = vmatpush1.msra.mxu0 0.0
        %3222 = vmatprep.subr.mxu0 0.0
        %3223 = vmatpush1.msra.mxu0 0.0
        %3224 = vmatprep.subr.mxu0 0.0
        %3225 = vmatpush1.msra.mxu0 0.0
        %3226 = vmatprep.subr.mxu0 0.0
        %3227 = vmatpush1.msra.mxu0 0.0
        %3228 = vmatprep.subr.mxu0 0.0
        %3229 = vmatpush1.msra.mxu0 0.0
        %3230 = vmatprep.subr.mxu0 0.0
        %3231 = vmatpush1.msra.mxu0 0.0
        %3232 = vmatprep.subr.mxu0 0.0
        %3233 = vmatpush1.msra.mxu0 0.0
        %3234 = vmatprep.subr.mxu0 0.0
        %3235 = vmatpush1.msra.mxu0 0.0
        %3236 = vmatprep.subr.mxu0 0.0
        %3237 = vmatpush1.msra.mxu0 0.0
        %3238 = vmatprep.subr.mxu0 0.0
        %3239 = vmatpush1.msra.mxu0 0.0
        %3240 = vmatprep.subr.mxu0 0.0
        %3241 = vmatpush1.msra.mxu0 0.0
        %3242 = vmatprep.subr.mxu0 0.0
        %3243 = vmatpush1.msra.mxu0 0.0
        %3244 = vmatprep.subr.mxu0 0.0
        %3245 = vmatpush1.msra.mxu0 0.0
        %3246 = vmatprep.subr.mxu0 0.0
        %3247 = vmatpush1.msra.mxu0 0.0
        %3248 = vmatprep.subr.mxu0 0.0
        %3249 = vmatpush1.msra.mxu0 0.0
        %3250 = vmatprep.subr.mxu0 0.0
        %3251 = vmatpush1.msra.mxu0 0.0
        %3252 = vmatprep.subr.mxu0 0.0
        %3253 = vmatpush1.msra.mxu0 0.0
        %3254 = vmatprep.mubr.f32.mxu0 0.0
        %v3255 = vand.u32 %v3034, 4294901760
        %v3256 = vsub.f32 %v3034, %v3255
        %3257 = vmatmul.mubr.f32.gmra.mrb[0].mxu0 %v3256
        %v3258 = vpop.f32.mrb[0].mxu0
        %v3259 = vadd.f32 %v3185, %v3258
        %v3260 = vpop.f32.mrb[0].mxu0
        %3261 = vdwg.mxu0
        %3262 = vmatprep.subr.mxu0 0.0
        %v3263 = vand.u32 %v2133, 4294901760
        %3264 = vmatpush1.msra.mxu0 %v3263
        %3265 = vmatprep.subr.mxu0 0.0
        %3266 = vmatpush1.msra.mxu0 0.0
        %3267 = vmatprep.subr.mxu0 0.0
        %3268 = vmatpush1.msra.mxu0 0.0
        %3269 = vmatprep.subr.mxu0 0.0
        %3270 = vmatpush1.msra.mxu0 0.0
        %3271 = vmatprep.subr.mxu0 0.0
        %3272 = vmatpush1.msra.mxu0 0.0
        %3273 = vmatprep.subr.mxu0 0.0
        %3274 = vmatpush1.msra.mxu0 0.0
        %3275 = vmatprep.subr.mxu0 0.0
        %3276 = vmatpush1.msra.mxu0 0.0
        %3277 = vmatprep.subr.mxu0 0.0
        %3278 = vmatpush1.msra.mxu0 0.0
        %3279 = vmatprep.subr.mxu0 0.0
        %3280 = vmatpush1.msra.mxu0 0.0
        %3281 = vmatprep.subr.mxu0 0.0
        %3282 = vmatpush1.msra.mxu0 0.0
        %3283 = vmatprep.subr.mxu0 0.0
        %3284 = vmatpush1.msra.mxu0 0.0
        %3285 = vmatprep.subr.mxu0 0.0
        %3286 = vmatpush1.msra.mxu0 0.0
        %3287 = vmatprep.subr.mxu0 0.0
        %3288 = vmatpush1.msra.mxu0 0.0
        %3289 = vmatprep.subr.mxu0 0.0
        %3290 = vmatpush1.msra.mxu0 0.0
        %3291 = vmatprep.subr.mxu0 0.0
        %3292 = vmatpush1.msra.mxu0 0.0
        %3293 = vmatprep.subr.mxu0 0.0
        %3294 = vmatpush1.msra.mxu0 0.0
        %3295 = vmatprep.subr.mxu0 0.0
        %3296 = vmatpush1.msra.mxu0 0.0
        %3297 = vmatprep.subr.mxu0 0.0
        %3298 = vmatpush1.msra.mxu0 0.0
        %3299 = vmatprep.subr.mxu0 0.0
        %3300 = vmatpush1.msra.mxu0 0.0
        %3301 = vmatprep.subr.mxu0 0.0
        %3302 = vmatpush1.msra.mxu0 0.0
        %3303 = vmatprep.subr.mxu0 0.0
        %3304 = vmatpush1.msra.mxu0 0.0
        %3305 = vmatprep.subr.mxu0 0.0
        %3306 = vmatpush1.msra.mxu0 0.0
        %3307 = vmatprep.subr.mxu0 0.0
        %3308 = vmatpush1.msra.mxu0 0.0
        %3309 = vmatprep.subr.mxu0 0.0
        %3310 = vmatpush1.msra.mxu0 0.0
        %3311 = vmatprep.subr.mxu0 0.0
        %3312 = vmatpush1.msra.mxu0 0.0
        %3313 = vmatprep.subr.mxu0 0.0
        %3314 = vmatpush1.msra.mxu0 0.0
        %3315 = vmatprep.subr.mxu0 0.0
        %3316 = vmatpush1.msra.mxu0 0.0
        %3317 = vmatprep.subr.mxu0 0.0
        %3318 = vmatpush1.msra.mxu0 0.0
        %3319 = vmatprep.subr.mxu0 0.0
        %3320 = vmatpush1.msra.mxu0 0.0
        %3321 = vmatprep.subr.mxu0 0.0
        %3322 = vmatpush1.msra.mxu0 0.0
        %3323 = vmatprep.subr.mxu0 0.0
        %3324 = vmatpush1.msra.mxu0 0.0
        %3325 = vmatprep.subr.mxu0 0.0
        %3326 = vmatpush1.msra.mxu0 0.0
        %3327 = vmatprep.mubr.f32.mxu0 0.0
        %v3328 = vand.u32 %v3034, 4294901760
        %v3329 = vsub.f32 %v3034, %v3328
        %v3330 = vand.u32 %v3329, 4294901760
        %3331 = vmatmul.mubr.f32.gmra.mrb[0].mxu0 %v3330
        %v3332 = vpop.f32.mrb[0].mxu0
        %v3333 = vadd.f32 %v3259, %v3332
        %v3334 = vpop.f32.mrb[0].mxu0
        %3335 = vdwg.mxu0
        %3336 = vmatprep.subr.mxu0 0.0
        %v3337 = vand.u32 %v2133, 4294901760
        %v3338 = vsub.f32 %v2133, %v3337
        %v3339 = vand.u32 %v3338, 4294901760
        %3340 = vmatpush1.msra.mxu0 %v3339
        %3341 = vmatprep.subr.mxu0 0.0
        %3342 = vmatpush1.msra.mxu0 0.0
        %3343 = vmatprep.subr.mxu0 0.0
        %3344 = vmatpush1.msra.mxu0 0.0
        %3345 = vmatprep.subr.mxu0 0.0
        %3346 = vmatpush1.msra.mxu0 0.0
        %3347 = vmatprep.subr.mxu0 0.0
        %3348 = vmatpush1.msra.mxu0 0.0
        %3349 = vmatprep.subr.mxu0 0.0
        %3350 = vmatpush1.msra.mxu0 0.0
        %3351 = vmatprep.subr.mxu0 0.0
        %3352 = vmatpush1.msra.mxu0 0.0
        %3353 = vmatprep.subr.mxu0 0.0
        %3354 = vmatpush1.msra.mxu0 0.0
        %3355 = vmatprep.subr.mxu0 0.0
        %3356 = vmatpush1.msra.mxu0 0.0
        %3357 = vmatprep.subr.mxu0 0.0
        %3358 = vmatpush1.msra.mxu0 0.0
        %3359 = vmatprep.subr.mxu0 0.0
        %3360 = vmatpush1.msra.mxu0 0.0
        %3361 = vmatprep.subr.mxu0 0.0
        %3362 = vmatpush1.msra.mxu0 0.0
        %3363 = vmatprep.subr.mxu0 0.0
        %3364 = vmatpush1.msra.mxu0 0.0
        %3365 = vmatprep.subr.mxu0 0.0
        %3366 = vmatpush1.msra.mxu0 0.0
        %3367 = vmatprep.subr.mxu0 0.0
        %3368 = vmatpush1.msra.mxu0 0.0
        %3369 = vmatprep.subr.mxu0 0.0
        %3370 = vmatpush1.msra.mxu0 0.0
        %3371 = vmatprep.subr.mxu0 0.0
        %3372 = vmatpush1.msra.mxu0 0.0
        %3373 = vmatprep.subr.mxu0 0.0
        %3374 = vmatpush1.msra.mxu0 0.0
        %3375 = vmatprep.subr.mxu0 0.0
        %3376 = vmatpush1.msra.mxu0 0.0
        %3377 = vmatprep.subr.mxu0 0.0
        %3378 = vmatpush1.msra.mxu0 0.0
        %3379 = vmatprep.subr.mxu0 0.0
        %3380 = vmatpush1.msra.mxu0 0.0
        %3381 = vmatprep.subr.mxu0 0.0
        %3382 = vmatpush1.msra.mxu0 0.0
        %3383 = vmatprep.subr.mxu0 0.0
        %3384 = vmatpush1.msra.mxu0 0.0
        %3385 = vmatprep.subr.mxu0 0.0
        %3386 = vmatpush1.msra.mxu0 0.0
        %3387 = vmatprep.subr.mxu0 0.0
        %3388 = vmatpush1.msra.mxu0 0.0
        %3389 = vmatprep.subr.mxu0 0.0
        %3390 = vmatpush1.msra.mxu0 0.0
        %3391 = vmatprep.subr.mxu0 0.0
        %3392 = vmatpush1.msra.mxu0 0.0
        %3393 = vmatprep.subr.mxu0 0.0
        %3394 = vmatpush1.msra.mxu0 0.0
        %3395 = vmatprep.subr.mxu0 0.0
        %3396 = vmatpush1.msra.mxu0 0.0
        %3397 = vmatprep.subr.mxu0 0.0
        %3398 = vmatpush1.msra.mxu0 0.0
        %3399 = vmatprep.subr.mxu0 0.0
        %3400 = vmatpush1.msra.mxu0 0.0
        %3401 = vmatprep.subr.mxu0 0.0
        %3402 = vmatpush1.msra.mxu0 0.0
        %3403 = vmatprep.mubr.f32.mxu0 0.0
        %v3404 = vand.u32 %v3034, 4294901760
        %3405 = vmatmul.mubr.f32.gmra.mrb[0].mxu0 %v3404
        %v3406 = vpop.f32.mrb[0].mxu0
        %v3407 = vadd.f32 %v3333, %v3406
        %v3408 = vpop.f32.mrb[0].mxu0
        %3409 = vdwg.mxu0
        %3410 = vmatprep.subr.mxu0 0.0
        %v3411 = vand.u32 %v2133, 4294901760
        %3412 = vmatpush1.msra.mxu0 %v3411
        %3413 = vmatprep.subr.mxu0 0.0
        %3414 = vmatpush1.msra.mxu0 0.0
        %3415 = vmatprep.subr.mxu0 0.0
        %3416 = vmatpush1.msra.mxu0 0.0
        %3417 = vmatprep.subr.mxu0 0.0
        %3418 = vmatpush1.msra.mxu0 0.0
        %3419 = vmatprep.subr.mxu0 0.0
        %3420 = vmatpush1.msra.mxu0 0.0
        %3421 = vmatprep.subr.mxu0 0.0
        %3422 = vmatpush1.msra.mxu0 0.0
        %3423 = vmatprep.subr.mxu0 0.0
        %3424 = vmatpush1.msra.mxu0 0.0
        %3425 = vmatprep.subr.mxu0 0.0
        %3426 = vmatpush1.msra.mxu0 0.0
        %3427 = vmatprep.subr.mxu0 0.0
        %3428 = vmatpush1.msra.mxu0 0.0
        %3429 = vmatprep.subr.mxu0 0.0
        %3430 = vmatpush1.msra.mxu0 0.0
        %3431 = vmatprep.subr.mxu0 0.0
        %3432 = vmatpush1.msra.mxu0 0.0
        %3433 = vmatprep.subr.mxu0 0.0
        %3434 = vmatpush1.msra.mxu0 0.0
        %3435 = vmatprep.subr.mxu0 0.0
        %3436 = vmatpush1.msra.mxu0 0.0
        %3437 = vmatprep.subr.mxu0 0.0
        %3438 = vmatpush1.msra.mxu0 0.0
        %3439 = vmatprep.subr.mxu0 0.0
        %3440 = vmatpush1.msra.mxu0 0.0
        %3441 = vmatprep.subr.mxu0 0.0
        %3442 = vmatpush1.msra.mxu0 0.0
        %3443 = vmatprep.subr.mxu0 0.0
        %3444 = vmatpush1.msra.mxu0 0.0
        %3445 = vmatprep.subr.mxu0 0.0
        %3446 = vmatpush1.msra.mxu0 0.0
        %3447 = vmatprep.subr.mxu0 0.0
        %3448 = vmatpush1.msra.mxu0 0.0
        %3449 = vmatprep.subr.mxu0 0.0
        %3450 = vmatpush1.msra.mxu0 0.0
        %3451 = vmatprep.subr.mxu0 0.0
        %3452 = vmatpush1.msra.mxu0 0.0
        %3453 = vmatprep.subr.mxu0 0.0
        %3454 = vmatpush1.msra.mxu0 0.0
        %3455 = vmatprep.subr.mxu0 0.0
        %3456 = vmatpush1.msra.mxu0 0.0
        %3457 = vmatprep.subr.mxu0 0.0
        %3458 = vmatpush1.msra.mxu0 0.0
        %3459 = vmatprep.subr.mxu0 0.0
        %3460 = vmatpush1.msra.mxu0 0.0
        %3461 = vmatprep.subr.mxu0 0.0
        %3462 = vmatpush1.msra.mxu0 0.0
        %3463 = vmatprep.subr.mxu0 0.0
        %3464 = vmatpush1.msra.mxu0 0.0
        %3465 = vmatprep.subr.mxu0 0.0
        %3466 = vmatpush1.msra.mxu0 0.0
        %3467 = vmatprep.subr.mxu0 0.0
        %3468 = vmatpush1.msra.mxu0 0.0
        %3469 = vmatprep.subr.mxu0 0.0
        %3470 = vmatpush1.msra.mxu0 0.0
        %3471 = vmatprep.subr.mxu0 0.0
        %3472 = vmatpush1.msra.mxu0 0.0
        %3473 = vmatprep.subr.mxu0 0.0
        %3474 = vmatpush1.msra.mxu0 0.0
        %3475 = vmatprep.mubr.f32.mxu0 0.0
        %v3476 = vand.u32 %v3034, 4294901760
        %3477 = vmatmul.mubr.f32.gmra.mrb[0].mxu0 %v3476
        %v3478 = vpop.f32.mrb[0].mxu0
        %v3479 = vadd.f32 %v3407, %v3478
        %v3480 = vpop.f32.mrb[0].mxu0
        %3481 = vdwg.mxu0
        %v3483 = vsel %vm274, %v2130, 0
        %3485 = vmatprep.subr.mxu0 0.0
        %v3486 = vand.u32 %v2134, 4294901760
        %3487 = vmatpush1.msra.mxu0 %v3486
        %3488 = vmatprep.subr.mxu0 0.0
        %3489 = vmatpush1.msra.mxu0 0.0
        %3490 = vmatprep.subr.mxu0 0.0
        %3491 = vmatpush1.msra.mxu0 0.0
        %3492 = vmatprep.subr.mxu0 0.0
        %3493 = vmatpush1.msra.mxu0 0.0
        %3494 = vmatprep.subr.mxu0 0.0
        %3495 = vmatpush1.msra.mxu0 0.0
        %3496 = vmatprep.subr.mxu0 0.0
        %3497 = vmatpush1.msra.mxu0 0.0
        %3498 = vmatprep.subr.mxu0 0.0
        %3499 = vmatpush1.msra.mxu0 0.0
        %3500 = vmatprep.subr.mxu0 0.0
        %3501 = vmatpush1.msra.mxu0 0.0
        %3502 = vmatprep.subr.mxu0 0.0
        %3503 = vmatpush1.msra.mxu0 0.0
        %3504 = vmatprep.subr.mxu0 0.0
        %3505 = vmatpush1.msra.mxu0 0.0
        %3506 = vmatprep.subr.mxu0 0.0
        %3507 = vmatpush1.msra.mxu0 0.0
        %3508 = vmatprep.subr.mxu0 0.0
        %3509 = vmatpush1.msra.mxu0 0.0
        %3510 = vmatprep.subr.mxu0 0.0
        %3511 = vmatpush1.msra.mxu0 0.0
        %3512 = vmatprep.subr.mxu0 0.0
        %3513 = vmatpush1.msra.mxu0 0.0
        %3514 = vmatprep.subr.mxu0 0.0
        %3515 = vmatpush1.msra.mxu0 0.0
        %3516 = vmatprep.subr.mxu0 0.0
        %3517 = vmatpush1.msra.mxu0 0.0
        %3518 = vmatprep.subr.mxu0 0.0
        %3519 = vmatpush1.msra.mxu0 0.0
        %3520 = vmatprep.subr.mxu0 0.0
        %3521 = vmatpush1.msra.mxu0 0.0
        %3522 = vmatprep.subr.mxu0 0.0
        %3523 = vmatpush1.msra.mxu0 0.0
        %3524 = vmatprep.subr.mxu0 0.0
        %3525 = vmatpush1.msra.mxu0 0.0
        %3526 = vmatprep.subr.mxu0 0.0
        %3527 = vmatpush1.msra.mxu0 0.0
        %3528 = vmatprep.subr.mxu0 0.0
        %3529 = vmatpush1.msra.mxu0 0.0
        %3530 = vmatprep.subr.mxu0 0.0
        %3531 = vmatpush1.msra.mxu0 0.0
        %3532 = vmatprep.subr.mxu0 0.0
        %3533 = vmatpush1.msra.mxu0 0.0
        %3534 = vmatprep.subr.mxu0 0.0
        %3535 = vmatpush1.msra.mxu0 0.0
        %3536 = vmatprep.subr.mxu0 0.0
        %3537 = vmatpush1.msra.mxu0 0.0
        %3538 = vmatprep.subr.mxu0 0.0
        %3539 = vmatpush1.msra.mxu0 0.0
        %3540 = vmatprep.subr.mxu0 0.0
        %3541 = vmatpush1.msra.mxu0 0.0
        %3542 = vmatprep.subr.mxu0 0.0
        %3543 = vmatpush1.msra.mxu0 0.0
        %3544 = vmatprep.subr.mxu0 0.0
        %3545 = vmatpush1.msra.mxu0 0.0
        %3546 = vmatprep.subr.mxu0 0.0
        %3547 = vmatpush1.msra.mxu0 0.0
        %3548 = vmatprep.subr.mxu0 0.0
        %3549 = vmatpush1.msra.mxu0 0.0
        %3550 = vmatprep.mubr.f32.mxu0 0.0
        %v3551 = vand.u32 %v3483, 4294901760
        %v3552 = vsub.f32 %v3483, %v3551
        %v3553 = vand.u32 %v3552, 4294901760
        %v3554 = vsub.f32 %v3552, %v3553
        %v3555 = vand.u32 %v3554, 4294901760
        %3556 = vmatmul.mubr.f32.gmra.mrb[0].mxu0 %v3555
        %v3557 = vpop.f32.mrb[0].mxu0
        %v3558 = vadd.f32 0.0, %v3557
        %v3559 = vpop.f32.mrb[0].mxu0
        %3560 = vdwg.mxu0
        %3561 = vmatprep.subr.mxu0 0.0
        %v3562 = vand.u32 %v2134, 4294901760
        %v3563 = vsub.f32 %v2134, %v3562
        %v3564 = vand.u32 %v3563, 4294901760
        %v3565 = vsub.f32 %v3563, %v3564
        %v3566 = vand.u32 %v3565, 4294901760
        %3567 = vmatpush1.msra.mxu0 %v3566
        %3568 = vmatprep.subr.mxu0 0.0
        %3569 = vmatpush1.msra.mxu0 0.0
        %3570 = vmatprep.subr.mxu0 0.0
        %3571 = vmatpush1.msra.mxu0 0.0
        %3572 = vmatprep.subr.mxu0 0.0
        %3573 = vmatpush1.msra.mxu0 0.0
        %3574 = vmatprep.subr.mxu0 0.0
        %3575 = vmatpush1.msra.mxu0 0.0
        %3576 = vmatprep.subr.mxu0 0.0
        %3577 = vmatpush1.msra.mxu0 0.0
        %3578 = vmatprep.subr.mxu0 0.0
        %3579 = vmatpush1.msra.mxu0 0.0
        %3580 = vmatprep.subr.mxu0 0.0
        %3581 = vmatpush1.msra.mxu0 0.0
        %3582 = vmatprep.subr.mxu0 0.0
        %3583 = vmatpush1.msra.mxu0 0.0
        %3584 = vmatprep.subr.mxu0 0.0
        %3585 = vmatpush1.msra.mxu0 0.0
        %3586 = vmatprep.subr.mxu0 0.0
        %3587 = vmatpush1.msra.mxu0 0.0
        %3588 = vmatprep.subr.mxu0 0.0
        %3589 = vmatpush1.msra.mxu0 0.0
        %3590 = vmatprep.subr.mxu0 0.0
        %3591 = vmatpush1.msra.mxu0 0.0
        %3592 = vmatprep.subr.mxu0 0.0
        %3593 = vmatpush1.msra.mxu0 0.0
        %3594 = vmatprep.subr.mxu0 0.0
        %3595 = vmatpush1.msra.mxu0 0.0
        %3596 = vmatprep.subr.mxu0 0.0
        %3597 = vmatpush1.msra.mxu0 0.0
        %3598 = vmatprep.subr.mxu0 0.0
        %3599 = vmatpush1.msra.mxu0 0.0
        %3600 = vmatprep.subr.mxu0 0.0
        %3601 = vmatpush1.msra.mxu0 0.0
        %3602 = vmatprep.subr.mxu0 0.0
        %3603 = vmatpush1.msra.mxu0 0.0
        %3604 = vmatprep.subr.mxu0 0.0
        %3605 = vmatpush1.msra.mxu0 0.0
        %3606 = vmatprep.subr.mxu0 0.0
        %3607 = vmatpush1.msra.mxu0 0.0
        %3608 = vmatprep.subr.mxu0 0.0
        %3609 = vmatpush1.msra.mxu0 0.0
        %3610 = vmatprep.subr.mxu0 0.0
        %3611 = vmatpush1.msra.mxu0 0.0
        %3612 = vmatprep.subr.mxu0 0.0
        %3613 = vmatpush1.msra.mxu0 0.0
        %3614 = vmatprep.subr.mxu0 0.0
        %3615 = vmatpush1.msra.mxu0 0.0
        %3616 = vmatprep.subr.mxu0 0.0
        %3617 = vmatpush1.msra.mxu0 0.0
        %3618 = vmatprep.subr.mxu0 0.0
        %3619 = vmatpush1.msra.mxu0 0.0
        %3620 = vmatprep.subr.mxu0 0.0
        %3621 = vmatpush1.msra.mxu0 0.0
        %3622 = vmatprep.subr.mxu0 0.0
        %3623 = vmatpush1.msra.mxu0 0.0
        %3624 = vmatprep.subr.mxu0 0.0
        %3625 = vmatpush1.msra.mxu0 0.0
        %3626 = vmatprep.subr.mxu0 0.0
        %3627 = vmatpush1.msra.mxu0 0.0
        %3628 = vmatprep.subr.mxu0 0.0
        %3629 = vmatpush1.msra.mxu0 0.0
        %3630 = vmatprep.mubr.f32.mxu0 0.0
        %v3631 = vand.u32 %v3483, 4294901760
        %3632 = vmatmul.mubr.f32.gmra.mrb[0].mxu0 %v3631
        %v3633 = vpop.f32.mrb[0].mxu0
        %v3634 = vadd.f32 %v3558, %v3633
        %v3635 = vpop.f32.mrb[0].mxu0
        %3636 = vdwg.mxu0
        %3637 = vmatprep.subr.mxu0 0.0
        %v3638 = vand.u32 %v2134, 4294901760
        %v3639 = vsub.f32 %v2134, %v3638
        %3640 = vmatpush1.msra.mxu0 %v3639
        %3641 = vmatprep.subr.mxu0 0.0
        %3642 = vmatpush1.msra.mxu0 0.0
        %3643 = vmatprep.subr.mxu0 0.0
        %3644 = vmatpush1.msra.mxu0 0.0
        %3645 = vmatprep.subr.mxu0 0.0
        %3646 = vmatpush1.msra.mxu0 0.0
        %3647 = vmatprep.subr.mxu0 0.0
        %3648 = vmatpush1.msra.mxu0 0.0
        %3649 = vmatprep.subr.mxu0 0.0
        %3650 = vmatpush1.msra.mxu0 0.0
        %3651 = vmatprep.subr.mxu0 0.0
        %3652 = vmatpush1.msra.mxu0 0.0
        %3653 = vmatprep.subr.mxu0 0.0
        %3654 = vmatpush1.msra.mxu0 0.0
        %3655 = vmatprep.subr.mxu0 0.0
        %3656 = vmatpush1.msra.mxu0 0.0
        %3657 = vmatprep.subr.mxu0 0.0
        %3658 = vmatpush1.msra.mxu0 0.0
        %3659 = vmatprep.subr.mxu0 0.0
        %3660 = vmatpush1.msra.mxu0 0.0
        %3661 = vmatprep.subr.mxu0 0.0
        %3662 = vmatpush1.msra.mxu0 0.0
        %3663 = vmatprep.subr.mxu0 0.0
        %3664 = vmatpush1.msra.mxu0 0.0
        %3665 = vmatprep.subr.mxu0 0.0
        %3666 = vmatpush1.msra.mxu0 0.0
        %3667 = vmatprep.subr.mxu0 0.0
        %3668 = vmatpush1.msra.mxu0 0.0
        %3669 = vmatprep.subr.mxu0 0.0
        %3670 = vmatpush1.msra.mxu0 0.0
        %3671 = vmatprep.subr.mxu0 0.0
        %3672 = vmatpush1.msra.mxu0 0.0
        %3673 = vmatprep.subr.mxu0 0.0
        %3674 = vmatpush1.msra.mxu0 0.0
        %3675 = vmatprep.subr.mxu0 0.0
        %3676 = vmatpush1.msra.mxu0 0.0
        %3677 = vmatprep.subr.mxu0 0.0
        %3678 = vmatpush1.msra.mxu0 0.0
        %3679 = vmatprep.subr.mxu0 0.0
        %3680 = vmatpush1.msra.mxu0 0.0
        %3681 = vmatprep.subr.mxu0 0.0
        %3682 = vmatpush1.msra.mxu0 0.0
        %3683 = vmatprep.subr.mxu0 0.0
        %3684 = vmatpush1.msra.mxu0 0.0
        %3685 = vmatprep.subr.mxu0 0.0
        %3686 = vmatpush1.msra.mxu0 0.0
        %3687 = vmatprep.subr.mxu0 0.0
        %3688 = vmatpush1.msra.mxu0 0.0
        %3689 = vmatprep.subr.mxu0 0.0
        %3690 = vmatpush1.msra.mxu0 0.0
        %3691 = vmatprep.subr.mxu0 0.0
        %3692 = vmatpush1.msra.mxu0 0.0
        %3693 = vmatprep.subr.mxu0 0.0
        %3694 = vmatpush1.msra.mxu0 0.0
        %3695 = vmatprep.subr.mxu0 0.0
        %3696 = vmatpush1.msra.mxu0 0.0
        %3697 = vmatprep.subr.mxu0 0.0
        %3698 = vmatpush1.msra.mxu0 0.0
        %3699 = vmatprep.subr.mxu0 0.0
        %3700 = vmatpush1.msra.mxu0 0.0
        %3701 = vmatprep.subr.mxu0 0.0
        %3702 = vmatpush1.msra.mxu0 0.0
        %3703 = vmatprep.mubr.f32.mxu0 0.0
        %v3704 = vand.u32 %v3483, 4294901760
        %v3705 = vsub.f32 %v3483, %v3704
        %3706 = vmatmul.mubr.f32.gmra.mrb[0].mxu0 %v3705
        %v3707 = vpop.f32.mrb[0].mxu0
        %v3708 = vadd.f32 %v3634, %v3707
        %v3709 = vpop.f32.mrb[0].mxu0
        %3710 = vdwg.mxu0
        %3711 = vmatprep.subr.mxu0 0.0
        %v3712 = vand.u32 %v2134, 4294901760
        %3713 = vmatpush1.msra.mxu0 %v3712
        %3714 = vmatprep.subr.mxu0 0.0
        %3715 = vmatpush1.msra.mxu0 0.0
        %3716 = vmatprep.subr.mxu0 0.0
        %3717 = vmatpush1.msra.mxu0 0.0
        %3718 = vmatprep.subr.mxu0 0.0
        %3719 = vmatpush1.msra.mxu0 0.0
        %3720 = vmatprep.subr.mxu0 0.0
        %3721 = vmatpush1.msra.mxu0 0.0
        %3722 = vmatprep.subr.mxu0 0.0
        %3723 = vmatpush1.msra.mxu0 0.0
        %3724 = vmatprep.subr.mxu0 0.0
        %3725 = vmatpush1.msra.mxu0 0.0
        %3726 = vmatprep.subr.mxu0 0.0
        %3727 = vmatpush1.msra.mxu0 0.0
        %3728 = vmatprep.subr.mxu0 0.0
        %3729 = vmatpush1.msra.mxu0 0.0
        %3730 = vmatprep.subr.mxu0 0.0
        %3731 = vmatpush1.msra.mxu0 0.0
        %3732 = vmatprep.subr.mxu0 0.0
        %3733 = vmatpush1.msra.mxu0 0.0
        %3734 = vmatprep.subr.mxu0 0.0
        %3735 = vmatpush1.msra.mxu0 0.0
        %3736 = vmatprep.subr.mxu0 0.0
        %3737 = vmatpush1.msra.mxu0 0.0
        %3738 = vmatprep.subr.mxu0 0.0
        %3739 = vmatpush1.msra.mxu0 0.0
        %3740 = vmatprep.subr.mxu0 0.0
        %3741 = vmatpush1.msra.mxu0 0.0
        %3742 = vmatprep.subr.mxu0 0.0
        %3743 = vmatpush1.msra.mxu0 0.0
        %3744 = vmatprep.subr.mxu0 0.0
        %3745 = vmatpush1.msra.mxu0 0.0
        %3746 = vmatprep.subr.mxu0 0.0
        %3747 = vmatpush1.msra.mxu0 0.0
        %3748 = vmatprep.subr.mxu0 0.0
        %3749 = vmatpush1.msra.mxu0 0.0
        %3750 = vmatprep.subr.mxu0 0.0
        %3751 = vmatpush1.msra.mxu0 0.0
        %3752 = vmatprep.subr.mxu0 0.0
        %3753 = vmatpush1.msra.mxu0 0.0
        %3754 = vmatprep.subr.mxu0 0.0
        %3755 = vmatpush1.msra.mxu0 0.0
        %3756 = vmatprep.subr.mxu0 0.0
        %3757 = vmatpush1.msra.mxu0 0.0
        %3758 = vmatprep.subr.mxu0 0.0
        %3759 = vmatpush1.msra.mxu0 0.0
        %3760 = vmatprep.subr.mxu0 0.0
        %3761 = vmatpush1.msra.mxu0 0.0
        %3762 = vmatprep.subr.mxu0 0.0
        %3763 = vmatpush1.msra.mxu0 0.0
        %3764 = vmatprep.subr.mxu0 0.0
        %3765 = vmatpush1.msra.mxu0 0.0
        %3766 = vmatprep.subr.mxu0 0.0
        %3767 = vmatpush1.msra.mxu0 0.0
        %3768 = vmatprep.subr.mxu0 0.0
        %3769 = vmatpush1.msra.mxu0 0.0
        %3770 = vmatprep.subr.mxu0 0.0
        %3771 = vmatpush1.msra.mxu0 0.0
        %3772 = vmatprep.subr.mxu0 0.0
        %3773 = vmatpush1.msra.mxu0 0.0
        %3774 = vmatprep.subr.mxu0 0.0
        %3775 = vmatpush1.msra.mxu0 0.0
        %3776 = vmatprep.mubr.f32.mxu0 0.0
        %v3777 = vand.u32 %v3483, 4294901760
        %v3778 = vsub.f32 %v3483, %v3777
        %v3779 = vand.u32 %v3778, 4294901760
        %3780 = vmatmul.mubr.f32.gmra.mrb[0].mxu0 %v3779
        %v3781 = vpop.f32.mrb[0].mxu0
        %v3782 = vadd.f32 %v3708, %v3781
        %v3783 = vpop.f32.mrb[0].mxu0
        %3784 = vdwg.mxu0
        %3785 = vmatprep.subr.mxu0 0.0
        %v3786 = vand.u32 %v2134, 4294901760
        %v3787 = vsub.f32 %v2134, %v3786
        %v3788 = vand.u32 %v3787, 4294901760
        %3789 = vmatpush1.msra.mxu0 %v3788
        %3790 = vmatprep.subr.mxu0 0.0
        %3791 = vmatpush1.msra.mxu0 0.0
        %3792 = vmatprep.subr.mxu0 0.0
        %3793 = vmatpush1.msra.mxu0 0.0
        %3794 = vmatprep.subr.mxu0 0.0
        %3795 = vmatpush1.msra.mxu0 0.0
        %3796 = vmatprep.subr.mxu0 0.0
        %3797 = vmatpush1.msra.mxu0 0.0
        %3798 = vmatprep.subr.mxu0 0.0
        %3799 = vmatpush1.msra.mxu0 0.0
        %3800 = vmatprep.subr.mxu0 0.0
        %3801 = vmatpush1.msra.mxu0 0.0
        %3802 = vmatprep.subr.mxu0 0.0
        %3803 = vmatpush1.msra.mxu0 0.0
        %3804 = vmatprep.subr.mxu0 0.0
        %3805 = vmatpush1.msra.mxu0 0.0
        %3806 = vmatprep.subr.mxu0 0.0
        %3807 = vmatpush1.msra.mxu0 0.0
        %3808 = vmatprep.subr.mxu0 0.0
        %3809 = vmatpush1.msra.mxu0 0.0
        %3810 = vmatprep.subr.mxu0 0.0
        %3811 = vmatpush1.msra.mxu0 0.0
        %3812 = vmatprep.subr.mxu0 0.0
        %3813 = vmatpush1.msra.mxu0 0.0
        %3814 = vmatprep.subr.mxu0 0.0
        %3815 = vmatpush1.msra.mxu0 0.0
        %3816 = vmatprep.subr.mxu0 0.0
        %3817 = vmatpush1.msra.mxu0 0.0
        %3818 = vmatprep.subr.mxu0 0.0
        %3819 = vmatpush1.msra.mxu0 0.0
        %3820 = vmatprep.subr.mxu0 0.0
        %3821 = vmatpush1.msra.mxu0 0.0
        %3822 = vmatprep.subr.mxu0 0.0
        %3823 = vmatpush1.msra.mxu0 0.0
        %3824 = vmatprep.subr.mxu0 0.0
        %3825 = vmatpush1.msra.mxu0 0.0
        %3826 = vmatprep.subr.mxu0 0.0
        %3827 = vmatpush1.msra.mxu0 0.0
        %3828 = vmatprep.subr.mxu0 0.0
        %3829 = vmatpush1.msra.mxu0 0.0
        %3830 = vmatprep.subr.mxu0 0.0
        %3831 = vmatpush1.msra.mxu0 0.0
        %3832 = vmatprep.subr.mxu0 0.0
        %3833 = vmatpush1.msra.mxu0 0.0
        %3834 = vmatprep.subr.mxu0 0.0
        %3835 = vmatpush1.msra.mxu0 0.0
        %3836 = vmatprep.subr.mxu0 0.0
        %3837 = vmatpush1.msra.mxu0 0.0
        %3838 = vmatprep.subr.mxu0 0.0
        %3839 = vmatpush1.msra.mxu0 0.0
        %3840 = vmatprep.subr.mxu0 0.0
        %3841 = vmatpush1.msra.mxu0 0.0
        %3842 = vmatprep.subr.mxu0 0.0
        %3843 = vmatpush1.msra.mxu0 0.0
        %3844 = vmatprep.subr.mxu0 0.0
        %3845 = vmatpush1.msra.mxu0 0.0
        %3846 = vmatprep.subr.mxu0 0.0
        %3847 = vmatpush1.msra.mxu0 0.0
        %3848 = vmatprep.subr.mxu0 0.0
        %3849 = vmatpush1.msra.mxu0 0.0
        %3850 = vmatprep.subr.mxu0 0.0
        %3851 = vmatpush1.msra.mxu0 0.0
        %3852 = vmatprep.mubr.f32.mxu0 0.0
        %v3853 = vand.u32 %v3483, 4294901760
        %3854 = vmatmul.mubr.f32.gmra.mrb[0].mxu0 %v3853
        %v3855 = vpop.f32.mrb[0].mxu0
        %v3856 = vadd.f32 %v3782, %v3855
        %v3857 = vpop.f32.mrb[0].mxu0
        %3858 = vdwg.mxu0
        %3859 = vmatprep.subr.mxu0 0.0
        %v3860 = vand.u32 %v2134, 4294901760
        %3861 = vmatpush1.msra.mxu0 %v3860
        %3862 = vmatprep.subr.mxu0 0.0
        %3863 = vmatpush1.msra.mxu0 0.0
        %3864 = vmatprep.subr.mxu0 0.0
        %3865 = vmatpush1.msra.mxu0 0.0
        %3866 = vmatprep.subr.mxu0 0.0
        %3867 = vmatpush1.msra.mxu0 0.0
        %3868 = vmatprep.subr.mxu0 0.0
        %3869 = vmatpush1.msra.mxu0 0.0
        %3870 = vmatprep.subr.mxu0 0.0
        %3871 = vmatpush1.msra.mxu0 0.0
        %3872 = vmatprep.subr.mxu0 0.0
        %3873 = vmatpush1.msra.mxu0 0.0
        %3874 = vmatprep.subr.mxu0 0.0
        %3875 = vmatpush1.msra.mxu0 0.0
        %3876 = vmatprep.subr.mxu0 0.0
        %3877 = vmatpush1.msra.mxu0 0.0
        %3878 = vmatprep.subr.mxu0 0.0
        %3879 = vmatpush1.msra.mxu0 0.0
        %3880 = vmatprep.subr.mxu0 0.0
        %3881 = vmatpush1.msra.mxu0 0.0
        %3882 = vmatprep.subr.mxu0 0.0
        %3883 = vmatpush1.msra.mxu0 0.0
        %3884 = vmatprep.subr.mxu0 0.0
        %3885 = vmatpush1.msra.mxu0 0.0
        %3886 = vmatprep.subr.mxu0 0.0
        %3887 = vmatpush1.msra.mxu0 0.0
        %3888 = vmatprep.subr.mxu0 0.0
        %3889 = vmatpush1.msra.mxu0 0.0
        %3890 = vmatprep.subr.mxu0 0.0
        %3891 = vmatpush1.msra.mxu0 0.0
        %3892 = vmatprep.subr.mxu0 0.0
        %3893 = vmatpush1.msra.mxu0 0.0
        %3894 = vmatprep.subr.mxu0 0.0
        %3895 = vmatpush1.msra.mxu0 0.0
        %3896 = vmatprep.subr.mxu0 0.0
        %3897 = vmatpush1.msra.mxu0 0.0
        %3898 = vmatprep.subr.mxu0 0.0
        %3899 = vmatpush1.msra.mxu0 0.0
        %3900 = vmatprep.subr.mxu0 0.0
        %3901 = vmatpush1.msra.mxu0 0.0
        %3902 = vmatprep.subr.mxu0 0.0
        %3903 = vmatpush1.msra.mxu0 0.0
        %3904 = vmatprep.subr.mxu0 0.0
        %3905 = vmatpush1.msra.mxu0 0.0
        %3906 = vmatprep.subr.mxu0 0.0
        %3907 = vmatpush1.msra.mxu0 0.0
        %3908 = vmatprep.subr.mxu0 0.0
        %3909 = vmatpush1.msra.mxu0 0.0
        %3910 = vmatprep.subr.mxu0 0.0
        %3911 = vmatpush1.msra.mxu0 0.0
        %3912 = vmatprep.subr.mxu0 0.0
        %3913 = vmatpush1.msra.mxu0 0.0
        %3914 = vmatprep.subr.mxu0 0.0
        %3915 = vmatpush1.msra.mxu0 0.0
        %3916 = vmatprep.subr.mxu0 0.0
        %3917 = vmatpush1.msra.mxu0 0.0
        %3918 = vmatprep.subr.mxu0 0.0
        %3919 = vmatpush1.msra.mxu0 0.0
        %3920 = vmatprep.subr.mxu0 0.0
        %3921 = vmatpush1.msra.mxu0 0.0
        %3922 = vmatprep.subr.mxu0 0.0
        %3923 = vmatpush1.msra.mxu0 0.0
        %3924 = vmatprep.mubr.f32.mxu0 0.0
        %v3925 = vand.u32 %v3483, 4294901760
        %3926 = vmatmul.mubr.f32.gmra.mrb[0].mxu0 %v3925
        %v3927 = vpop.f32.mrb[0].mxu0
        %v3928 = vadd.f32 %v3856, %v3927
        %v3929 = vpop.f32.mrb[0].mxu0
        %3930 = vdwg.mxu0
        %3931 = vst.msk [vmem:[%s265] sm:$0xff] %vm274, %v2581
        %3932 = vst.msk [vmem:[%s265 + $0x8] sm:$0xff] %vm274, %v3030
        %3933 = vst.msk [vmem:[%s265 + $0x10] sm:$0xff] %vm274, %v3479
        %3934 = vst.msk [vmem:[%s265 + $0x18] sm:$0xff] %vm274, %v3928
        %s3935 = sand.u32 %s109, 1
        %s3936 = scalar_lea.sflag [#allocation4], %s3935
        %s3937 = sand.u32 %s109, 1
        %s3938 = smul.addr %s3937, 32
        %s3939 = scalar_lea.vmem [#allocation8], %s3938
        // Predicated region
        $region45: #{multi_head_attention.8} parent=31 // pred_check
          %p3940 = pneg %p119
        $region46: #{multi_head_attention.8} parent=31 // pred_check_branch
          %3942 = sbr.rel (%p3940) target = $region48
        $region47: #{multi_head_attention.8} parent=31 // pred_region
          %s3944 = ssub.s32 512, 512
          %3945 = vsyncadd %s3936, %s3944
          %s3946 = smul.addr %s23, 4
          %s3947 = smul.addr %s3946, 128
          %s3948 = scalar_lea.hbm %s3, %s3947
          %s3949 = sshll.u32 %s3939, 4
          %s3950 = int_to_ptr.vmem [resolvable:$true] %s3949
          %3955 = dma.vmem_to_hbm [thread:$0]  %s3950, 512, %s3948, %s3936, 128, 128, 8
        $region48: #{multi_head_attention.8} parent=31 // pred_fallthru
          _
      $region32: #{multi_head_attention.8} parent=5 // pred_fallthru
        _
      %p3956 = scmp.le.s32.totalorder 2, %s18
      // Predicated region
      $region49: #{multi_head_attention.8} parent=5 // pred_check
        %p3957 = pneg %p3956
      $region50: #{multi_head_attention.8} parent=5 // pred_check_branch
        %3959 = sbr.rel (%p3957) target = $region52
      $region51: #{multi_head_attention.8} parent=5 // pred_region
        %s3960 = ssub.s32 %s18, 2
        // Predicated region
        $region53: #{multi_head_attention.8} parent=51 // pred_check
          %p3961 = pneg %p125
        $region54: #{multi_head_attention.8} parent=51 // pred_check_branch
          %3963 = sbr.rel (%p3961) target = $region56
        $region55: #{multi_head_attention.8} parent=51 // pred_region
          %s3964 = sand.u32 %s110, 1
          %s3965 = scalar_lea.sflag [#allocation4], %s3964
          %s3966 = sand.u32 %s110, 1
          %s3967 = smul.addr %s3966, 32
          %s3968 = scalar_lea.vmem [#allocation8], %s3967
          %3969 = dma.done %s3965, 512
        $region56: #{multi_head_attention.8} parent=51 // pred_fallthru
          _
      $region52: #{multi_head_attention.8} parent=5 // pred_fallthru
        _
    $region6: #{multi_head_attention.8} parent=1 // loop_footer
      %s22 = sadd.s32 1, %s18
    $region7: #{multi_head_attention.8} parent=1 // loop_footer_branch
      %17 = sbr.rel target = $region3
    $region8: #{multi_head_attention.8} parent=1 // loop_exit
      _
    %3970 = vsyncpa [#allocation3], 1
    %s3971 = scalar_lea.sflag [#allocation3], 1
    %3972 = vsyncpa %s3971, 1
    %3973 = vsyncpa [#allocation6], 1
    %s3974 = scalar_lea.sflag [#allocation6], 1
    %3975 = vsyncpa %s3974, 1
    %3976 = vsyncpa [#allocation4], 1
    %s3977 = scalar_lea.sflag [#allocation4], 1
    %3978 = vsyncpa %s3977, 1

</llo_original>
